<compile_context>
chip_gen: v7x
topology: tpu7x:2x2x1
jax: 0.10.0
libtpu: 0.0.40
codegen_flags: <defaults>
</compile_context>

<pallas_src>
import functools

import jax
import jax.numpy as jnp
from jax.experimental import pallas as pl
from jax.experimental.pallas import tpu as pltpu


KV_CHUNK = 16   # keys per attention-MLP chunk (keeps f32 intermediates in-reg)


# =============================================================================
# Fused autoregressive decoder kernel (one grid step == one decode step)
# =============================================================================
def decode_kernel(
    teacher_forced,                       # static python bool (bound via partial)
    # ---- inputs --------------------------------------------------------------
    xe_ref,                               # (1, B, E) bf16  pre-embedded teacher input of this step
    h0_ref, c0_ref,                       # (B, H)  f32     initial LSTM state (from encoder)
    cv_ref,                               # (B, H)  f32     context vector (= h0 in the module)
    k_ref,                                # (KV, E) f32     encoder key vectors
    emb_ref,                              # (V, E)  bf16    embedding table (greedy path only)
    wihh_ref, blstm_ref,                  # fused LSTMCell: (E+H,4H) bf16, (1,4H) f32
    w1a_ref, w1b_ref, w1c_ref, b1_ref,    # attn_key layer 1 split by input group [cv, h, k]
    w2_ref, b2_ref, w3_ref,               # attn_key layers 2 and 3
    wl_ref, bl_ref,                       # vocab projection (H,V) bf16, (1,V) f32 (b3 folded in)
    # ---- outputs -------------------------------------------------------------
    y_ref,                                # (1, B, V) f32   per-step log-probs
    hT_ref, cT_ref,                       # (B, H)   f32    final LSTM state
    # ---- VMEM scratch (persists across grid steps) ----------------------------
    h_s, c_s,                             # (B, H)  f32     carried LSTM state
    x_s,                                  # (B, E)  bf16    carried embedded input (greedy mode)
    kproj_s,                              # (KV, E) f32     k @ w1c            (step-invariant)
    bconst_s,                             # (B, E)  f32     cv @ w1a + b1      (step-invariant)
    u_s,                                  # (B, KV) f32     per-step key logits
):
    t = pl.program_id(0)
    B, H = h0_ref.shape
    KV, E = k_ref.shape
    V = wl_ref.shape[1]
    f32, bf16 = jnp.float32, jnp.bfloat16
    C = KV_CHUNK

    @pl.when(t == 0)
    def _init():
        h_s[...] = h0_ref[...]
        c_s[...] = c0_ref[...]
        # Step-invariant pieces of the attention-key MLP, hoisted out of the loop.
        kproj_s[...] = jnp.dot(k_ref[...].astype(bf16), w1c_ref[...],
                               preferred_element_type=f32)
        bconst_s[...] = jnp.dot(cv_ref[...].astype(bf16), w1a_ref[...],
                                preferred_element_type=f32) + b1_ref[...]
        if not teacher_forced:
            # BOS token (id 0) for every batch row.
            x_s[...] = jnp.broadcast_to(emb_ref[0:1, :], (B, E))

    # ----- embedded input of this step -----------------------------------------
    if teacher_forced:
        x = xe_ref[0]                     # streamed, pre-embedded outside the kernel
    else:
        x = x_s[...]

    h_prev = h_s[...]
    c_prev = c_s[...]

    # ----- LSTMCell: single fused [x|h] @ [wih;whh] matmul (K = E+H = 256) -------
    xh = jnp.concatenate([x, h_prev.astype(bf16)], axis=-1)            # (B, E+H) bf16
    gates = (jnp.dot(xh, wihh_ref[...], preferred_element_type=f32)
             + blstm_ref[...])                                          # (B, 4H)
    i_g = jax.nn.sigmoid(gates[:, 0 * H:1 * H])
    f_g = jax.nn.sigmoid(gates[:, 1 * H:2 * H])
    g_g = jnp.tanh(gates[:, 2 * H:3 * H])
    o_g = jax.nn.sigmoid(gates[:, 3 * H:4 * H])
    c_t = f_g * c_prev + i_g * g_g
    h_t = o_g * jnp.tanh(c_t)

    # ----- attention-key MLP, chunked over KV (keeps z1/z2 in registers) ---------
    base = bconst_s[...] + jnp.dot(h_t.astype(bf16), w1b_ref[...],
                                   preferred_element_type=f32)          # (B, E)
    w3_row = w3_ref[...]                                                # (1, E), hoisted
    for ci in range(KV // C):
        kp_c = kproj_s[ci * C:(ci + 1) * C, :]                          # (C, E)
        z1_c = jnp.tanh(base[:, None, :] + kp_c[None, :, :])            # (B, C, E)
        z2_c = jnp.tanh(
            jnp.dot(z1_c.reshape(B * C, E).astype(bf16), w2_ref[...],
                    preferred_element_type=f32) + b2_ref[...])          # (B*C, E)
        # TODO(synk): the w3 reduction stays on VPU+XLU; moving it to the MXU
        # needs a (B*C,1)->(B,C) relayout that is not worth it at these sizes.
        u_s[:, ci * C:(ci + 1) * C] = jnp.sum(
            z2_c.reshape(B, C, E) * w3_row[None, :, :], axis=-1)        # (B, C)
    u = u_s[...]                                                        # (B, KV)

    # ----- vocab projection + key logits + log-softmax (register-resident) -------
    o_t = jnp.dot(h_t.astype(bf16), wl_ref[...],
                  preferred_element_type=f32) + bl_ref[...]             # (B, V)
    # Key logits go into the LAST KV vocab columns; V-KV is 128-aligned so the
    # slices / concat are free vreg selections (no VMEM staging round trip).
    o_t = jnp.concatenate([o_t[:, :V - KV], o_t[:, V - KV:] + u], axis=-1)
    m = jnp.max(o_t, axis=-1, keepdims=True)
    lse = jnp.log(jnp.sum(jnp.exp(o_t - m), axis=-1, keepdims=True))
    y_ref[0] = o_t - m - lse

    # ----- carry state / greedy feedback -----------------------------------------
    h_s[...] = h_t
    c_s[...] = c_t

    @pl.when(t == pl.num_programs(0) - 1)
    def _final_state():
        hT_ref[...] = h_t
        cT_ref[...] = c_t

    if not teacher_forced:
        @pl.when(t < pl.num_programs(0) - 1)
        def _feedback():
            lane = jax.lax.broadcasted_iota(jnp.int32, (B, V), 1)
            # argmax with first-match tie break (== torch.max / jnp.argmax).
            tok = jnp.min(jnp.where(o_t == m, lane, V), axis=-1, keepdims=True)  # (B, 1)
            onehot = (lane == tok).astype(jnp.bfloat16)                          # (B, V)
            x_s[...] = jnp.dot(onehot, emb_ref[...],
                               preferred_element_type=f32).astype(jnp.bfloat16)


# =============================================================================
# Wrapper
# =============================================================================
def _zero_map(nd):
    return lambda t: (0,) * nd


def _resident(a):
    # Full-array block with a constant index map -> loaded to VMEM once,
    # resident across every grid step.
    return pl.BlockSpec(a.shape, _zero_map(a.ndim))


def sum_decoder_decode(params, h_c, k, context_vector, num_steps, teacher_targets=None):
    """Runs the whole T-step decode loop inside ONE pallas_call.

    teacher_targets: (T, B) int32 -> teacher forcing (training path)
    None            ->            greedy argmax feedback (inference path)
    Returns (y_all (T, B, V) log-probs, (h_T, c_T)).
    """
    h0, c0 = h_c
    B, H = h0.shape
    KV, E = k.shape
    V = params["wl"].shape[1]
    teacher_forced = teacher_targets is not None
    assert KV % 128 == 0 and (V - KV) % 128 == 0 and KV % KV_CHUNK == 0

    # ---- one-time parameter prep (outside the serial T-step loop) -----------------
    wihh = jnp.concatenate([params["wih"], params["whh"]], axis=0)        # (E+H, 4H) bf16
    bl_fold = params["bl"].at[:, V - KV:].add(params["b3"][0, 0])         # fold b3 into bl tail

    if teacher_forced:
        T = int(teacher_targets.shape[0])
        # Input token at step t is BOS(0) for t == 0, else the teacher target of step t-1.
        inp_tok = jnp.concatenate(
            [jnp.zeros((1, B), jnp.int32), teacher_targets[:-1].astype(jnp.int32)], axis=0)
        x_stream = jnp.take(params["embedding"], inp_tok, axis=0)        # (T, B, E) bf16
        xe_spec = pl.BlockSpec((1, B, E), lambda t: (t, 0, 0))
    else:
        T = int(num_steps)
        x_stream = jnp.zeros((1, B, E), jnp.bfloat16)                    # unused dummy
        xe_spec = pl.BlockSpec((1, B, E), lambda t: (0, 0, 0))

    inputs = (
        x_stream, h0, c0, context_vector, k,
        params["embedding"],
        wihh, params["blstm"],
        params["w1a"], params["w1b"], params["w1c"], params["b1"],
        params["w2"], params["b2"], params["w3"],
        params["wl"], bl_fold,
    )
    in_specs = [xe_spec] + [_resident(a) for a in inputs[1:]]

    out_shape = (
        jax.ShapeDtypeStruct((T, B, V), jnp.float32),
        jax.ShapeDtypeStruct((B, H), jnp.float32),
        jax.ShapeDtypeStruct((B, H), jnp.float32),
    )
    out_specs = (
        pl.BlockSpec((1, B, V), lambda t: (t, 0, 0)),
        pl.BlockSpec((B, H), lambda t: (0, 0)),
        pl.BlockSpec((B, H), lambda t: (0, 0)),
    )
    scratch_shapes = [
        pltpu.VMEM((B, H), jnp.float32),      # h_s
        pltpu.VMEM((B, H), jnp.float32),      # c_s
        pltpu.VMEM((B, E), jnp.bfloat16),     # x_s (greedy feedback)
        pltpu.VMEM((KV, E), jnp.float32),     # kproj_s
        pltpu.VMEM((B, E), jnp.float32),      # bconst_s
        pltpu.VMEM((B, KV), jnp.float32),     # u_s
    ]

    y, h_t, c_t = pl.pallas_call(
        functools.partial(decode_kernel, teacher_forced),
        grid=(T,),
        in_specs=in_specs,
        out_specs=out_specs,
        out_shape=out_shape,
        scratch_shapes=scratch_shapes,
        compiler_params=pltpu.CompilerParams(
            dimension_semantics=("arbitrary",)),   # sequential: state carried across steps
    )(*inputs)
    return y, (h_t, c_t)


# =============================================================================
# Pure-JAX reference (mirrors the bf16-weight / fp32-accumulate math)
# =============================================================================
def reference_decode(params, h_c, k, context_vector, num_steps, teacher_targets=None):
    f32, bf16 = jnp.float32, jnp.bfloat16
    h, c = h_c
    B, H = h.shape
    KV, E = k.shape
    V = params["wl"].shape[1]
    T = int(teacher_targets.shape[0]) if teacher_targets is not None else int(num_steps)

    def dot(a, w):
        return jnp.dot(a.astype(bf16), w, preferred_element_type=f32)

    kproj = dot(k, params["w1c"])
    bconst = dot(context_vector, params["w1a"]) + params["b1"]

    tok = jnp.zeros((B,), jnp.int32)      # BOS
    ys = []
    for t in range(T):
        x = jnp.take(params["embedding"], tok, axis=0)            # (B, E) bf16
        gates = dot(x, params["wih"]) + dot(h, params["whh"]) + params["blstm"]
        i_g = jax.nn.sigmoid(gates[:, 0 * H:1 * H])
        f_g = jax.nn.sigmoid(gates[:, 1 * H:2 * H])
        g_g = jnp.tanh(gates[:, 2 * H:3 * H])
        o_g = jax.nn.sigmoid(gates[:, 3 * H:4 * H])
        c = f_g * c + i_g * g_g
        h = o_g * jnp.tanh(c)

        base = bconst + dot(h, params["w1b"])
        z1 = jnp.tanh(base[:, None, :] + kproj[None, :, :])
        z2 = jnp.tanh(dot(z1.reshape(B * KV, E), params["w2"]) + params["b2"])
        u = jnp.sum(z2.reshape(B, KV, E) * params["w3"][None, :, :], axis=-1) + params["b3"][0, 0]

        o_t = dot(h, params["wl"]) + params["bl"]
        o_t = o_t.at[:, V - KV:].add(u)
        y = jax.nn.log_softmax(o_t, axis=-1)
        ys.append(y)

        if teacher_targets is not None:
            tok = teacher_targets[t].astype(jnp.int32)
        else:
            tok = jnp.argmax(y, axis=-1).astype(jnp.int32)
    return jnp.stack(ys, axis=0), (h, c)


def decoder_loss(y_all, targets):
    # Mirrors `loss += nn.CrossEntropyLoss()(y_t, target_t)` (y_t is already
    # log-softmax'ed, so per-step CE == mean_b(-y_t[b, target_b])).
    # TODO(synk): loss gather stays in JAX glue, not in the kernel.
    nll = -jnp.take_along_axis(y_all, targets[..., None].astype(jnp.int32), axis=-1)[..., 0]
    return jnp.sum(jnp.mean(nll, axis=1))


def init_params(key, V, E, H):
    ks = jax.random.split(key, 12)
    s = 0.1
    bf16, f32 = jnp.bfloat16, jnp.float32
    n = lambda kk, shape: s * jax.random.normal(kk, shape, f32)
    return {
        "embedding": n(ks[0], (V, E)).astype(bf16),
        # LSTMCell: torch weight_ih (4H,E) / weight_hh (4H,H) stored transposed.
        "wih": n(ks[1], (E, 4 * H)).astype(bf16),
        "whh": n(ks[2], (H, 4 * H)).astype(bf16),
        "blstm": n(ks[3], (1, 4 * H)),                 # b_ih + b_hh combined
        # attn_key layer 1: Linear(E + 2H -> E), split by input group [cv(H), h(H), k(E)].
        "w1a": n(ks[4], (H, E)).astype(bf16),
        "w1b": n(ks[5], (H, E)).astype(bf16),
        "w1c": n(ks[6], (E, E)).astype(bf16),
        "b1": n(ks[7], (1, E)),
        "w2": n(ks[8], (E, E)).astype(bf16),           # attn_key layer 2: Linear(E -> E)
        "b2": n(ks[9], (1, E)),
        "w3": n(ks[10], (1, E)),                       # attn_key layer 3: Linear(E -> 1)
        "b3": jnp.full((1, 1), 0.05, f32),
        "wl": n(ks[11], (H, V)).astype(bf16),          # output projection: Linear(H -> V)
        "bl": jnp.zeros((1, V), f32),
    }


if __name__ == "__main__":
    # Lane/sublane-dense shapes per perf feedback: B=8, E=H=128, V/KV multiples of 128.
    B, E, H, V, KV, T = 8, 128, 128, 512, 128, 6

    key = jax.random.PRNGKey(0)
    kp, k1, k2, k3, k4 = jax.random.split(key, 5)
    params = init_params(kp, V, E, H)

    # TODO(synk): encoder.forward is not provided; (h_last, c_last, k) are taken as inputs.
    h0 = 0.1 * jax.random.normal(k1, (B, H), jnp.float32)
    c0 = 0.1 * jax.random.normal(k2, (B, H), jnp.float32)
    context_vector = h0                      # module: context_vector = h_c[0]
    k_keys = 0.1 * jax.random.normal(k3, (KV, E), jnp.float32)
    teacher_targets = jax.random.randint(k4, (T, B), 0, V, dtype=jnp.int32)

    # ---- training path: teacher forcing + CE loss (fused T-step kernel) -----------
    # TODO(synk): nn.Dropout is identity here (inference-style); training dropout RNG
    # is not implemented.
    y_tf, (h_tf, c_tf) = sum_decoder_decode(
        params, (h0, c0), k_keys, context_vector, T, teacher_targets=teacher_targets)
    jax.block_until_ready((y_tf, h_tf, c_tf))

    y_ref, (h_ref, c_ref) = reference_decode(
        params, (h0, c0), k_keys, context_vector, T, teacher_targets=teacher_targets)

    assert y_tf.shape == (T, B, V)
    assert jnp.allclose(y_tf, y_ref, atol=2e-3, rtol=1e-3)
    assert jnp.allclose(h_tf, h_ref, atol=1e-3, rtol=1e-3)
    assert jnp.allclose(c_tf, c_ref, atol=1e-3, rtol=1e-3)
    loss = decoder_loss(y_tf, teacher_targets)
    loss_ref = decoder_loss(y_ref, teacher_targets)
    assert float(jnp.abs(loss - loss_ref)) < 5e-2

    # ---- inference path: greedy argmax feedback fully inside the kernel ------------
    y_gr, (h_gr, c_gr) = sum_decoder_decode(
        params, (h0, c0), k_keys, context_vector, T, teacher_targets=None)
    jax.block_until_ready((y_gr, h_gr, c_gr))
    predict_box = jnp.argmax(y_gr, axis=-1)                  # (T, B) predicted tokens

    assert y_gr.shape == (T, B, V) and predict_box.shape == (T, B)
    assert h_gr.shape == (B, H) and c_gr.shape == (B, H)
    assert bool(jnp.all(jnp.isfinite(y_gr)))
    # Step 0 is identical to the teacher-forced step 0 (same BOS input and state).
    assert jnp.allclose(y_gr[0], y_ref[0], atol=2e-3, rtol=1e-3)

    print("KERNEL_OK")
</pallas_src>

<mosaic_0001>
module attributes {stable_mosaic.version = 11 : i64} {
  func.func @decode_kernel(%arg0: i32, %arg1: memref<1x8x128xbf16, #tpu.memory_space<vmem>>, %arg2: memref<8x128xf32, #tpu.memory_space<vmem>>, %arg3: memref<8x128xf32, #tpu.memory_space<vmem>>, %arg4: memref<8x128xf32, #tpu.memory_space<vmem>>, %arg5: memref<128x128xf32, #tpu.memory_space<vmem>>, %arg6: memref<512x128xbf16, #tpu.memory_space<vmem>>, %arg7: memref<256x512xbf16, #tpu.memory_space<vmem>>, %arg8: memref<1x512xf32, #tpu.memory_space<vmem>>, %arg9: memref<128x128xbf16, #tpu.memory_space<vmem>>, %arg10: memref<128x128xbf16, #tpu.memory_space<vmem>>, %arg11: memref<128x128xbf16, #tpu.memory_space<vmem>>, %arg12: memref<1x128xf32, #tpu.memory_space<vmem>>, %arg13: memref<128x128xbf16, #tpu.memory_space<vmem>>, %arg14: memref<1x128xf32, #tpu.memory_space<vmem>>, %arg15: memref<1x128xf32, #tpu.memory_space<vmem>>, %arg16: memref<128x512xbf16, #tpu.memory_space<vmem>>, %arg17: memref<1x512xf32, #tpu.memory_space<vmem>>, %arg18: memref<1x8x512xf32, #tpu.memory_space<vmem>>, %arg19: memref<8x128xf32, #tpu.memory_space<vmem>>, %arg20: memref<8x128xf32, #tpu.memory_space<vmem>>, %arg21: memref<8x128xf32, #tpu.memory_space<vmem>>, %arg22: memref<8x128xf32, #tpu.memory_space<vmem>>, %arg23: memref<8x128xbf16, #tpu.memory_space<vmem>>, %arg24: memref<128x128xf32, #tpu.memory_space<vmem>>, %arg25: memref<8x128xf32, #tpu.memory_space<vmem>>, %arg26: memref<8x128xf32, #tpu.memory_space<vmem>>) attributes {dimension_semantics = [#tpu.dimension_semantics<arbitrary>], iteration_bounds = array<i64: 6>, scalar_prefetch = 0 : i64, scratch_operands = 6 : i64, tpu.core_type = #tpu.core_type<tc>, window_params = [{transform_indices = @transform_0, window_bounds = array<i64: 1, 8, 128>}, {pipeline_mode = #tpu.pipeline_mode<synchronous>, transform_indices = @transform_1, window_bounds = array<i64: 8, 128>}, {pipeline_mode = #tpu.pipeline_mode<synchronous>, transform_indices = @transform_2, window_bounds = array<i64: 8, 128>}, {pipeline_mode = #tpu.pipeline_mode<synchronous>, transform_indices = @transform_3, window_bounds = array<i64: 8, 128>}, {pipeline_mode = #tpu.pipeline_mode<synchronous>, transform_indices = @transform_4, window_bounds = array<i64: 128, 128>}, {pipeline_mode = #tpu.pipeline_mode<synchronous>, transform_indices = @transform_5, window_bounds = array<i64: 512, 128>}, {pipeline_mode = #tpu.pipeline_mode<synchronous>, transform_indices = @transform_6, window_bounds = array<i64: 256, 512>}, {pipeline_mode = #tpu.pipeline_mode<synchronous>, transform_indices = @transform_7, window_bounds = array<i64: 1, 512>}, {pipeline_mode = #tpu.pipeline_mode<synchronous>, transform_indices = @transform_8, window_bounds = array<i64: 128, 128>}, {pipeline_mode = #tpu.pipeline_mode<synchronous>, transform_indices = @transform_9, window_bounds = array<i64: 128, 128>}, {pipeline_mode = #tpu.pipeline_mode<synchronous>, transform_indices = @transform_10, window_bounds = array<i64: 128, 128>}, {pipeline_mode = #tpu.pipeline_mode<synchronous>, transform_indices = @transform_11, window_bounds = array<i64: 1, 128>}, {pipeline_mode = #tpu.pipeline_mode<synchronous>, transform_indices = @transform_12, window_bounds = array<i64: 128, 128>}, {pipeline_mode = #tpu.pipeline_mode<synchronous>, transform_indices = @transform_13, window_bounds = array<i64: 1, 128>}, {pipeline_mode = #tpu.pipeline_mode<synchronous>, transform_indices = @transform_14, window_bounds = array<i64: 1, 128>}, {pipeline_mode = #tpu.pipeline_mode<synchronous>, transform_indices = @transform_15, window_bounds = array<i64: 128, 512>}, {pipeline_mode = #tpu.pipeline_mode<synchronous>, transform_indices = @transform_16, window_bounds = array<i64: 1, 512>}, {transform_indices = @transform_17, window_bounds = array<i64: 1, 8, 512>}, {pipeline_mode = #tpu.pipeline_mode<synchronous>, transform_indices = @transform_18, window_bounds = array<i64: 8, 128>}, {pipeline_mode = #tpu.pipeline_mode<synchronous>, transform_indices = @transform_19, window_bounds = array<i64: 8, 128>}]} {
    %c0_i32 = arith.constant 0 : i32
    %0 = arith.cmpi eq, %arg0, %c0_i32 : i32
    %1 = arith.extui %0 : i1 to i32
    %c0_i32_0 = arith.constant 0 : i32
    %2 = arith.cmpi ne, %1, %c0_i32_0 : i32
    scf.if %2 {
      %c0_111 = arith.constant 0 : index
      %c0_112 = arith.constant 0 : index
      %244 = vector.load %arg2[%c0_111, %c0_112] : memref<8x128xf32, #tpu.memory_space<vmem>>, vector<8x128xf32>
      %c0_113 = arith.constant 0 : index
      %c0_114 = arith.constant 0 : index
      %245 = vector.load %arg21[%c0_113, %c0_114] : memref<8x128xf32, #tpu.memory_space<vmem>>, vector<8x128xf32>
      tpu.vector_store %arg21[%c0_113, %c0_114], %244 {strides = array<i32>} : memref<8x128xf32, #tpu.memory_space<vmem>>, vector<8x128xf32>,
      %c0_115 = arith.constant 0 : index
      %c0_116 = arith.constant 0 : index
      %246 = vector.load %arg3[%c0_115, %c0_116] : memref<8x128xf32, #tpu.memory_space<vmem>>, vector<8x128xf32>
      %c0_117 = arith.constant 0 : index
      %c0_118 = arith.constant 0 : index
      %247 = vector.load %arg22[%c0_117, %c0_118] : memref<8x128xf32, #tpu.memory_space<vmem>>, vector<8x128xf32>
      tpu.vector_store %arg22[%c0_117, %c0_118], %246 {strides = array<i32>} : memref<8x128xf32, #tpu.memory_space<vmem>>, vector<8x128xf32>,
      %c0_119 = arith.constant 0 : index
      %c0_120 = arith.constant 0 : index
      %248 = vector.load %arg5[%c0_119, %c0_120] : memref<128x128xf32, #tpu.memory_space<vmem>>, vector<128x128xf32>
      %249 = arith.truncf %248 : vector<128x128xf32> to vector<128x128xbf16>
      %c0_121 = arith.constant 0 : index
      %c0_122 = arith.constant 0 : index
      %250 = vector.load %arg11[%c0_121, %c0_122] : memref<128x128xbf16, #tpu.memory_space<vmem>>, vector<128x128xbf16>
      %cst_123 = arith.constant dense<0.000000e+00> : vector<128x128xf32>
      %251 = tpu.matmul %249, %250, %cst_123 {dimension_numbers = #tpu.dot_dimension_numbers<[1], [0], [0], [1], [0, 0, 1, 1], [], []>} : vector<128x128xbf16>, vector<128x128xbf16>, vector<128x128xf32> -> vector<128x128xf32>
      %c0_124 = arith.constant 0 : index
      %c0_125 = arith.constant 0 : index
      %252 = vector.load %arg24[%c0_124, %c0_125] : memref<128x128xf32, #tpu.memory_space<vmem>>, vector<128x128xf32>
      tpu.vector_store %arg24[%c0_124, %c0_125], %251 {strides = array<i32>} : memref<128x128xf32, #tpu.memory_space<vmem>>, vector<128x128xf32>,
      %c0_126 = arith.constant 0 : index
      %c0_127 = arith.constant 0 : index
      %253 = vector.load %arg4[%c0_126, %c0_127] : memref<8x128xf32, #tpu.memory_space<vmem>>, vector<8x128xf32>
      %254 = arith.truncf %253 : vector<8x128xf32> to vector<8x128xbf16>
      %c0_128 = arith.constant 0 : index
      %c0_129 = arith.constant 0 : index
      %255 = vector.load %arg9[%c0_128, %c0_129] : memref<128x128xbf16, #tpu.memory_space<vmem>>, vector<128x128xbf16>
      %cst_130 = arith.constant dense<0.000000e+00> : vector<8x128xf32>
      %256 = tpu.matmul %254, %255, %cst_130 {dimension_numbers = #tpu.dot_dimension_numbers<[1], [0], [0], [1], [0, 0, 1, 1], [], []>} : vector<8x128xbf16>, vector<128x128xbf16>, vector<8x128xf32> -> vector<8x128xf32>
      %c0_131 = arith.constant 0 : index
      %c0_132 = arith.constant 0 : index
      %257 = vector.load %arg12[%c0_131, %c0_132] : memref<1x128xf32, #tpu.memory_space<vmem>>, vector<1x128xf32>
      %258 = vector.broadcast %257 : vector<1x128xf32> to vector<8x128xf32>
      %259 = arith.addf %256, %258 : vector<8x128xf32>
      %c0_133 = arith.constant 0 : index
      %c0_134 = arith.constant 0 : index
      %260 = vector.load %arg25[%c0_133, %c0_134] : memref<8x128xf32, #tpu.memory_space<vmem>>, vector<8x128xf32>
      tpu.vector_store %arg25[%c0_133, %c0_134], %259 {strides = array<i32>} : memref<8x128xf32, #tpu.memory_space<vmem>>, vector<8x128xf32>,
    } else {
    }
    %c0 = arith.constant 0 : index
    %c0_1 = arith.constant 0 : index
    %c0_2 = arith.constant 0 : index
    %3 = vector.load %arg1[%c0, %c0_1, %c0_2] : memref<1x8x128xbf16, #tpu.memory_space<vmem>>, vector<1x8x128xbf16>
    %4 = vector.shape_cast %3 : vector<1x8x128xbf16> to vector<8x128xbf16>
    %c0_3 = arith.constant 0 : index
    %c0_4 = arith.constant 0 : index
    %5 = vector.load %arg21[%c0_3, %c0_4] : memref<8x128xf32, #tpu.memory_space<vmem>>, vector<8x128xf32>
    %c0_5 = arith.constant 0 : index
    %c0_6 = arith.constant 0 : index
    %6 = vector.load %arg22[%c0_5, %c0_6] : memref<8x128xf32, #tpu.memory_space<vmem>>, vector<8x128xf32>
    %7 = arith.truncf %5 : vector<8x128xf32> to vector<8x128xbf16>
    %8 = tpu.concatenate %4, %7 in 1 : vector<8x128xbf16>, vector<8x128xbf16> -> vector<8x256xbf16>
    %c0_7 = arith.constant 0 : index
    %c0_8 = arith.constant 0 : index
    %9 = vector.load %arg7[%c0_7, %c0_8] : memref<256x512xbf16, #tpu.memory_space<vmem>>, vector<256x512xbf16>
    %cst = arith.constant dense<0.000000e+00> : vector<8x512xf32>
    %10 = tpu.matmul %8, %9, %cst {dimension_numbers = #tpu.dot_dimension_numbers<[1], [0], [0], [1], [0, 0, 1, 1], [], []>} : vector<8x256xbf16>, vector<256x512xbf16>, vector<8x512xf32> -> vector<8x512xf32>
    %c0_9 = arith.constant 0 : index
    %c0_10 = arith.constant 0 : index
    %11 = vector.load %arg8[%c0_9, %c0_10] : memref<1x512xf32, #tpu.memory_space<vmem>>, vector<1x512xf32>
    %12 = vector.broadcast %11 : vector<1x512xf32> to vector<8x512xf32>
    %13 = arith.addf %10, %12 : vector<8x512xf32>
    %14 = vector.extract_strided_slice %13 {offsets = [0, 0], sizes = [8, 128], strides = [1, 1]} : vector<8x512xf32> to vector<8x128xf32>
    %15 = arith.negf %14 : vector<8x128xf32>
    %16 = math.exp %15 : vector<8x128xf32>
    %cst_11 = arith.constant 1.000000e+00 : f32
    %17 = vector.broadcast %cst_11 : f32 to vector<8x128xf32>
    %18 = arith.addf %17, %16 : vector<8x128xf32>
    %19 = arith.divf %17, %18 : vector<8x128xf32>
    %20 = vector.extract_strided_slice %13 {offsets = [0, 128], sizes = [8, 128], strides = [1, 1]} : vector<8x512xf32> to vector<8x128xf32>
    %21 = arith.negf %20 : vector<8x128xf32>
    %22 = math.exp %21 : vector<8x128xf32>
    %cst_12 = arith.constant 1.000000e+00 : f32
    %23 = vector.broadcast %cst_12 : f32 to vector<8x128xf32>
    %24 = arith.addf %23, %22 : vector<8x128xf32>
    %25 = arith.divf %23, %24 : vector<8x128xf32>
    %26 = vector.extract_strided_slice %13 {offsets = [0, 256], sizes = [8, 128], strides = [1, 1]} : vector<8x512xf32> to vector<8x128xf32>
    %27 = math.tanh %26 : vector<8x128xf32>
    %28 = vector.extract_strided_slice %13 {offsets = [0, 384], sizes = [8, 128], strides = [1, 1]} : vector<8x512xf32> to vector<8x128xf32>
    %29 = arith.negf %28 : vector<8x128xf32>
    %30 = math.exp %29 : vector<8x128xf32>
    %cst_13 = arith.constant 1.000000e+00 : f32
    %31 = vector.broadcast %cst_13 : f32 to vector<8x128xf32>
    %32 = arith.addf %31, %30 : vector<8x128xf32>
    %33 = arith.divf %31, %32 : vector<8x128xf32>
    %34 = arith.mulf %25, %6 : vector<8x128xf32>
    %35 = arith.mulf %19, %27 : vector<8x128xf32>
    %36 = arith.addf %34, %35 : vector<8x128xf32>
    %37 = math.tanh %36 : vector<8x128xf32>
    %38 = arith.mulf %33, %37 : vector<8x128xf32>
    %c0_14 = arith.constant 0 : index
    %c0_15 = arith.constant 0 : index
    %39 = vector.load %arg25[%c0_14, %c0_15] : memref<8x128xf32, #tpu.memory_space<vmem>>, vector<8x128xf32>
    %40 = arith.truncf %38 : vector<8x128xf32> to vector<8x128xbf16>
    %c0_16 = arith.constant 0 : index
    %c0_17 = arith.constant 0 : index
    %41 = vector.load %arg10[%c0_16, %c0_17] : memref<128x128xbf16, #tpu.memory_space<vmem>>, vector<128x128xbf16>
    %cst_18 = arith.constant dense<0.000000e+00> : vector<8x128xf32>
    %42 = tpu.matmul %40, %41, %cst_18 {dimension_numbers = #tpu.dot_dimension_numbers<[1], [0], [0], [1], [0, 0, 1, 1], [], []>} : vector<8x128xbf16>, vector<128x128xbf16>, vector<8x128xf32> -> vector<8x128xf32>
    %43 = arith.addf %39, %42 : vector<8x128xf32>
    %c0_19 = arith.constant 0 : index
    %c0_20 = arith.constant 0 : index
    %44 = vector.load %arg15[%c0_19, %c0_20] : memref<1x128xf32, #tpu.memory_space<vmem>>, vector<1x128xf32>
    %c0_21 = arith.constant 0 : index
    %c0_22 = arith.constant 0 : index
    %45 = vector.load %arg24[%c0_21, %c0_22] : memref<128x128xf32, #tpu.memory_space<vmem>>, vector<16x128xf32>
    %46 = vector.shape_cast %43 : vector<8x128xf32> to vector<8x1x128xf32>
    %47 = vector.shape_cast %45 : vector<16x128xf32> to vector<1x16x128xf32>
    %48 = vector.broadcast %46 : vector<8x1x128xf32> to vector<8x16x128xf32>
    %49 = vector.broadcast %47 : vector<1x16x128xf32> to vector<8x16x128xf32>
    %50 = arith.addf %48, %49 : vector<8x16x128xf32>
    %51 = math.tanh %50 : vector<8x16x128xf32>
    %52 = vector.shape_cast %51 : vector<8x16x128xf32> to vector<128x128xf32>
    %53 = arith.truncf %52 : vector<128x128xf32> to vector<128x128xbf16>
    %c0_23 = arith.constant 0 : index
    %c0_24 = arith.constant 0 : index
    %54 = vector.load %arg13[%c0_23, %c0_24] : memref<128x128xbf16, #tpu.memory_space<vmem>>, vector<128x128xbf16>
    %cst_25 = arith.constant dense<0.000000e+00> : vector<128x128xf32>
    %55 = tpu.matmul %53, %54, %cst_25 {dimension_numbers = #tpu.dot_dimension_numbers<[1], [0], [0], [1], [0, 0, 1, 1], [], []>} : vector<128x128xbf16>, vector<128x128xbf16>, vector<128x128xf32> -> vector<128x128xf32>
    %c0_26 = arith.constant 0 : index
    %c0_27 = arith.constant 0 : index
    %56 = vector.load %arg14[%c0_26, %c0_27] : memref<1x128xf32, #tpu.memory_space<vmem>>, vector<1x128xf32>
    %57 = vector.broadcast %56 : vector<1x128xf32> to vector<128x128xf32>
    %58 = arith.addf %55, %57 : vector<128x128xf32>
    %59 = math.tanh %58 : vector<128x128xf32>
    %60 = vector.shape_cast %59 : vector<128x128xf32> to vector<8x16x128xf32>
    %61 = vector.shape_cast %44 : vector<1x128xf32> to vector<1x1x128xf32>
    %62 = vector.broadcast %61 : vector<1x1x128xf32> to vector<8x16x128xf32>
    %63 = arith.mulf %60, %62 : vector<8x16x128xf32>
    %cst_28 = arith.constant dense<0.000000e+00> : vector<8x16xf32>
    %64 = vector.multi_reduction <add>, %63, %cst_28 [2] : vector<8x16x128xf32> to vector<8x16xf32>
    %c0_29 = arith.constant 0 : index
    %c0_30 = arith.constant 0 : index
    %65 = vector.load %arg26[%c0_29, %c0_30] : memref<8x128xf32, #tpu.memory_space<vmem>>, vector<8x16xf32>
    tpu.vector_store %arg26[%c0_29, %c0_30], %64 {strides = array<i32>} : memref<8x128xf32, #tpu.memory_space<vmem>>, vector<8x16xf32>,
    %c16 = arith.constant 16 : index
    %c0_31 = arith.constant 0 : index
    %66 = vector.load %arg24[%c16, %c0_31] : memref<128x128xf32, #tpu.memory_space<vmem>>, vector<16x128xf32>
    %67 = vector.shape_cast %43 : vector<8x128xf32> to vector<8x1x128xf32>
    %68 = vector.shape_cast %66 : vector<16x128xf32> to vector<1x16x128xf32>
    %69 = vector.broadcast %67 : vector<8x1x128xf32> to vector<8x16x128xf32>
    %70 = vector.broadcast %68 : vector<1x16x128xf32> to vector<8x16x128xf32>
    %71 = arith.addf %69, %70 : vector<8x16x128xf32>
    %72 = math.tanh %71 : vector<8x16x128xf32>
    %73 = vector.shape_cast %72 : vector<8x16x128xf32> to vector<128x128xf32>
    %74 = arith.truncf %73 : vector<128x128xf32> to vector<128x128xbf16>
    %c0_32 = arith.constant 0 : index
    %c0_33 = arith.constant 0 : index
    %75 = vector.load %arg13[%c0_32, %c0_33] : memref<128x128xbf16, #tpu.memory_space<vmem>>, vector<128x128xbf16>
    %cst_34 = arith.constant dense<0.000000e+00> : vector<128x128xf32>
    %76 = tpu.matmul %74, %75, %cst_34 {dimension_numbers = #tpu.dot_dimension_numbers<[1], [0], [0], [1], [0, 0, 1, 1], [], []>} : vector<128x128xbf16>, vector<128x128xbf16>, vector<128x128xf32> -> vector<128x128xf32>
    %c0_35 = arith.constant 0 : index
    %c0_36 = arith.constant 0 : index
    %77 = vector.load %arg14[%c0_35, %c0_36] : memref<1x128xf32, #tpu.memory_space<vmem>>, vector<1x128xf32>
    %78 = vector.broadcast %77 : vector<1x128xf32> to vector<128x128xf32>
    %79 = arith.addf %76, %78 : vector<128x128xf32>
    %80 = math.tanh %79 : vector<128x128xf32>
    %81 = vector.shape_cast %80 : vector<128x128xf32> to vector<8x16x128xf32>
    %82 = vector.shape_cast %44 : vector<1x128xf32> to vector<1x1x128xf32>
    %83 = vector.broadcast %82 : vector<1x1x128xf32> to vector<8x16x128xf32>
    %84 = arith.mulf %81, %83 : vector<8x16x128xf32>
    %cst_37 = arith.constant dense<0.000000e+00> : vector<8x16xf32>
    %85 = vector.multi_reduction <add>, %84, %cst_37 [2] : vector<8x16x128xf32> to vector<8x16xf32>
    %c0_38 = arith.constant 0 : index
    %c16_39 = arith.constant 16 : index
    %86 = vector.load %arg26[%c0_38, %c16_39] : memref<8x128xf32, #tpu.memory_space<vmem>>, vector<8x16xf32>
    tpu.vector_store %arg26[%c0_38, %c16_39], %85 {strides = array<i32>} : memref<8x128xf32, #tpu.memory_space<vmem>>, vector<8x16xf32>,
    %c32 = arith.constant 32 : index
    %c0_40 = arith.constant 0 : index
    %87 = vector.load %arg24[%c32, %c0_40] : memref<128x128xf32, #tpu.memory_space<vmem>>, vector<16x128xf32>
    %88 = vector.shape_cast %43 : vector<8x128xf32> to vector<8x1x128xf32>
    %89 = vector.shape_cast %87 : vector<16x128xf32> to vector<1x16x128xf32>
    %90 = vector.broadcast %88 : vector<8x1x128xf32> to vector<8x16x128xf32>
    %91 = vector.broadcast %89 : vector<1x16x128xf32> to vector<8x16x128xf32>
    %92 = arith.addf %90, %91 : vector<8x16x128xf32>
    %93 = math.tanh %92 : vector<8x16x128xf32>
    %94 = vector.shape_cast %93 : vector<8x16x128xf32> to vector<128x128xf32>
    %95 = arith.truncf %94 : vector<128x128xf32> to vector<128x128xbf16>
    %c0_41 = arith.constant 0 : index
    %c0_42 = arith.constant 0 : index
    %96 = vector.load %arg13[%c0_41, %c0_42] : memref<128x128xbf16, #tpu.memory_space<vmem>>, vector<128x128xbf16>
    %cst_43 = arith.constant dense<0.000000e+00> : vector<128x128xf32>
    %97 = tpu.matmul %95, %96, %cst_43 {dimension_numbers = #tpu.dot_dimension_numbers<[1], [0], [0], [1], [0, 0, 1, 1], [], []>} : vector<128x128xbf16>, vector<128x128xbf16>, vector<128x128xf32> -> vector<128x128xf32>
    %c0_44 = arith.constant 0 : index
    %c0_45 = arith.constant 0 : index
    %98 = vector.load %arg14[%c0_44, %c0_45] : memref<1x128xf32, #tpu.memory_space<vmem>>, vector<1x128xf32>
    %99 = vector.broadcast %98 : vector<1x128xf32> to vector<128x128xf32>
    %100 = arith.addf %97, %99 : vector<128x128xf32>
    %101 = math.tanh %100 : vector<128x128xf32>
    %102 = vector.shape_cast %101 : vector<128x128xf32> to vector<8x16x128xf32>
    %103 = vector.shape_cast %44 : vector<1x128xf32> to vector<1x1x128xf32>
    %104 = vector.broadcast %103 : vector<1x1x128xf32> to vector<8x16x128xf32>
    %105 = arith.mulf %102, %104 : vector<8x16x128xf32>
    %cst_46 = arith.constant dense<0.000000e+00> : vector<8x16xf32>
    %106 = vector.multi_reduction <add>, %105, %cst_46 [2] : vector<8x16x128xf32> to vector<8x16xf32>
    %c0_47 = arith.constant 0 : index
    %c32_48 = arith.constant 32 : index
    %107 = vector.load %arg26[%c0_47, %c32_48] : memref<8x128xf32, #tpu.memory_space<vmem>>, vector<8x16xf32>
    tpu.vector_store %arg26[%c0_47, %c32_48], %106 {strides = array<i32>} : memref<8x128xf32, #tpu.memory_space<vmem>>, vector<8x16xf32>,
    %c48 = arith.constant 48 : index
    %c0_49 = arith.constant 0 : index
    %108 = vector.load %arg24[%c48, %c0_49] : memref<128x128xf32, #tpu.memory_space<vmem>>, vector<16x128xf32>
    %109 = vector.shape_cast %43 : vector<8x128xf32> to vector<8x1x128xf32>
    %110 = vector.shape_cast %108 : vector<16x128xf32> to vector<1x16x128xf32>
    %111 = vector.broadcast %109 : vector<8x1x128xf32> to vector<8x16x128xf32>
    %112 = vector.broadcast %110 : vector<1x16x128xf32> to vector<8x16x128xf32>
    %113 = arith.addf %111, %112 : vector<8x16x128xf32>
    %114 = math.tanh %113 : vector<8x16x128xf32>
    %115 = vector.shape_cast %114 : vector<8x16x128xf32> to vector<128x128xf32>
    %116 = arith.truncf %115 : vector<128x128xf32> to vector<128x128xbf16>
    %c0_50 = arith.constant 0 : index
    %c0_51 = arith.constant 0 : index
    %117 = vector.load %arg13[%c0_50, %c0_51] : memref<128x128xbf16, #tpu.memory_space<vmem>>, vector<128x128xbf16>
    %cst_52 = arith.constant dense<0.000000e+00> : vector<128x128xf32>
    %118 = tpu.matmul %116, %117, %cst_52 {dimension_numbers = #tpu.dot_dimension_numbers<[1], [0], [0], [1], [0, 0, 1, 1], [], []>} : vector<128x128xbf16>, vector<128x128xbf16>, vector<128x128xf32> -> vector<128x128xf32>
    %c0_53 = arith.constant 0 : index
    %c0_54 = arith.constant 0 : index
    %119 = vector.load %arg14[%c0_53, %c0_54] : memref<1x128xf32, #tpu.memory_space<vmem>>, vector<1x128xf32>
    %120 = vector.broadcast %119 : vector<1x128xf32> to vector<128x128xf32>
    %121 = arith.addf %118, %120 : vector<128x128xf32>
    %122 = math.tanh %121 : vector<128x128xf32>
    %123 = vector.shape_cast %122 : vector<128x128xf32> to vector<8x16x128xf32>
    %124 = vector.shape_cast %44 : vector<1x128xf32> to vector<1x1x128xf32>
    %125 = vector.broadcast %124 : vector<1x1x128xf32> to vector<8x16x128xf32>
    %126 = arith.mulf %123, %125 : vector<8x16x128xf32>
    %cst_55 = arith.constant dense<0.000000e+00> : vector<8x16xf32>
    %127 = vector.multi_reduction <add>, %126, %cst_55 [2] : vector<8x16x128xf32> to vector<8x16xf32>
    %c0_56 = arith.constant 0 : index
    %c48_57 = arith.constant 48 : index
    %128 = vector.load %arg26[%c0_56, %c48_57] : memref<8x128xf32, #tpu.memory_space<vmem>>, vector<8x16xf32>
    tpu.vector_store %arg26[%c0_56, %c48_57], %127 {strides = array<i32>} : memref<8x128xf32, #tpu.memory_space<vmem>>, vector<8x16xf32>,
    %c64 = arith.constant 64 : index
    %c0_58 = arith.constant 0 : index
    %129 = vector.load %arg24[%c64, %c0_58] : memref<128x128xf32, #tpu.memory_space<vmem>>, vector<16x128xf32>
    %130 = vector.shape_cast %43 : vector<8x128xf32> to vector<8x1x128xf32>
    %131 = vector.shape_cast %129 : vector<16x128xf32> to vector<1x16x128xf32>
    %132 = vector.broadcast %130 : vector<8x1x128xf32> to vector<8x16x128xf32>
    %133 = vector.broadcast %131 : vector<1x16x128xf32> to vector<8x16x128xf32>
    %134 = arith.addf %132, %133 : vector<8x16x128xf32>
    %135 = math.tanh %134 : vector<8x16x128xf32>
    %136 = vector.shape_cast %135 : vector<8x16x128xf32> to vector<128x128xf32>
    %137 = arith.truncf %136 : vector<128x128xf32> to vector<128x128xbf16>
    %c0_59 = arith.constant 0 : index
    %c0_60 = arith.constant 0 : index
    %138 = vector.load %arg13[%c0_59, %c0_60] : memref<128x128xbf16, #tpu.memory_space<vmem>>, vector<128x128xbf16>
    %cst_61 = arith.constant dense<0.000000e+00> : vector<128x128xf32>
    %139 = tpu.matmul %137, %138, %cst_61 {dimension_numbers = #tpu.dot_dimension_numbers<[1], [0], [0], [1], [0, 0, 1, 1], [], []>} : vector<128x128xbf16>, vector<128x128xbf16>, vector<128x128xf32> -> vector<128x128xf32>
    %c0_62 = arith.constant 0 : index
    %c0_63 = arith.constant 0 : index
    %140 = vector.load %arg14[%c0_62, %c0_63] : memref<1x128xf32, #tpu.memory_space<vmem>>, vector<1x128xf32>
    %141 = vector.broadcast %140 : vector<1x128xf32> to vector<128x128xf32>
    %142 = arith.addf %139, %141 : vector<128x128xf32>
    %143 = math.tanh %142 : vector<128x128xf32>
    %144 = vector.shape_cast %143 : vector<128x128xf32> to vector<8x16x128xf32>
    %145 = vector.shape_cast %44 : vector<1x128xf32> to vector<1x1x128xf32>
    %146 = vector.broadcast %145 : vector<1x1x128xf32> to vector<8x16x128xf32>
    %147 = arith.mulf %144, %146 : vector<8x16x128xf32>
    %cst_64 = arith.constant dense<0.000000e+00> : vector<8x16xf32>
    %148 = vector.multi_reduction <add>, %147, %cst_64 [2] : vector<8x16x128xf32> to vector<8x16xf32>
    %c0_65 = arith.constant 0 : index
    %c64_66 = arith.constant 64 : index
    %149 = vector.load %arg26[%c0_65, %c64_66] : memref<8x128xf32, #tpu.memory_space<vmem>>, vector<8x16xf32>
    tpu.vector_store %arg26[%c0_65, %c64_66], %148 {strides = array<i32>} : memref<8x128xf32, #tpu.memory_space<vmem>>, vector<8x16xf32>,
    %c80 = arith.constant 80 : index
    %c0_67 = arith.constant 0 : index
    %150 = vector.load %arg24[%c80, %c0_67] : memref<128x128xf32, #tpu.memory_space<vmem>>, vector<16x128xf32>
    %151 = vector.shape_cast %43 : vector<8x128xf32> to vector<8x1x128xf32>
    %152 = vector.shape_cast %150 : vector<16x128xf32> to vector<1x16x128xf32>
    %153 = vector.broadcast %151 : vector<8x1x128xf32> to vector<8x16x128xf32>
    %154 = vector.broadcast %152 : vector<1x16x128xf32> to vector<8x16x128xf32>
    %155 = arith.addf %153, %154 : vector<8x16x128xf32>
    %156 = math.tanh %155 : vector<8x16x128xf32>
    %157 = vector.shape_cast %156 : vector<8x16x128xf32> to vector<128x128xf32>
    %158 = arith.truncf %157 : vector<128x128xf32> to vector<128x128xbf16>
    %c0_68 = arith.constant 0 : index
    %c0_69 = arith.constant 0 : index
    %159 = vector.load %arg13[%c0_68, %c0_69] : memref<128x128xbf16, #tpu.memory_space<vmem>>, vector<128x128xbf16>
    %cst_70 = arith.constant dense<0.000000e+00> : vector<128x128xf32>
    %160 = tpu.matmul %158, %159, %cst_70 {dimension_numbers = #tpu.dot_dimension_numbers<[1], [0], [0], [1], [0, 0, 1, 1], [], []>} : vector<128x128xbf16>, vector<128x128xbf16>, vector<128x128xf32> -> vector<128x128xf32>
    %c0_71 = arith.constant 0 : index
    %c0_72 = arith.constant 0 : index
    %161 = vector.load %arg14[%c0_71, %c0_72] : memref<1x128xf32, #tpu.memory_space<vmem>>, vector<1x128xf32>
    %162 = vector.broadcast %161 : vector<1x128xf32> to vector<128x128xf32>
    %163 = arith.addf %160, %162 : vector<128x128xf32>
    %164 = math.tanh %163 : vector<128x128xf32>
    %165 = vector.shape_cast %164 : vector<128x128xf32> to vector<8x16x128xf32>
    %166 = vector.shape_cast %44 : vector<1x128xf32> to vector<1x1x128xf32>
    %167 = vector.broadcast %166 : vector<1x1x128xf32> to vector<8x16x128xf32>
    %168 = arith.mulf %165, %167 : vector<8x16x128xf32>
    %cst_73 = arith.constant dense<0.000000e+00> : vector<8x16xf32>
    %169 = vector.multi_reduction <add>, %168, %cst_73 [2] : vector<8x16x128xf32> to vector<8x16xf32>
    %c0_74 = arith.constant 0 : index
    %c80_75 = arith.constant 80 : index
    %170 = vector.load %arg26[%c0_74, %c80_75] : memref<8x128xf32, #tpu.memory_space<vmem>>, vector<8x16xf32>
    tpu.vector_store %arg26[%c0_74, %c80_75], %169 {strides = array<i32>} : memref<8x128xf32, #tpu.memory_space<vmem>>, vector<8x16xf32>,
    %c96 = arith.constant 96 : index
    %c0_76 = arith.constant 0 : index
    %171 = vector.load %arg24[%c96, %c0_76] : memref<128x128xf32, #tpu.memory_space<vmem>>, vector<16x128xf32>
    %172 = vector.shape_cast %43 : vector<8x128xf32> to vector<8x1x128xf32>
    %173 = vector.shape_cast %171 : vector<16x128xf32> to vector<1x16x128xf32>
    %174 = vector.broadcast %172 : vector<8x1x128xf32> to vector<8x16x128xf32>
    %175 = vector.broadcast %173 : vector<1x16x128xf32> to vector<8x16x128xf32>
    %176 = arith.addf %174, %175 : vector<8x16x128xf32>
    %177 = math.tanh %176 : vector<8x16x128xf32>
    %178 = vector.shape_cast %177 : vector<8x16x128xf32> to vector<128x128xf32>
    %179 = arith.truncf %178 : vector<128x128xf32> to vector<128x128xbf16>
    %c0_77 = arith.constant 0 : index
    %c0_78 = arith.constant 0 : index
    %180 = vector.load %arg13[%c0_77, %c0_78] : memref<128x128xbf16, #tpu.memory_space<vmem>>, vector<128x128xbf16>
    %cst_79 = arith.constant dense<0.000000e+00> : vector<128x128xf32>
    %181 = tpu.matmul %179, %180, %cst_79 {dimension_numbers = #tpu.dot_dimension_numbers<[1], [0], [0], [1], [0, 0, 1, 1], [], []>} : vector<128x128xbf16>, vector<128x128xbf16>, vector<128x128xf32> -> vector<128x128xf32>
    %c0_80 = arith.constant 0 : index
    %c0_81 = arith.constant 0 : index
    %182 = vector.load %arg14[%c0_80, %c0_81] : memref<1x128xf32, #tpu.memory_space<vmem>>, vector<1x128xf32>
    %183 = vector.broadcast %182 : vector<1x128xf32> to vector<128x128xf32>
    %184 = arith.addf %181, %183 : vector<128x128xf32>
    %185 = math.tanh %184 : vector<128x128xf32>
    %186 = vector.shape_cast %185 : vector<128x128xf32> to vector<8x16x128xf32>
    %187 = vector.shape_cast %44 : vector<1x128xf32> to vector<1x1x128xf32>
    %188 = vector.broadcast %187 : vector<1x1x128xf32> to vector<8x16x128xf32>
    %189 = arith.mulf %186, %188 : vector<8x16x128xf32>
    %cst_82 = arith.constant dense<0.000000e+00> : vector<8x16xf32>
    %190 = vector.multi_reduction <add>, %189, %cst_82 [2] : vector<8x16x128xf32> to vector<8x16xf32>
    %c0_83 = arith.constant 0 : index
    %c96_84 = arith.constant 96 : index
    %191 = vector.load %arg26[%c0_83, %c96_84] : memref<8x128xf32, #tpu.memory_space<vmem>>, vector<8x16xf32>
    tpu.vector_store %arg26[%c0_83, %c96_84], %190 {strides = array<i32>} : memref<8x128xf32, #tpu.memory_space<vmem>>, vector<8x16xf32>,
    %c112 = arith.constant 112 : index
    %c0_85 = arith.constant 0 : index
    %192 = vector.load %arg24[%c112, %c0_85] : memref<128x128xf32, #tpu.memory_space<vmem>>, vector<16x128xf32>
    %193 = vector.shape_cast %43 : vector<8x128xf32> to vector<8x1x128xf32>
    %194 = vector.shape_cast %192 : vector<16x128xf32> to vector<1x16x128xf32>
    %195 = vector.broadcast %193 : vector<8x1x128xf32> to vector<8x16x128xf32>
    %196 = vector.broadcast %194 : vector<1x16x128xf32> to vector<8x16x128xf32>
    %197 = arith.addf %195, %196 : vector<8x16x128xf32>
    %198 = math.tanh %197 : vector<8x16x128xf32>
    %199 = vector.shape_cast %198 : vector<8x16x128xf32> to vector<128x128xf32>
    %200 = arith.truncf %199 : vector<128x128xf32> to vector<128x128xbf16>
    %c0_86 = arith.constant 0 : index
    %c0_87 = arith.constant 0 : index
    %201 = vector.load %arg13[%c0_86, %c0_87] : memref<128x128xbf16, #tpu.memory_space<vmem>>, vector<128x128xbf16>
    %cst_88 = arith.constant dense<0.000000e+00> : vector<128x128xf32>
    %202 = tpu.matmul %200, %201, %cst_88 {dimension_numbers = #tpu.dot_dimension_numbers<[1], [0], [0], [1], [0, 0, 1, 1], [], []>} : vector<128x128xbf16>, vector<128x128xbf16>, vector<128x128xf32> -> vector<128x128xf32>
    %c0_89 = arith.constant 0 : index
    %c0_90 = arith.constant 0 : index
    %203 = vector.load %arg14[%c0_89, %c0_90] : memref<1x128xf32, #tpu.memory_space<vmem>>, vector<1x128xf32>
    %204 = vector.broadcast %203 : vector<1x128xf32> to vector<128x128xf32>
    %205 = arith.addf %202, %204 : vector<128x128xf32>
    %206 = math.tanh %205 : vector<128x128xf32>
    %207 = vector.shape_cast %206 : vector<128x128xf32> to vector<8x16x128xf32>
    %208 = vector.shape_cast %44 : vector<1x128xf32> to vector<1x1x128xf32>
    %209 = vector.broadcast %208 : vector<1x1x128xf32> to vector<8x16x128xf32>
    %210 = arith.mulf %207, %209 : vector<8x16x128xf32>
    %cst_91 = arith.constant dense<0.000000e+00> : vector<8x16xf32>
    %211 = vector.multi_reduction <add>, %210, %cst_91 [2] : vector<8x16x128xf32> to vector<8x16xf32>
    %c0_92 = arith.constant 0 : index
    %c112_93 = arith.constant 112 : index
    %212 = vector.load %arg26[%c0_92, %c112_93] : memref<8x128xf32, #tpu.memory_space<vmem>>, vector<8x16xf32>
    tpu.vector_store %arg26[%c0_92, %c112_93], %211 {strides = array<i32>} : memref<8x128xf32, #tpu.memory_space<vmem>>, vector<8x16xf32>,
    %c0_94 = arith.constant 0 : index
    %c0_95 = arith.constant 0 : index
    %213 = vector.load %arg26[%c0_94, %c0_95] : memref<8x128xf32, #tpu.memory_space<vmem>>, vector<8x128xf32>
    %214 = arith.truncf %38 : vector<8x128xf32> to vector<8x128xbf16>
    %c0_96 = arith.constant 0 : index
    %c0_97 = arith.constant 0 : index
    %215 = vector.load %arg16[%c0_96, %c0_97] : memref<128x512xbf16, #tpu.memory_space<vmem>>, vector<128x512xbf16>
    %cst_98 = arith.constant dense<0.000000e+00> : vector<8x512xf32>
    %216 = tpu.matmul %214, %215, %cst_98 {dimension_numbers = #tpu.dot_dimension_numbers<[1], [0], [0], [1], [0, 0, 1, 1], [], []>} : vector<8x128xbf16>, vector<128x512xbf16>, vector<8x512xf32> -> vector<8x512xf32>
    %c0_99 = arith.constant 0 : index
    %c0_100 = arith.constant 0 : index
    %217 = vector.load %arg17[%c0_99, %c0_100] : memref<1x512xf32, #tpu.memory_space<vmem>>, vector<1x512xf32>
    %218 = vector.broadcast %217 : vector<1x512xf32> to vector<8x512xf32>
    %219 = arith.addf %216, %218 : vector<8x512xf32>
    %220 = vector.extract_strided_slice %219 {offsets = [0, 0], sizes = [8, 384], strides = [1, 1]} : vector<8x512xf32> to vector<8x384xf32>
    %221 = vector.extract_strided_slice %219 {offsets = [0, 384], sizes = [8, 128], strides = [1, 1]} : vector<8x512xf32> to vector<8x128xf32>
    %222 = arith.addf %221, %213 : vector<8x128xf32>
    %223 = tpu.concatenate %220, %222 in 1 : vector<8x384xf32>, vector<8x128xf32> -> vector<8x512xf32>
    %cst_101 = arith.constant dense<0xFF800000> : vector<8xf32>
    %224 = vector.multi_reduction <maximumf>, %223, %cst_101 [1] : vector<8x512xf32> to vector<8xf32>
    %225 = vector.shape_cast %224 : vector<8xf32> to vector<8x1xf32>
    %226 = vector.broadcast %225 : vector<8x1xf32> to vector<8x512xf32>
    %227 = arith.subf %223, %226 : vector<8x512xf32>
    %228 = math.exp %227 : vector<8x512xf32>
    %cst_102 = arith.constant dense<0.000000e+00> : vector<8xf32>
    %229 = vector.multi_reduction <add>, %228, %cst_102 [1] : vector<8x512xf32> to vector<8xf32>
    %230 = vector.shape_cast %229 : vector<8xf32> to vector<8x1xf32>
    %231 = math.log %230 : vector<8x1xf32>
    %232 = vector.broadcast %225 : vector<8x1xf32> to vector<8x512xf32>
    %233 = arith.subf %223, %232 : vector<8x512xf32>
    %234 = vector.broadcast %231 : vector<8x1xf32> to vector<8x512xf32>
    %235 = arith.subf %233, %234 : vector<8x512xf32>
    %c0_103 = arith.constant 0 : index
    %c0_104 = arith.constant 0 : index
    %c0_105 = arith.constant 0 : index
    %236 = vector.load %arg18[%c0_103, %c0_104, %c0_105] : memref<1x8x512xf32, #tpu.memory_space<vmem>>, vector<1x8x512xf32>
    %237 = vector.shape_cast %236 : vector<1x8x512xf32> to vector<8x512xf32>
    %238 = vector.shape_cast %235 : vector<8x512xf32> to vector<1x8x512xf32>
    tpu.vector_store %arg18[%c0_103, %c0_104, %c0_105], %238 {strides = array<i32>} : memref<1x8x512xf32, #tpu.memory_space<vmem>>, vector<1x8x512xf32>,
    %c0_106 = arith.constant 0 : index
    %c0_107 = arith.constant 0 : index
    %239 = vector.load %arg21[%c0_106, %c0_107] : memref<8x128xf32, #tpu.memory_space<vmem>>, vector<8x128xf32>
    tpu.vector_store %arg21[%c0_106, %c0_107], %38 {strides = array<i32>} : memref<8x128xf32, #tpu.memory_space<vmem>>, vector<8x128xf32>,
    %c0_108 = arith.constant 0 : index
    %c0_109 = arith.constant 0 : index
    %240 = vector.load %arg22[%c0_108, %c0_109] : memref<8x128xf32, #tpu.memory_space<vmem>>, vector<8x128xf32>
    tpu.vector_store %arg22[%c0_108, %c0_109], %36 {strides = array<i32>} : memref<8x128xf32, #tpu.memory_space<vmem>>, vector<8x128xf32>,
    %c5_i32 = arith.constant 5 : i32
    %241 = arith.cmpi eq, %arg0, %c5_i32 : i32
    %242 = arith.extui %241 : i1 to i32
    %c0_i32_110 = arith.constant 0 : i32
    %243 = arith.cmpi ne, %242, %c0_i32_110 : i32
    scf.if %243 {
      %c0_111 = arith.constant 0 : index
      %c0_112 = arith.constant 0 : index
      %244 = vector.load %arg19[%c0_111, %c0_112] : memref<8x128xf32, #tpu.memory_space<vmem>>, vector<8x128xf32>
      tpu.vector_store %arg19[%c0_111, %c0_112], %38 {strides = array<i32>} : memref<8x128xf32, #tpu.memory_space<vmem>>, vector<8x128xf32>,
      %c0_113 = arith.constant 0 : index
      %c0_114 = arith.constant 0 : index
      %245 = vector.load %arg20[%c0_113, %c0_114] : memref<8x128xf32, #tpu.memory_space<vmem>>, vector<8x128xf32>
      tpu.vector_store %arg20[%c0_113, %c0_114], %36 {strides = array<i32>} : memref<8x128xf32, #tpu.memory_space<vmem>>, vector<8x128xf32>,
    } else {
    }
    return
  }
  func.func @transform_0(%arg0: i32) -> (i32, i32, i32) {
    %c0_i32 = arith.constant 0 : i32
    %c0_i32_0 = arith.constant 0 : i32
    %c0_i32_1 = arith.constant 0 : i32
    return %arg0, %c0_i32, %c0_i32_0 : i32, i32, i32
  }
  func.func @transform_1(%arg0: i32) -> (i32, i32) {
    %c0_i32 = arith.constant 0 : i32
    %c0_i32_0 = arith.constant 0 : i32
    %c0_i32_1 = arith.constant 0 : i32
    return %c0_i32, %c0_i32_0 : i32, i32
  }
  func.func @transform_2(%arg0: i32) -> (i32, i32) {
    %c0_i32 = arith.constant 0 : i32
    %c0_i32_0 = arith.constant 0 : i32
    %c0_i32_1 = arith.constant 0 : i32
    return %c0_i32, %c0_i32_0 : i32, i32
  }
  func.func @transform_3(%arg0: i32) -> (i32, i32) {
    %c0_i32 = arith.constant 0 : i32
    %c0_i32_0 = arith.constant 0 : i32
    %c0_i32_1 = arith.constant 0 : i32
    return %c0_i32, %c0_i32_0 : i32, i32
  }
  func.func @transform_4(%arg0: i32) -> (i32, i32) {
    %c0_i32 = arith.constant 0 : i32
    %c0_i32_0 = arith.constant 0 : i32
    %c0_i32_1 = arith.constant 0 : i32
    return %c0_i32, %c0_i32_0 : i32, i32
  }
  func.func @transform_5(%arg0: i32) -> (i32, i32) {
    %c0_i32 = arith.constant 0 : i32
    %c0_i32_0 = arith.constant 0 : i32
    %c0_i32_1 = arith.constant 0 : i32
    return %c0_i32, %c0_i32_0 : i32, i32
  }
  func.func @transform_6(%arg0: i32) -> (i32, i32) {
    %c0_i32 = arith.constant 0 : i32
    %c0_i32_0 = arith.constant 0 : i32
    %c0_i32_1 = arith.constant 0 : i32
    return %c0_i32, %c0_i32_0 : i32, i32
  }
  func.func @transform_7(%arg0: i32) -> (i32, i32) {
    %c0_i32 = arith.constant 0 : i32
    %c0_i32_0 = arith.constant 0 : i32
    %c0_i32_1 = arith.constant 0 : i32
    return %c0_i32, %c0_i32_0 : i32, i32
  }
  func.func @transform_8(%arg0: i32) -> (i32, i32) {
    %c0_i32 = arith.constant 0 : i32
    %c0_i32_0 = arith.constant 0 : i32
    %c0_i32_1 = arith.constant 0 : i32
    return %c0_i32, %c0_i32_0 : i32, i32
  }
  func.func @transform_9(%arg0: i32) -> (i32, i32) {
    %c0_i32 = arith.constant 0 : i32
    %c0_i32_0 = arith.constant 0 : i32
    %c0_i32_1 = arith.constant 0 : i32
    return %c0_i32, %c0_i32_0 : i32, i32
  }
  func.func @transform_10(%arg0: i32) -> (i32, i32) {
    %c0_i32 = arith.constant 0 : i32
    %c0_i32_0 = arith.constant 0 : i32
    %c0_i32_1 = arith.constant 0 : i32
    return %c0_i32, %c0_i32_0 : i32, i32
  }
  func.func @transform_11(%arg0: i32) -> (i32, i32) {
    %c0_i32 = arith.constant 0 : i32
    %c0_i32_0 = arith.constant 0 : i32
    %c0_i32_1 = arith.constant 0 : i32
    return %c0_i32, %c0_i32_0 : i32, i32
  }
  func.func @transform_12(%arg0: i32) -> (i32, i32) {
    %c0_i32 = arith.constant 0 : i32
    %c0_i32_0 = arith.constant 0 : i32
    %c0_i32_1 = arith.constant 0 : i32
    return %c0_i32, %c0_i32_0 : i32, i32
  }
  func.func @transform_13(%arg0: i32) -> (i32, i32) {
    %c0_i32 = arith.constant 0 : i32
    %c0_i32_0 = arith.constant 0 : i32
    %c0_i32_1 = arith.constant 0 : i32
    return %c0_i32, %c0_i32_0 : i32, i32
  }
  func.func @transform_14(%arg0: i32) -> (i32, i32) {
    %c0_i32 = arith.constant 0 : i32
    %c0_i32_0 = arith.constant 0 : i32
    %c0_i32_1 = arith.constant 0 : i32
    return %c0_i32, %c0_i32_0 : i32, i32
  }
  func.func @transform_15(%arg0: i32) -> (i32, i32) {
    %c0_i32 = arith.constant 0 : i32
    %c0_i32_0 = arith.constant 0 : i32
    %c0_i32_1 = arith.constant 0 : i32
    return %c0_i32, %c0_i32_0 : i32, i32
  }
  func.func @transform_16(%arg0: i32) -> (i32, i32) {
    %c0_i32 = arith.constant 0 : i32
    %c0_i32_0 = arith.constant 0 : i32
    %c0_i32_1 = arith.constant 0 : i32
    return %c0_i32, %c0_i32_0 : i32, i32
  }
  func.func @transform_17(%arg0: i32) -> (i32, i32, i32) {
    %c0_i32 = arith.constant 0 : i32
    %c0_i32_0 = arith.constant 0 : i32
    %c0_i32_1 = arith.constant 0 : i32
    return %arg0, %c0_i32, %c0_i32_0 : i32, i32, i32
  }
  func.func @transform_18(%arg0: i32) -> (i32, i32) {
    %c0_i32 = arith.constant 0 : i32
    %c0_i32_0 = arith.constant 0 : i32
    %c0_i32_1 = arith.constant 0 : i32
    return %c0_i32, %c0_i32_0 : i32, i32
  }
  func.func @transform_19(%arg0: i32) -> (i32, i32) {
    %c0_i32 = arith.constant 0 : i32
    %c0_i32_0 = arith.constant 0 : i32
    %c0_i32_1 = arith.constant 0 : i32
    return %c0_i32, %c0_i32_0 : i32, i32
  }
}

</mosaic_0001>

<llo_original>
// kernel: tpu_custom_call.1
$region0: #{tpu_custom_call.1}
  #allocation0 [shape = 'u32[]', space=smem, size = 0x4, offset = 0x4, fixed_abs, tag = 'smem constant byte address 0x4 - core index']
  #allocation1 [shape = 'u32[144,128]{1,0:T(1,128)}', space=vmem, size = 0x12000, scoped, tag = 'internal scratch']
  #allocation2 [shape = 'f32[8,128]{1,0:T(8,128)}', space=vmem, size = 0x1000, scoped, tag = 'scratch operand']
  #allocation3 [shape = 'f32[8,128]{1,0:T(8,128)}', space=vmem, size = 0x1000, scoped, tag = 'scratch operand']
  #allocation4 [shape = 'bf16[8,128]{1,0:T(8,128)(2,1)}', space=vmem, size = 0x800, scoped, tag = 'scratch operand']
  #allocation5 [shape = 'f32[128,128]{1,0:T(8,128)}', space=vmem, size = 0x10000, scoped, tag = 'scratch operand']
  #allocation6 [shape = 'f32[8,128]{1,0:T(8,128)}', space=vmem, size = 0x1000, scoped, tag = 'scratch operand']
  #allocation7 [shape = 'f32[8,128]{1,0:T(8,128)}', space=vmem, size = 0x1000, scoped, tag = 'scratch operand']
  %s0 = inlined_call_operand.hbm [shape: bf16[6,8,128], index: 0, kind: input, shape index: {}]
  %s1 = inlined_call_operand.hbm [shape: f32[8,128], index: 1, kind: input, shape index: {}]
  %s2 = inlined_call_operand.hbm [shape: f32[8,128], index: 2, kind: input, shape index: {}]
  %s3 = inlined_call_operand.vmem [shape: f32[8,128], index: 3, kind: input, shape index: {}]
  %s4 = inlined_call_operand.hbm [shape: f32[128,128], index: 4, kind: input, shape index: {}]
  %s5 = inlined_call_operand.hbm [shape: bf16[512,128], index: 5, kind: input, shape index: {}]
  %s6 = inlined_call_operand.hbm [shape: bf16[256,512], index: 6, kind: input, shape index: {}]
  %s7 = inlined_call_operand.vmem [shape: f32[1,512], index: 7, kind: input, shape index: {}]
  %s8 = inlined_call_operand.hbm [shape: bf16[128,128], index: 8, kind: input, shape index: {}]
  %s9 = inlined_call_operand.hbm [shape: bf16[128,128], index: 9, kind: input, shape index: {}]
  %s10 = inlined_call_operand.hbm [shape: bf16[128,128], index: 10, kind: input, shape index: {}]
  %s11 = inlined_call_operand.vmem [shape: f32[1,128], index: 11, kind: input, shape index: {}]
  %s12 = inlined_call_operand.hbm [shape: bf16[128,128], index: 12, kind: input, shape index: {}]
  %s13 = inlined_call_operand.vmem [shape: f32[1,128], index: 13, kind: input, shape index: {}]
  %s14 = inlined_call_operand.vmem [shape: f32[1,128], index: 14, kind: input, shape index: {}]
  %s15 = inlined_call_operand.hbm [shape: bf16[128,512], index: 15, kind: input, shape index: {}]
  %s16 = inlined_call_operand.vmem [shape: f32[1,512], index: 16, kind: input, shape index: {}]
  %s17 = inlined_call_operand.hbm [shape: f32[6,8,512], index: 17, kind: output, shape index: {0}]
  %s18 = inlined_call_operand.hbm [shape: f32[8,128], index: 18, kind: output, shape index: {1}]
  %s19 = inlined_call_operand.hbm [shape: f32[8,128], index: 19, kind: output, shape index: {2}]
  %20 = xla_tuple %s17, %s18, %s19
  %s21 = sld [smem:[#allocation0]]
  $region169: #{tpu_custom_call.1} parent=0
    _
  %s23 = ssub.s32 1, %s21
  %s24 = scalar_select 0, %s23, %s21
  $region1: #{tpu_custom_call.1} parent=0
    #allocation8 [shape = 'u8[4096]{0}', space=vmem, size = 0x1000, scoped, tag = 'input window, operand 0']
    #allocation9 [shape = 's32[2]{0}', space=sflag, size = 0x8, scoped, tag = 'scoped memory for tpu_custom_call.1']
    #allocation10 [shape = 's32[2]{0}', space=sflag, size = 0x8, scoped, tag = 'scoped memory for tpu_custom_call.1']
    #allocation11 [shape = 'u8[4096]{0}', space=vmem, size = 0x1000, scoped, tag = 'input window, operand 1, single buffered']
    #allocation12 [shape = 's32[1]{0}', space=sflag, size = 0x4, scoped, tag = 'scoped memory for tpu_custom_call.1']
    #allocation13 [shape = 'u8[4096]{0}', space=vmem, size = 0x1000, scoped, tag = 'input window, operand 2, single buffered']
    #allocation14 [shape = 'u8[65536]{0}', space=vmem, size = 0x10000, scoped, tag = 'input window, operand 4, single buffered']
    #allocation15 [shape = 's32[1]{0}', space=sflag, size = 0x4, scoped, tag = 'scoped memory for tpu_custom_call.1']
    #allocation16 [shape = 'u8[131072]{0}', space=vmem, size = 0x20000, scoped, tag = 'input window, operand 5, single buffered']
    #allocation17 [shape = 'u8[262144]{0}', space=vmem, size = 0x40000, scoped, tag = 'input window, operand 6, single buffered']
    #allocation18 [shape = 's32[1]{0}', space=sflag, size = 0x4, scoped, tag = 'scoped memory for tpu_custom_call.1']
    #allocation19 [shape = 'u8[32768]{0}', space=vmem, size = 0x8000, scoped, tag = 'input window, operand 8, single buffered']
    #allocation20 [shape = 'u8[32768]{0}', space=vmem, size = 0x8000, scoped, tag = 'input window, operand 9, single buffered']
    #allocation21 [shape = 's32[1]{0}', space=sflag, size = 0x4, scoped, tag = 'scoped memory for tpu_custom_call.1']
    #allocation22 [shape = 'u8[32768]{0}', space=vmem, size = 0x8000, scoped, tag = 'input window, operand 10, single buffered']
    #allocation23 [shape = 'u8[32768]{0}', space=vmem, size = 0x8000, scoped, tag = 'input window, operand 12, single buffered']
    #allocation24 [shape = 's32[1]{0}', space=sflag, size = 0x4, scoped, tag = 'scoped memory for tpu_custom_call.1']
    #allocation25 [shape = 'u8[131072]{0}', space=vmem, size = 0x20000, scoped, tag = 'input window, operand 15, single buffered']
    #allocation26 [shape = 'u8[32768]{0}', space=vmem, size = 0x8000, scoped, tag = 'output window, operand 0']
    #allocation27 [shape = 'u8[4096]{0}', space=vmem, size = 0x1000, scoped, tag = 'output window, operand 1, single buffered']
    #allocation28 [shape = 's32[1]{0}', space=sflag, size = 0x4, scoped, tag = 'scoped memory for tpu_custom_call.1']
    #allocation29 [shape = 'u8[4096]{0}', space=vmem, size = 0x1000, scoped, tag = 'output window, operand 2, single buffered']
    %25 = vsyncpa [#allocation9], 0
    %s26 = scalar_lea.sflag [#allocation9], 1
    %27 = vsyncpa %s26, 0
    %28 = vsyncpa [#allocation12], 0
    %29 = vsyncpa [#allocation15], 0
    %30 = vsyncpa [#allocation18], 0
    %31 = vsyncpa [#allocation21], 0
    %32 = vsyncpa [#allocation24], 0
    %33 = vsyncpa [#allocation10], 0
    %s34 = scalar_lea.sflag [#allocation10], 1
    %35 = vsyncpa %s34, 0
    %36 = vsyncpa [#allocation28], 0
    loop: start=0, step=1, limit=8
    $region2: #{tpu_custom_call.1} parent=1 // loop_pre_header
      _
    $region3: #{tpu_custom_call.1} parent=1 // loop_header
      %s38 = sphi 0, %s42
      %p39 = scmp.ge.s32.totalorder %s38, 8
      %s48 = sphi 0, %s50
      %s51 = sphi 0, %s48
      %s52 = sphi 0, %s51
      %s68 = sphi 0, %s52
      %s72 = sphi 0, %s72
      %s74 = sphi 0, %s72
      %s75 = sphi 0, %s74
      %s89 = sphi 0, %s75
      %s93 = sphi 0, %s93
      %s95 = sphi 0, %s93
      %s96 = sphi 0, %s95
      %s110 = sphi 0, %s96
      %s114 = sphi 0, %s114
      %s116 = sphi 0, %s114
      %s117 = sphi 0, %s116
      %s131 = sphi 0, %s117
      %s135 = sphi 0, %s135
      %s137 = sphi 0, %s135
      %s138 = sphi 0, %s137
      %s152 = sphi 0, %s138
      %s156 = sphi 0, %s156
      %s158 = sphi 0, %s156
      %s159 = sphi 0, %s158
      %s173 = sphi 0, %s159
      %s177 = sphi 0, %s177
      %s179 = sphi 0, %s177
      %s180 = sphi 0, %s179
      %s194 = sphi 0, %s180
      %s198 = sphi 0, %s198
      %s200 = sphi 0, %s198
      %s201 = sphi 0, %s200
      %s215 = sphi 0, %s201
      %s219 = sphi 0, %s219
      %s221 = sphi 0, %s219
      %s222 = sphi 0, %s221
      %s236 = sphi 0, %s222
      %s240 = sphi 0, %s240
      %s242 = sphi 0, %s240
      %s243 = sphi 0, %s242
      %s257 = sphi 0, %s243
      %s261 = sphi 0, %s261
      %s263 = sphi 0, %s261
      %s264 = sphi 0, %s263
      %s278 = sphi 0, %s264
      %s282 = sphi 0, %s282
      %s284 = sphi 0, %s282
      %s285 = sphi 0, %s284
      %s299 = sphi 0, %s285
      %s303 = sphi 0, %s303
      %s305 = sphi 0, %s303
      %s306 = sphi 0, %s305
      %s320 = sphi 0, %s306
      %s324 = sphi 0, %s324
      %s326 = sphi 0, %s324
      %s327 = sphi 0, %s326
      %s341 = sphi 0, %s327
      %s345 = sphi 0, %s345
      %s347 = sphi 0, %s345
      %s348 = sphi 0, %s347
      %s362 = sphi 0, %s348
      %s366 = sphi 0, %s366
      %s368 = sphi 0, %s366
      %s369 = sphi 0, %s368
      %s383 = sphi 0, %s369
      %s387 = sphi 0, %s387
      %s389 = sphi 0, %s387
      %s390 = sphi 0, %s389
      %s404 = sphi 0, %s390
      %s410 = sphi 0, %s412
      %s413 = sphi 0, %s410
      %s414 = sphi 0, %s413
      %s430 = sphi 0, %s414
      %s434 = sphi 0, %s434
      %s436 = sphi 0, %s434
      %s437 = sphi 0, %s436
      %s451 = sphi 0, %s437
      %s455 = sphi 0, %s455
      %s457 = sphi 0, %s455
      %s458 = sphi 0, %s457
      %s472 = sphi 0, %s458
    $region4: #{tpu_custom_call.1} parent=1 // loop_header_branch
      %41 = sbr.rel (%p39) target = $region8
    $region5: #{tpu_custom_call.1} parent=1 // loop_body
      %s43 = ssub.s32 %s38, 1
      %s44 = ssub.s32 %s38, 2
      %s45 = sadd.s32 %s38, 1
      %s46 = ssub.s32 %s38, %s45
      %p47 = scmp.eq.s32.totalorder %s46, 0
      %s49 = sadd.s32 %s48, 1
      %s50 = scalar_select %p47, %s48, %s49
      %p53 = pneg %p47
      %p54 = scmp.eq.s32.totalorder %s38, 5
      %p55 = por %p53, %p54
      %p56 = scmp.ne.s32.totalorder %s48, %s51
      %p57 = scmp.eq.s32.totalorder %s38, 0
      %p58 = por %p56, %p57
      %p59 = scmp.ne.s32.totalorder %s48, %s51
      %p60 = scmp.eq.s32.totalorder %s43, 5
      %p61 = por %p59, %p60
      %p62 = scmp.ne.s32.totalorder %s51, %s52
      %p63 = scmp.eq.s32.totalorder %s43, 0
      %p64 = por %p62, %p63
      %p65 = scmp.ne.s32.totalorder %s51, %s52
      %p66 = scmp.eq.s32.totalorder %s44, 5
      %p67 = por %p65, %p66
      %p69 = scmp.ne.s32.totalorder %s52, %s68
      %p70 = scmp.eq.s32.totalorder %s44, 0
      %p71 = por %p69, %p70
      %s73 = sadd.s32 %s72, 1
      %p76 = scmp.eq.s32.totalorder %s38, 5
      %p77 = scmp.ne.s32.totalorder %s72, %s74
      %p78 = scmp.eq.s32.totalorder %s38, 0
      %p79 = por %p77, %p78
      %p80 = scmp.ne.s32.totalorder %s72, %s74
      %p81 = scmp.eq.s32.totalorder %s43, 5
      %p82 = por %p80, %p81
      %p83 = scmp.ne.s32.totalorder %s74, %s75
      %p84 = scmp.eq.s32.totalorder %s43, 0
      %p85 = por %p83, %p84
      %p86 = scmp.ne.s32.totalorder %s74, %s75
      %p87 = scmp.eq.s32.totalorder %s44, 5
      %p88 = por %p86, %p87
      %p90 = scmp.ne.s32.totalorder %s75, %s89
      %p91 = scmp.eq.s32.totalorder %s44, 0
      %p92 = por %p90, %p91
      %s94 = sadd.s32 %s93, 1
      %p97 = scmp.eq.s32.totalorder %s38, 5
      %p98 = scmp.ne.s32.totalorder %s93, %s95
      %p99 = scmp.eq.s32.totalorder %s38, 0
      %p100 = por %p98, %p99
      %p101 = scmp.ne.s32.totalorder %s93, %s95
      %p102 = scmp.eq.s32.totalorder %s43, 5
      %p103 = por %p101, %p102
      %p104 = scmp.ne.s32.totalorder %s95, %s96
      %p105 = scmp.eq.s32.totalorder %s43, 0
      %p106 = por %p104, %p105
      %p107 = scmp.ne.s32.totalorder %s95, %s96
      %p108 = scmp.eq.s32.totalorder %s44, 5
      %p109 = por %p107, %p108
      %p111 = scmp.ne.s32.totalorder %s96, %s110
      %p112 = scmp.eq.s32.totalorder %s44, 0
      %p113 = por %p111, %p112
      %s115 = sadd.s32 %s114, 1
      %p118 = scmp.eq.s32.totalorder %s38, 5
      %p119 = scmp.ne.s32.totalorder %s114, %s116
      %p120 = scmp.eq.s32.totalorder %s38, 0
      %p121 = por %p119, %p120
      %p122 = scmp.ne.s32.totalorder %s114, %s116
      %p123 = scmp.eq.s32.totalorder %s43, 5
      %p124 = por %p122, %p123
      %p125 = scmp.ne.s32.totalorder %s116, %s117
      %p126 = scmp.eq.s32.totalorder %s43, 0
      %p127 = por %p125, %p126
      %p128 = scmp.ne.s32.totalorder %s116, %s117
      %p129 = scmp.eq.s32.totalorder %s44, 5
      %p130 = por %p128, %p129
      %p132 = scmp.ne.s32.totalorder %s117, %s131
      %p133 = scmp.eq.s32.totalorder %s44, 0
      %p134 = por %p132, %p133
      %s136 = sadd.s32 %s135, 1
      %p139 = scmp.eq.s32.totalorder %s38, 5
      %p140 = scmp.ne.s32.totalorder %s135, %s137
      %p141 = scmp.eq.s32.totalorder %s38, 0
      %p142 = por %p140, %p141
      %p143 = scmp.ne.s32.totalorder %s135, %s137
      %p144 = scmp.eq.s32.totalorder %s43, 5
      %p145 = por %p143, %p144
      %p146 = scmp.ne.s32.totalorder %s137, %s138
      %p147 = scmp.eq.s32.totalorder %s43, 0
      %p148 = por %p146, %p147
      %p149 = scmp.ne.s32.totalorder %s137, %s138
      %p150 = scmp.eq.s32.totalorder %s44, 5
      %p151 = por %p149, %p150
      %p153 = scmp.ne.s32.totalorder %s138, %s152
      %p154 = scmp.eq.s32.totalorder %s44, 0
      %p155 = por %p153, %p154
      %s157 = sadd.s32 %s156, 1
      %p160 = scmp.eq.s32.totalorder %s38, 5
      %p161 = scmp.ne.s32.totalorder %s156, %s158
      %p162 = scmp.eq.s32.totalorder %s38, 0
      %p163 = por %p161, %p162
      %p164 = scmp.ne.s32.totalorder %s156, %s158
      %p165 = scmp.eq.s32.totalorder %s43, 5
      %p166 = por %p164, %p165
      %p167 = scmp.ne.s32.totalorder %s158, %s159
      %p168 = scmp.eq.s32.totalorder %s43, 0
      %p169 = por %p167, %p168
      %p170 = scmp.ne.s32.totalorder %s158, %s159
      %p171 = scmp.eq.s32.totalorder %s44, 5
      %p172 = por %p170, %p171
      %p174 = scmp.ne.s32.totalorder %s159, %s173
      %p175 = scmp.eq.s32.totalorder %s44, 0
      %p176 = por %p174, %p175
      %s178 = sadd.s32 %s177, 1
      %p181 = scmp.eq.s32.totalorder %s38, 5
      %p182 = scmp.ne.s32.totalorder %s177, %s179
      %p183 = scmp.eq.s32.totalorder %s38, 0
      %p184 = por %p182, %p183
      %p185 = scmp.ne.s32.totalorder %s177, %s179
      %p186 = scmp.eq.s32.totalorder %s43, 5
      %p187 = por %p185, %p186
      %p188 = scmp.ne.s32.totalorder %s179, %s180
      %p189 = scmp.eq.s32.totalorder %s43, 0
      %p190 = por %p188, %p189
      %p191 = scmp.ne.s32.totalorder %s179, %s180
      %p192 = scmp.eq.s32.totalorder %s44, 5
      %p193 = por %p191, %p192
      %p195 = scmp.ne.s32.totalorder %s180, %s194
      %p196 = scmp.eq.s32.totalorder %s44, 0
      %p197 = por %p195, %p196
      %s199 = sadd.s32 %s198, 1
      %p202 = scmp.eq.s32.totalorder %s38, 5
      %p203 = scmp.ne.s32.totalorder %s198, %s200
      %p204 = scmp.eq.s32.totalorder %s38, 0
      %p205 = por %p203, %p204
      %p206 = scmp.ne.s32.totalorder %s198, %s200
      %p207 = scmp.eq.s32.totalorder %s43, 5
      %p208 = por %p206, %p207
      %p209 = scmp.ne.s32.totalorder %s200, %s201
      %p210 = scmp.eq.s32.totalorder %s43, 0
      %p211 = por %p209, %p210
      %p212 = scmp.ne.s32.totalorder %s200, %s201
      %p213 = scmp.eq.s32.totalorder %s44, 5
      %p214 = por %p212, %p213
      %p216 = scmp.ne.s32.totalorder %s201, %s215
      %p217 = scmp.eq.s32.totalorder %s44, 0
      %p218 = por %p216, %p217
      %s220 = sadd.s32 %s219, 1
      %p223 = scmp.eq.s32.totalorder %s38, 5
      %p224 = scmp.ne.s32.totalorder %s219, %s221
      %p225 = scmp.eq.s32.totalorder %s38, 0
      %p226 = por %p224, %p225
      %p227 = scmp.ne.s32.totalorder %s219, %s221
      %p228 = scmp.eq.s32.totalorder %s43, 5
      %p229 = por %p227, %p228
      %p230 = scmp.ne.s32.totalorder %s221, %s222
      %p231 = scmp.eq.s32.totalorder %s43, 0
      %p232 = por %p230, %p231
      %p233 = scmp.ne.s32.totalorder %s221, %s222
      %p234 = scmp.eq.s32.totalorder %s44, 5
      %p235 = por %p233, %p234
      %p237 = scmp.ne.s32.totalorder %s222, %s236
      %p238 = scmp.eq.s32.totalorder %s44, 0
      %p239 = por %p237, %p238
      %s241 = sadd.s32 %s240, 1
      %p244 = scmp.eq.s32.totalorder %s38, 5
      %p245 = scmp.ne.s32.totalorder %s240, %s242
      %p246 = scmp.eq.s32.totalorder %s38, 0
      %p247 = por %p245, %p246
      %p248 = scmp.ne.s32.totalorder %s240, %s242
      %p249 = scmp.eq.s32.totalorder %s43, 5
      %p250 = por %p248, %p249
      %p251 = scmp.ne.s32.totalorder %s242, %s243
      %p252 = scmp.eq.s32.totalorder %s43, 0
      %p253 = por %p251, %p252
      %p254 = scmp.ne.s32.totalorder %s242, %s243
      %p255 = scmp.eq.s32.totalorder %s44, 5
      %p256 = por %p254, %p255
      %p258 = scmp.ne.s32.totalorder %s243, %s257
      %p259 = scmp.eq.s32.totalorder %s44, 0
      %p260 = por %p258, %p259
      %s262 = sadd.s32 %s261, 1
      %p265 = scmp.eq.s32.totalorder %s38, 5
      %p266 = scmp.ne.s32.totalorder %s261, %s263
      %p267 = scmp.eq.s32.totalorder %s38, 0
      %p268 = por %p266, %p267
      %p269 = scmp.ne.s32.totalorder %s261, %s263
      %p270 = scmp.eq.s32.totalorder %s43, 5
      %p271 = por %p269, %p270
      %p272 = scmp.ne.s32.totalorder %s263, %s264
      %p273 = scmp.eq.s32.totalorder %s43, 0
      %p274 = por %p272, %p273
      %p275 = scmp.ne.s32.totalorder %s263, %s264
      %p276 = scmp.eq.s32.totalorder %s44, 5
      %p277 = por %p275, %p276
      %p279 = scmp.ne.s32.totalorder %s264, %s278
      %p280 = scmp.eq.s32.totalorder %s44, 0
      %p281 = por %p279, %p280
      %s283 = sadd.s32 %s282, 1
      %p286 = scmp.eq.s32.totalorder %s38, 5
      %p287 = scmp.ne.s32.totalorder %s282, %s284
      %p288 = scmp.eq.s32.totalorder %s38, 0
      %p289 = por %p287, %p288
      %p290 = scmp.ne.s32.totalorder %s282, %s284
      %p291 = scmp.eq.s32.totalorder %s43, 5
      %p292 = por %p290, %p291
      %p293 = scmp.ne.s32.totalorder %s284, %s285
      %p294 = scmp.eq.s32.totalorder %s43, 0
      %p295 = por %p293, %p294
      %p296 = scmp.ne.s32.totalorder %s284, %s285
      %p297 = scmp.eq.s32.totalorder %s44, 5
      %p298 = por %p296, %p297
      %p300 = scmp.ne.s32.totalorder %s285, %s299
      %p301 = scmp.eq.s32.totalorder %s44, 0
      %p302 = por %p300, %p301
      %s304 = sadd.s32 %s303, 1
      %p307 = scmp.eq.s32.totalorder %s38, 5
      %p308 = scmp.ne.s32.totalorder %s303, %s305
      %p309 = scmp.eq.s32.totalorder %s38, 0
      %p310 = por %p308, %p309
      %p311 = scmp.ne.s32.totalorder %s303, %s305
      %p312 = scmp.eq.s32.totalorder %s43, 5
      %p313 = por %p311, %p312
      %p314 = scmp.ne.s32.totalorder %s305, %s306
      %p315 = scmp.eq.s32.totalorder %s43, 0
      %p316 = por %p314, %p315
      %p317 = scmp.ne.s32.totalorder %s305, %s306
      %p318 = scmp.eq.s32.totalorder %s44, 5
      %p319 = por %p317, %p318
      %p321 = scmp.ne.s32.totalorder %s306, %s320
      %p322 = scmp.eq.s32.totalorder %s44, 0
      %p323 = por %p321, %p322
      %s325 = sadd.s32 %s324, 1
      %p328 = scmp.eq.s32.totalorder %s38, 5
      %p329 = scmp.ne.s32.totalorder %s324, %s326
      %p330 = scmp.eq.s32.totalorder %s38, 0
      %p331 = por %p329, %p330
      %p332 = scmp.ne.s32.totalorder %s324, %s326
      %p333 = scmp.eq.s32.totalorder %s43, 5
      %p334 = por %p332, %p333
      %p335 = scmp.ne.s32.totalorder %s326, %s327
      %p336 = scmp.eq.s32.totalorder %s43, 0
      %p337 = por %p335, %p336
      %p338 = scmp.ne.s32.totalorder %s326, %s327
      %p339 = scmp.eq.s32.totalorder %s44, 5
      %p340 = por %p338, %p339
      %p342 = scmp.ne.s32.totalorder %s327, %s341
      %p343 = scmp.eq.s32.totalorder %s44, 0
      %p344 = por %p342, %p343
      %s346 = sadd.s32 %s345, 1
      %p349 = scmp.eq.s32.totalorder %s38, 5
      %p350 = scmp.ne.s32.totalorder %s345, %s347
      %p351 = scmp.eq.s32.totalorder %s38, 0
      %p352 = por %p350, %p351
      %p353 = scmp.ne.s32.totalorder %s345, %s347
      %p354 = scmp.eq.s32.totalorder %s43, 5
      %p355 = por %p353, %p354
      %p356 = scmp.ne.s32.totalorder %s347, %s348
      %p357 = scmp.eq.s32.totalorder %s43, 0
      %p358 = por %p356, %p357
      %p359 = scmp.ne.s32.totalorder %s347, %s348
      %p360 = scmp.eq.s32.totalorder %s44, 5
      %p361 = por %p359, %p360
      %p363 = scmp.ne.s32.totalorder %s348, %s362
      %p364 = scmp.eq.s32.totalorder %s44, 0
      %p365 = por %p363, %p364
      %s367 = sadd.s32 %s366, 1
      %p370 = scmp.eq.s32.totalorder %s38, 5
      %p371 = scmp.ne.s32.totalorder %s366, %s368
      %p372 = scmp.eq.s32.totalorder %s38, 0
      %p373 = por %p371, %p372
      %p374 = scmp.ne.s32.totalorder %s366, %s368
      %p375 = scmp.eq.s32.totalorder %s43, 5
      %p376 = por %p374, %p375
      %p377 = scmp.ne.s32.totalorder %s368, %s369
      %p378 = scmp.eq.s32.totalorder %s43, 0
      %p379 = por %p377, %p378
      %p380 = scmp.ne.s32.totalorder %s368, %s369
      %p381 = scmp.eq.s32.totalorder %s44, 5
      %p382 = por %p380, %p381
      %p384 = scmp.ne.s32.totalorder %s369, %s383
      %p385 = scmp.eq.s32.totalorder %s44, 0
      %p386 = por %p384, %p385
      %s388 = sadd.s32 %s387, 1
      %p391 = scmp.eq.s32.totalorder %s38, 5
      %p392 = scmp.ne.s32.totalorder %s387, %s389
      %p393 = scmp.eq.s32.totalorder %s38, 0
      %p394 = por %p392, %p393
      %p395 = scmp.ne.s32.totalorder %s387, %s389
      %p396 = scmp.eq.s32.totalorder %s43, 5
      %p397 = por %p395, %p396
      %p398 = scmp.ne.s32.totalorder %s389, %s390
      %p399 = scmp.eq.s32.totalorder %s43, 0
      %p400 = por %p398, %p399
      %p401 = scmp.ne.s32.totalorder %s389, %s390
      %p402 = scmp.eq.s32.totalorder %s44, 5
      %p403 = por %p401, %p402
      %p405 = scmp.ne.s32.totalorder %s390, %s404
      %p406 = scmp.eq.s32.totalorder %s44, 0
      %p407 = por %p405, %p406
      %s408 = ssub.s32 %s38, %s45
      %p409 = scmp.eq.s32.totalorder %s408, 0
      %s411 = sadd.s32 %s410, 1
      %s412 = scalar_select %p409, %s410, %s411
      %p415 = pneg %p409
      %p416 = scmp.eq.s32.totalorder %s38, 5
      %p417 = por %p415, %p416
      %p418 = scmp.ne.s32.totalorder %s410, %s413
      %p419 = scmp.eq.s32.totalorder %s38, 0
      %p420 = por %p418, %p419
      %p421 = scmp.ne.s32.totalorder %s410, %s413
      %p422 = scmp.eq.s32.totalorder %s43, 5
      %p423 = por %p421, %p422
      %p424 = scmp.ne.s32.totalorder %s413, %s414
      %p425 = scmp.eq.s32.totalorder %s43, 0
      %p426 = por %p424, %p425
      %p427 = scmp.ne.s32.totalorder %s413, %s414
      %p428 = scmp.eq.s32.totalorder %s44, 5
      %p429 = por %p427, %p428
      %p431 = scmp.ne.s32.totalorder %s414, %s430
      %p432 = scmp.eq.s32.totalorder %s44, 0
      %p433 = por %p431, %p432
      %s435 = sadd.s32 %s434, 1
      %p438 = scmp.eq.s32.totalorder %s38, 5
      %p439 = scmp.ne.s32.totalorder %s434, %s436
      %p440 = scmp.eq.s32.totalorder %s38, 0
      %p441 = por %p439, %p440
      %p442 = scmp.ne.s32.totalorder %s434, %s436
      %p443 = scmp.eq.s32.totalorder %s43, 5
      %p444 = por %p442, %p443
      %p445 = scmp.ne.s32.totalorder %s436, %s437
      %p446 = scmp.eq.s32.totalorder %s43, 0
      %p447 = por %p445, %p446
      %p448 = scmp.ne.s32.totalorder %s436, %s437
      %p449 = scmp.eq.s32.totalorder %s44, 5
      %p450 = por %p448, %p449
      %p452 = scmp.ne.s32.totalorder %s437, %s451
      %p453 = scmp.eq.s32.totalorder %s44, 0
      %p454 = por %p452, %p453
      %s456 = sadd.s32 %s455, 1
      %p459 = scmp.eq.s32.totalorder %s38, 5
      %p460 = scmp.ne.s32.totalorder %s455, %s457
      %p461 = scmp.eq.s32.totalorder %s38, 0
      %p462 = por %p460, %p461
      %p463 = scmp.ne.s32.totalorder %s455, %s457
      %p464 = scmp.eq.s32.totalorder %s43, 5
      %p465 = por %p463, %p464
      %p466 = scmp.ne.s32.totalorder %s457, %s458
      %p467 = scmp.eq.s32.totalorder %s43, 0
      %p468 = por %p466, %p467
      %p469 = scmp.ne.s32.totalorder %s457, %s458
      %p470 = scmp.eq.s32.totalorder %s44, 5
      %p471 = por %p469, %p470
      %p473 = scmp.ne.s32.totalorder %s458, %s472
      %p474 = scmp.eq.s32.totalorder %s44, 0
      %p475 = por %p473, %p474
      %p476 = scmp.le.s32.totalorder 1, %s38
      %p477 = scmp.lt.s32.totalorder %s38, 7
      %p478 = pnand %p476, %p477
      %p479 = pneg %p478
      // Predicated region
      $region9: #{tpu_custom_call.1} parent=5 // pred_check
        _
      $region10: #{tpu_custom_call.1} parent=5 // pred_check_branch
        %481 = sbr.rel (%p478) target = $region12
      $region11: #{tpu_custom_call.1} parent=5 // pred_region
        %s482 = ssub.s32 %s38, 1
        // Predicated region
        $region13: #{tpu_custom_call.1} parent=11 // pred_check
          %p483 = pneg %p85
        $region14: #{tpu_custom_call.1} parent=11 // pred_check_branch
          %485 = sbr.rel (%p483) target = $region16
        $region15: #{tpu_custom_call.1} parent=11 // pred_region
          %s487 = ssub.s32 128, 128
          %488 = vsyncadd [#allocation12], %s487
          %s490 = sshll.u32 [#allocation11], 4
          %s491 = int_to_ptr.vmem [resolvable:$true] %s490
          %493 = dma.hbm_to_vmem [thread:$0]  %s1, 128, %s491, [#allocation12]
        $region16: #{tpu_custom_call.1} parent=11 // pred_fallthru
          _
        // Predicated region
        $region17: #{tpu_custom_call.1} parent=11 // pred_check
          %p494 = pneg %p106
        $region18: #{tpu_custom_call.1} parent=11 // pred_check_branch
          %496 = sbr.rel (%p494) target = $region20
        $region19: #{tpu_custom_call.1} parent=11 // pred_region
          %s498 = ssub.s32 128, 128
          %499 = vsyncadd [#allocation12], %s498
          %s501 = sshll.u32 [#allocation13], 4
          %s502 = int_to_ptr.vmem [resolvable:$true] %s501
          %504 = dma.hbm_to_vmem [thread:$0]  %s2, 128, %s502, [#allocation12]
        $region20: #{tpu_custom_call.1} parent=11 // pred_fallthru
          _
        // Predicated region
        $region21: #{tpu_custom_call.1} parent=11 // pred_check
          %p505 = pneg %p127
        $region22: #{tpu_custom_call.1} parent=11 // pred_check_branch
          %507 = sbr.rel (%p505) target = $region24
        $region23: #{tpu_custom_call.1} parent=11 // pred_region
          _
        $region24: #{tpu_custom_call.1} parent=11 // pred_fallthru
          _
        // Predicated region
        $region25: #{tpu_custom_call.1} parent=11 // pred_check
          %p508 = pneg %p148
        $region26: #{tpu_custom_call.1} parent=11 // pred_check_branch
          %510 = sbr.rel (%p508) target = $region28
        $region27: #{tpu_custom_call.1} parent=11 // pred_region
          %s512 = ssub.s32 2048, 2048
          %513 = vsyncadd [#allocation15], %s512
          %s514 = sshll.u32 [#allocation14], 4
          %s515 = int_to_ptr.vmem [resolvable:$true] %s514
          %520 = dma.hbm_to_vmem [thread:$0]  %s4, 2048, %s515, [#allocation15], 128, 128, 8
        $region28: #{tpu_custom_call.1} parent=11 // pred_fallthru
          _
        // Predicated region
        $region29: #{tpu_custom_call.1} parent=11 // pred_check
          %p521 = pneg %p169
        $region30: #{tpu_custom_call.1} parent=11 // pred_check_branch
          %523 = sbr.rel (%p521) target = $region32
        $region31: #{tpu_custom_call.1} parent=11 // pred_region
          %s525 = ssub.s32 4096, 4096
          %526 = vsyncadd [#allocation15], %s525
          %s527 = sshll.u32 [#allocation16], 4
          %s528 = int_to_ptr.vmem [resolvable:$true] %s527
          %533 = dma.hbm_to_vmem [thread:$0]  %s5, 4096, %s528, [#allocation15], 64, 64, 4
        $region32: #{tpu_custom_call.1} parent=11 // pred_fallthru
          _
        // Predicated region
        $region33: #{tpu_custom_call.1} parent=11 // pred_check
          %p534 = pneg %p190
        $region34: #{tpu_custom_call.1} parent=11 // pred_check_branch
          %536 = sbr.rel (%p534) target = $region36
        $region35: #{tpu_custom_call.1} parent=11 // pred_region
          %s538 = ssub.s32 8192, 8192
          %539 = vsyncadd [#allocation18], %s538
          %s540 = sshll.u32 [#allocation17], 4
          %s541 = int_to_ptr.vmem [resolvable:$true] %s540
          %546 = dma.hbm_to_vmem [thread:$0]  %s6, 8192, %s541, [#allocation18], 256, 256, 16
        $region36: #{tpu_custom_call.1} parent=11 // pred_fallthru
          _
        // Predicated region
        $region37: #{tpu_custom_call.1} parent=11 // pred_check
          %p547 = pneg %p211
        $region38: #{tpu_custom_call.1} parent=11 // pred_check_branch
          %549 = sbr.rel (%p547) target = $region40
        $region39: #{tpu_custom_call.1} parent=11 // pred_region
          _
        $region40: #{tpu_custom_call.1} parent=11 // pred_fallthru
          _
        // Predicated region
        $region41: #{tpu_custom_call.1} parent=11 // pred_check
          %p550 = pneg %p232
        $region42: #{tpu_custom_call.1} parent=11 // pred_check_branch
          %552 = sbr.rel (%p550) target = $region44
        $region43: #{tpu_custom_call.1} parent=11 // pred_region
          %s554 = ssub.s32 1024, 1024
          %555 = vsyncadd [#allocation18], %s554
          %s556 = sshll.u32 [#allocation19], 4
          %s557 = int_to_ptr.vmem [resolvable:$true] %s556
          %562 = dma.hbm_to_vmem [thread:$0]  %s8, 1024, %s557, [#allocation18], 64, 64, 4
        $region44: #{tpu_custom_call.1} parent=11 // pred_fallthru
          _
        // Predicated region
        $region45: #{tpu_custom_call.1} parent=11 // pred_check
          %p563 = pneg %p253
        $region46: #{tpu_custom_call.1} parent=11 // pred_check_branch
          %565 = sbr.rel (%p563) target = $region48
        $region47: #{tpu_custom_call.1} parent=11 // pred_region
          %s567 = ssub.s32 1024, 1024
          %568 = vsyncadd [#allocation21], %s567
          %s569 = sshll.u32 [#allocation20], 4
          %s570 = int_to_ptr.vmem [resolvable:$true] %s569
          %575 = dma.hbm_to_vmem [thread:$0]  %s9, 1024, %s570, [#allocation21], 64, 64, 4
        $region48: #{tpu_custom_call.1} parent=11 // pred_fallthru
          _
        // Predicated region
        $region49: #{tpu_custom_call.1} parent=11 // pred_check
          %p576 = pneg %p274
        $region50: #{tpu_custom_call.1} parent=11 // pred_check_branch
          %578 = sbr.rel (%p576) target = $region52
        $region51: #{tpu_custom_call.1} parent=11 // pred_region
          %s580 = ssub.s32 1024, 1024
          %581 = vsyncadd [#allocation21], %s580
          %s582 = sshll.u32 [#allocation22], 4
          %s583 = int_to_ptr.vmem [resolvable:$true] %s582
          %588 = dma.hbm_to_vmem [thread:$0]  %s10, 1024, %s583, [#allocation21], 64, 64, 4
        $region52: #{tpu_custom_call.1} parent=11 // pred_fallthru
          _
        // Predicated region
        $region53: #{tpu_custom_call.1} parent=11 // pred_check
          %p589 = pneg %p295
        $region54: #{tpu_custom_call.1} parent=11 // pred_check_branch
          %591 = sbr.rel (%p589) target = $region56
        $region55: #{tpu_custom_call.1} parent=11 // pred_region
          _
        $region56: #{tpu_custom_call.1} parent=11 // pred_fallthru
          _
        // Predicated region
        $region57: #{tpu_custom_call.1} parent=11 // pred_check
          %p592 = pneg %p316
        $region58: #{tpu_custom_call.1} parent=11 // pred_check_branch
          %594 = sbr.rel (%p592) target = $region60
        $region59: #{tpu_custom_call.1} parent=11 // pred_region
          %s596 = ssub.s32 1024, 1024
          %597 = vsyncadd [#allocation24], %s596
          %s598 = sshll.u32 [#allocation23], 4
          %s599 = int_to_ptr.vmem [resolvable:$true] %s598
          %604 = dma.hbm_to_vmem [thread:$0]  %s12, 1024, %s599, [#allocation24], 64, 64, 4
        $region60: #{tpu_custom_call.1} parent=11 // pred_fallthru
          _
        // Predicated region
        $region61: #{tpu_custom_call.1} parent=11 // pred_check
          %p605 = pneg %p337
        $region62: #{tpu_custom_call.1} parent=11 // pred_check_branch
          %607 = sbr.rel (%p605) target = $region64
        $region63: #{tpu_custom_call.1} parent=11 // pred_region
          _
        $region64: #{tpu_custom_call.1} parent=11 // pred_fallthru
          _
        // Predicated region
        $region65: #{tpu_custom_call.1} parent=11 // pred_check
          %p608 = pneg %p358
        $region66: #{tpu_custom_call.1} parent=11 // pred_check_branch
          %610 = sbr.rel (%p608) target = $region68
        $region67: #{tpu_custom_call.1} parent=11 // pred_region
          _
        $region68: #{tpu_custom_call.1} parent=11 // pred_fallthru
          _
        // Predicated region
        $region69: #{tpu_custom_call.1} parent=11 // pred_check
          %p611 = pneg %p379
        $region70: #{tpu_custom_call.1} parent=11 // pred_check_branch
          %613 = sbr.rel (%p611) target = $region72
        $region71: #{tpu_custom_call.1} parent=11 // pred_region
          %s615 = ssub.s32 4096, 4096
          %616 = vsyncadd [#allocation24], %s615
          %s617 = sshll.u32 [#allocation25], 4
          %s618 = int_to_ptr.vmem [resolvable:$true] %s617
          %623 = dma.hbm_to_vmem [thread:$0]  %s15, 4096, %s618, [#allocation24], 256, 256, 16
        $region72: #{tpu_custom_call.1} parent=11 // pred_fallthru
          _
        // Predicated region
        $region73: #{tpu_custom_call.1} parent=11 // pred_check
          %p624 = pneg %p400
        $region74: #{tpu_custom_call.1} parent=11 // pred_check_branch
          %626 = sbr.rel (%p624) target = $region76
        $region75: #{tpu_custom_call.1} parent=11 // pred_region
          _
        $region76: #{tpu_custom_call.1} parent=11 // pred_fallthru
          _
      $region12: #{tpu_custom_call.1} parent=5 // pred_fallthru
        _
      %p627 = scmp.lt.s32.totalorder %s38, 6
      // Predicated region
      $region77: #{tpu_custom_call.1} parent=5 // pred_check
        %p628 = pneg %p627
      $region78: #{tpu_custom_call.1} parent=5 // pred_check_branch
        %630 = sbr.rel (%p628) target = $region80
      $region79: #{tpu_custom_call.1} parent=5 // pred_region
        // Predicated region
        $region81: #{tpu_custom_call.1} parent=79 // pred_check
          %p631 = pneg %p58
        $region82: #{tpu_custom_call.1} parent=79 // pred_check_branch
          %633 = sbr.rel (%p631) target = $region84
        $region83: #{tpu_custom_call.1} parent=79 // pred_region
          %s634 = sand.u32 %s48, 1
          %s635 = scalar_lea.sflag [#allocation9], %s634
          %s636 = sand.u32 %s48, 1
          %s637 = smul.addr %s636, 4
          %s638 = scalar_lea.vmem [#allocation8], %s637
          %s640 = ssub.s32 64, 64
          %641 = vsyncadd %s635, %s640
          %s642 = smul.addr %s38, 64
          %s643 = scalar_lea.hbm %s0, %s642
          %s645 = sshll.u32 %s638, 4
          %s646 = int_to_ptr.vmem [resolvable:$true] %s645
          %648 = dma.hbm_to_vmem [thread:$0]  %s643, 64, %s646, %s635
        $region84: #{tpu_custom_call.1} parent=79 // pred_fallthru
          _
      $region80: #{tpu_custom_call.1} parent=5 // pred_fallthru
        _
      %p649 = scmp.le.s32.totalorder 1, %s38
      %p650 = scmp.lt.s32.totalorder %s38, 7
      %p651 = pnand %p649, %p650
      %p652 = pneg %p651
      // Predicated region
      $region85: #{tpu_custom_call.1} parent=5 // pred_check
        _
      $region86: #{tpu_custom_call.1} parent=5 // pred_check_branch
        %654 = sbr.rel (%p651) target = $region88
      $region87: #{tpu_custom_call.1} parent=5 // pred_region
        %s655 = ssub.s32 %s38, 1
        %s656 = sand.u32 %s51, 1
        %s657 = scalar_lea.sflag [#allocation9], %s656
        %s658 = sand.u32 %s51, 1
        %s659 = smul.addr %s658, 4
        %s660 = scalar_lea.vmem [#allocation8], %s659
        // Predicated region
        $region89: #{tpu_custom_call.1} parent=87 // pred_check
          %p661 = pneg %p64
        $region90: #{tpu_custom_call.1} parent=87 // pred_check_branch
          %663 = sbr.rel (%p661) target = $region92
        $region91: #{tpu_custom_call.1} parent=87 // pred_region
          %664 = dma.done %s657, 64
        $region92: #{tpu_custom_call.1} parent=87 // pred_fallthru
          _
        // Predicated region
        $region93: #{tpu_custom_call.1} parent=87 // pred_check
          %p665 = pneg %p85
        $region94: #{tpu_custom_call.1} parent=87 // pred_check_branch
          %667 = sbr.rel (%p665) target = $region96
        $region95: #{tpu_custom_call.1} parent=87 // pred_region
          %668 = dma.done [#allocation12], 128
        $region96: #{tpu_custom_call.1} parent=87 // pred_fallthru
          _
        // Predicated region
        $region97: #{tpu_custom_call.1} parent=87 // pred_check
          %p669 = pneg %p106
        $region98: #{tpu_custom_call.1} parent=87 // pred_check_branch
          %671 = sbr.rel (%p669) target = $region100
        $region99: #{tpu_custom_call.1} parent=87 // pred_region
          %672 = dma.done [#allocation12], 128
        $region100: #{tpu_custom_call.1} parent=87 // pred_fallthru
          _
        // Predicated region
        $region101: #{tpu_custom_call.1} parent=87 // pred_check
          %p673 = pneg %p148
        $region102: #{tpu_custom_call.1} parent=87 // pred_check_branch
          %675 = sbr.rel (%p673) target = $region104
        $region103: #{tpu_custom_call.1} parent=87 // pred_region
          %676 = dma.done [#allocation15], 2048
        $region104: #{tpu_custom_call.1} parent=87 // pred_fallthru
          _
        // Predicated region
        $region105: #{tpu_custom_call.1} parent=87 // pred_check
          %p677 = pneg %p169
        $region106: #{tpu_custom_call.1} parent=87 // pred_check_branch
          %679 = sbr.rel (%p677) target = $region108
        $region107: #{tpu_custom_call.1} parent=87 // pred_region
          %680 = dma.done [#allocation15], 4096
        $region108: #{tpu_custom_call.1} parent=87 // pred_fallthru
          _
        // Predicated region
        $region109: #{tpu_custom_call.1} parent=87 // pred_check
          %p681 = pneg %p190
        $region110: #{tpu_custom_call.1} parent=87 // pred_check_branch
          %683 = sbr.rel (%p681) target = $region112
        $region111: #{tpu_custom_call.1} parent=87 // pred_region
          %684 = dma.done [#allocation18], 8192
        $region112: #{tpu_custom_call.1} parent=87 // pred_fallthru
          _
        // Predicated region
        $region113: #{tpu_custom_call.1} parent=87 // pred_check
          %p685 = pneg %p232
        $region114: #{tpu_custom_call.1} parent=87 // pred_check_branch
          %687 = sbr.rel (%p685) target = $region116
        $region115: #{tpu_custom_call.1} parent=87 // pred_region
          %688 = dma.done [#allocation18], 1024
        $region116: #{tpu_custom_call.1} parent=87 // pred_fallthru
          _
        // Predicated region
        $region117: #{tpu_custom_call.1} parent=87 // pred_check
          %p689 = pneg %p253
        $region118: #{tpu_custom_call.1} parent=87 // pred_check_branch
          %691 = sbr.rel (%p689) target = $region120
        $region119: #{tpu_custom_call.1} parent=87 // pred_region
          %692 = dma.done [#allocation21], 1024
        $region120: #{tpu_custom_call.1} parent=87 // pred_fallthru
          _
        // Predicated region
        $region121: #{tpu_custom_call.1} parent=87 // pred_check
          %p693 = pneg %p274
        $region122: #{tpu_custom_call.1} parent=87 // pred_check_branch
          %695 = sbr.rel (%p693) target = $region124
        $region123: #{tpu_custom_call.1} parent=87 // pred_region
          %696 = dma.done [#allocation21], 1024
        $region124: #{tpu_custom_call.1} parent=87 // pred_fallthru
          _
        // Predicated region
        $region125: #{tpu_custom_call.1} parent=87 // pred_check
          %p697 = pneg %p316
        $region126: #{tpu_custom_call.1} parent=87 // pred_check_branch
          %699 = sbr.rel (%p697) target = $region128
        $region127: #{tpu_custom_call.1} parent=87 // pred_region
          %700 = dma.done [#allocation24], 1024
        $region128: #{tpu_custom_call.1} parent=87 // pred_fallthru
          _
        // Predicated region
        $region129: #{tpu_custom_call.1} parent=87 // pred_check
          %p701 = pneg %p379
        $region130: #{tpu_custom_call.1} parent=87 // pred_check_branch
          %703 = sbr.rel (%p701) target = $region132
        $region131: #{tpu_custom_call.1} parent=87 // pred_region
          %704 = dma.done [#allocation24], 4096
        $region132: #{tpu_custom_call.1} parent=87 // pred_fallthru
          _
        %s705 = sand.u32 %s51, 1
        %s706 = scalar_lea.sflag [#allocation9], %s705
        %s707 = sand.u32 %s51, 1
        %s708 = smul.addr %s707, 4
        %s709 = scalar_lea.vmem [#allocation8], %s708
        %p710 = pneg %p64
        %p711 = pneg %p61
        %p712 = pneg %p85
        %p713 = pneg %p82
        %p714 = pneg %p106
        %p715 = pneg %p103
        %p716 = pneg %p127
        %p717 = pneg %p124
        %p718 = pneg %p148
        %p719 = pneg %p145
        %p720 = pneg %p169
        %p721 = pneg %p166
        %p722 = pneg %p190
        %p723 = pneg %p187
        %p724 = pneg %p211
        %p725 = pneg %p208
        %p726 = pneg %p232
        %p727 = pneg %p229
        %p728 = pneg %p253
        %p729 = pneg %p250
        %p730 = pneg %p274
        %p731 = pneg %p271
        %p732 = pneg %p295
        %p733 = pneg %p292
        %p734 = pneg %p316
        %p735 = pneg %p313
        %p736 = pneg %p337
        %p737 = pneg %p334
        %p738 = pneg %p358
        %p739 = pneg %p355
        %p740 = pneg %p379
        %p741 = pneg %p376
        %p742 = pneg %p400
        %p743 = pneg %p397
        %p744 = pneg %p426
        %p745 = pneg %p423
        %s746 = sand.u32 %s413, 1
        %s747 = scalar_lea.sflag [#allocation10], %s746
        %s748 = sand.u32 %s413, 1
        %s749 = smul.addr %s748, 32
        %s750 = scalar_lea.vmem [#allocation26], %s749
        %p751 = pneg %p447
        %p752 = pneg %p444
        %p753 = pneg %p468
        %p754 = pneg %p465
        %p756 = scmp.eq.s32.totalorder %s43, 0
        // Predicated region
        $region133: #{tpu_custom_call.1} parent=87 // pred_check
          %p757 = pneg %p756
        $region134: #{tpu_custom_call.1} parent=87 // pred_check_branch
          %759 = sbr.rel (%p757) target = $region136
        $region135: #{tpu_custom_call.1} parent=87 // pred_region
          %v760 = vld [vmem:[#allocation11] sm:$0xff]
          %761 = vst [vmem:[#allocation2] sm:$0xff] %v760
          %v762 = vld [vmem:[#allocation13] sm:$0xff]
          %763 = vst [vmem:[#allocation3] sm:$0xff] %v762
          %v764 = vld [vmem:[#allocation14] sm:$0xff]
          %v765 = vld [vmem:[#allocation14 + $0x8] sm:$0xff]
          %v766 = vld [vmem:[#allocation14 + $0x10] sm:$0xff]
          %v767 = vld [vmem:[#allocation14 + $0x18] sm:$0xff]
          %v768 = vld [vmem:[#allocation14 + $0x20] sm:$0xff]
          %v769 = vld [vmem:[#allocation14 + $0x28] sm:$0xff]
          %v770 = vld [vmem:[#allocation14 + $0x30] sm:$0xff]
          %v771 = vld [vmem:[#allocation14 + $0x38] sm:$0xff]
          %v772 = vld [vmem:[#allocation14 + $0x40] sm:$0xff]
          %v773 = vld [vmem:[#allocation14 + $0x48] sm:$0xff]
          %v774 = vld [vmem:[#allocation14 + $0x50] sm:$0xff]
          %v775 = vld [vmem:[#allocation14 + $0x58] sm:$0xff]
          %v776 = vld [vmem:[#allocation14 + $0x60] sm:$0xff]
          %v777 = vld [vmem:[#allocation14 + $0x68] sm:$0xff]
          %v778 = vld [vmem:[#allocation14 + $0x70] sm:$0xff]
          %v779 = vld [vmem:[#allocation14 + $0x78] sm:$0xff]
          %v780 = vpack.c.bf16 %v765, %v764
          %v781 = vpack.c.bf16 %v767, %v766
          %v782 = vpack.c.bf16 %v769, %v768
          %v783 = vpack.c.bf16 %v771, %v770
          %v784 = vpack.c.bf16 %v773, %v772
          %v785 = vpack.c.bf16 %v775, %v774
          %v786 = vpack.c.bf16 %v777, %v776
          %v787 = vpack.c.bf16 %v779, %v778
          %v788 = vld [vmem:[#allocation22] sm:$0xf]
          %v789 = vld [vmem:[#allocation22 + $0x4] sm:$0xf]
          %v790 = vld [vmem:[#allocation22 + $0x8] sm:$0xf]
          %v791 = vld [vmem:[#allocation22 + $0xc] sm:$0xf]
          %v792 = vld [vmem:[#allocation22 + $0x10] sm:$0xf]
          %v793 = vld [vmem:[#allocation22 + $0x14] sm:$0xf]
          %v794 = vld [vmem:[#allocation22 + $0x18] sm:$0xf]
          %v795 = vld [vmem:[#allocation22 + $0x1c] sm:$0xf]
          %v796 = vld [vmem:[#allocation22 + $0x20] sm:$0xf]
          %v797 = vld [vmem:[#allocation22 + $0x24] sm:$0xf]
          %v798 = vld [vmem:[#allocation22 + $0x28] sm:$0xf]
          %v799 = vld [vmem:[#allocation22 + $0x2c] sm:$0xf]
          %v800 = vld [vmem:[#allocation22 + $0x30] sm:$0xf]
          %v801 = vld [vmem:[#allocation22 + $0x34] sm:$0xf]
          %v802 = vld [vmem:[#allocation22 + $0x38] sm:$0xf]
          %v803 = vld [vmem:[#allocation22 + $0x3c] sm:$0xf]
          %v820 = vunpack.c.l.b16 %v788
          %v821 = vunpack.c.l.b16 %v789
          %v822 = vunpack.c.l.b16 %v790
          %v823 = vunpack.c.l.b16 %v791
          %v824 = vunpack.c.l.b16 %v792
          %v825 = vunpack.c.l.b16 %v793
          %v826 = vunpack.c.l.b16 %v794
          %v827 = vunpack.c.l.b16 %v795
          %v828 = vunpack.c.l.b16 %v796
          %v829 = vunpack.c.l.b16 %v797
          %v830 = vunpack.c.l.b16 %v798
          %v831 = vunpack.c.l.b16 %v799
          %v832 = vunpack.c.l.b16 %v800
          %v833 = vunpack.c.l.b16 %v801
          %v834 = vunpack.c.l.b16 %v802
          %v835 = vunpack.c.l.b16 %v803
          %v836 = vpack.c.b16 %v821, %v820
          %v837 = vpack.c.b16 %v823, %v822
          %v838 = vpack.c.b16 %v825, %v824
          %v839 = vpack.c.b16 %v827, %v826
          %v840 = vpack.c.b16 %v829, %v828
          %v841 = vpack.c.b16 %v831, %v830
          %v842 = vpack.c.b16 %v833, %v832
          %v843 = vpack.c.b16 %v835, %v834
          %852 = vmatprep.subr.bf16.mxu0 0
          %853 = vmatpush1.bf16.msra.mxu0 %v836
          %854 = vmatprep.subr.bf16.mxu0 0
          %855 = vmatpush1.bf16.msra.mxu0 %v837
          %856 = vmatprep.subr.bf16.mxu0 0
          %857 = vmatpush1.bf16.msra.mxu0 %v838
          %858 = vmatprep.subr.bf16.mxu0 0
          %859 = vmatpush1.bf16.msra.mxu0 %v839
          %860 = vmatprep.subr.bf16.mxu0 0
          %861 = vmatpush1.bf16.msra.mxu0 %v840
          %862 = vmatprep.subr.bf16.mxu0 0
          %863 = vmatpush1.bf16.msra.mxu0 %v841
          %864 = vmatprep.subr.bf16.mxu0 0
          %865 = vmatpush1.bf16.msra.mxu0 %v842
          %866 = vmatprep.subr.bf16.mxu0 0
          %867 = vmatpush1.bf16.msra.mxu0 %v843
          %868 = vmatprep.subr.bf16.mxu0 0
          %869 = vmatpush1.bf16.msra.mxu0 0
          %870 = vmatprep.subr.bf16.mxu0 0
          %871 = vmatpush1.bf16.msra.mxu0 0
          %872 = vmatprep.subr.bf16.mxu0 0
          %873 = vmatpush1.bf16.msra.mxu0 0
          %874 = vmatprep.subr.bf16.mxu0 0
          %875 = vmatpush1.bf16.msra.mxu0 0
          %876 = vmatprep.subr.bf16.mxu0 0
          %877 = vmatpush1.bf16.msra.mxu0 0
          %878 = vmatprep.subr.bf16.mxu0 0
          %879 = vmatpush1.bf16.msra.mxu0 0
          %880 = vmatprep.subr.bf16.mxu0 0
          %881 = vmatpush1.bf16.msra.mxu0 0
          %882 = vmatprep.subr.bf16.mxu0 0
          %883 = vmatpush1.bf16.msra.mxu0 0
          %884 = vmatprep.mubr.bf16.mxu0 0
          %885 = vmatmul.mubr.bf16.gmra.mrb[0].mxu0 %v780
          %v886 = vpop.f32.mrb[0].mxu0
          %v887 = vadd.f32 0.0, %v886
          %v888 = vpop.f32.mrb[0].mxu0
          %v889 = vpop.f32.mrb[0].mxu0
          %v890 = vadd.f32 0.0, %v889
          %v891 = vpop.f32.mrb[0].mxu0
          %892 = vmatprep.mubr.bf16.mxu0 0
          %893 = vmatmul.mubr.bf16.gmra.mrb[0].mxu0 %v781
          %v894 = vpop.f32.mrb[0].mxu0
          %v895 = vadd.f32 0.0, %v894
          %v896 = vpop.f32.mrb[0].mxu0
          %v897 = vpop.f32.mrb[0].mxu0
          %v898 = vadd.f32 0.0, %v897
          %v899 = vpop.f32.mrb[0].mxu0
          %900 = vmatprep.mubr.bf16.mxu0 0
          %901 = vmatmul.mubr.bf16.gmra.mrb[0].mxu0 %v782
          %v902 = vpop.f32.mrb[0].mxu0
          %v903 = vadd.f32 0.0, %v902
          %v904 = vpop.f32.mrb[0].mxu0
          %v905 = vpop.f32.mrb[0].mxu0
          %v906 = vadd.f32 0.0, %v905
          %v907 = vpop.f32.mrb[0].mxu0
          %908 = vmatprep.mubr.bf16.mxu0 0
          %909 = vmatmul.mubr.bf16.gmra.mrb[0].mxu0 %v783
          %v910 = vpop.f32.mrb[0].mxu0
          %v911 = vadd.f32 0.0, %v910
          %v912 = vpop.f32.mrb[0].mxu0
          %v913 = vpop.f32.mrb[0].mxu0
          %v914 = vadd.f32 0.0, %v913
          %v915 = vpop.f32.mrb[0].mxu0
          %916 = vmatprep.mubr.bf16.mxu0 0
          %917 = vmatmul.mubr.bf16.gmra.mrb[0].mxu0 %v784
          %v918 = vpop.f32.mrb[0].mxu0
          %v919 = vadd.f32 0.0, %v918
          %v920 = vpop.f32.mrb[0].mxu0
          %v921 = vpop.f32.mrb[0].mxu0
          %v922 = vadd.f32 0.0, %v921
          %v923 = vpop.f32.mrb[0].mxu0
          %924 = vmatprep.mubr.bf16.mxu0 0
          %925 = vmatmul.mubr.bf16.gmra.mrb[0].mxu0 %v785
          %v926 = vpop.f32.mrb[0].mxu0
          %v927 = vadd.f32 0.0, %v926
          %v928 = vpop.f32.mrb[0].mxu0
          %v929 = vpop.f32.mrb[0].mxu0
          %v930 = vadd.f32 0.0, %v929
          %v931 = vpop.f32.mrb[0].mxu0
          %932 = vmatprep.mubr.bf16.mxu0 0
          %933 = vmatmul.mubr.bf16.gmra.mrb[0].mxu0 %v786
          %v934 = vpop.f32.mrb[0].mxu0
          %v935 = vadd.f32 0.0, %v934
          %v936 = vpop.f32.mrb[0].mxu0
          %v937 = vpop.f32.mrb[0].mxu0
          %v938 = vadd.f32 0.0, %v937
          %v939 = vpop.f32.mrb[0].mxu0
          %940 = vmatprep.mubr.bf16.mxu0 0
          %941 = vmatmul.mubr.bf16.gmra.mrb[0].mxu0 %v787
          %v942 = vpop.f32.mrb[0].mxu0
          %v943 = vadd.f32 0.0, %v942
          %v944 = vpop.f32.mrb[0].mxu0
          %v945 = vpop.f32.mrb[0].mxu0
          %v946 = vadd.f32 0.0, %v945
          %v947 = vpop.f32.mrb[0].mxu0
          %948 = vdwg.mxu0
          %949 = vst [vmem:[#allocation5] sm:$0xff] %v887
          %950 = vst [vmem:[#allocation5 + $0x8] sm:$0xff] %v890
          %951 = vst [vmem:[#allocation5 + $0x10] sm:$0xff] %v895
          %952 = vst [vmem:[#allocation5 + $0x18] sm:$0xff] %v898
          %953 = vst [vmem:[#allocation5 + $0x20] sm:$0xff] %v903
          %954 = vst [vmem:[#allocation5 + $0x28] sm:$0xff] %v906
          %955 = vst [vmem:[#allocation5 + $0x30] sm:$0xff] %v911
          %956 = vst [vmem:[#allocation5 + $0x38] sm:$0xff] %v914
          %957 = vst [vmem:[#allocation5 + $0x40] sm:$0xff] %v919
          %958 = vst [vmem:[#allocation5 + $0x48] sm:$0xff] %v922
          %959 = vst [vmem:[#allocation5 + $0x50] sm:$0xff] %v927
          %960 = vst [vmem:[#allocation5 + $0x58] sm:$0xff] %v930
          %961 = vst [vmem:[#allocation5 + $0x60] sm:$0xff] %v935
          %962 = vst [vmem:[#allocation5 + $0x68] sm:$0xff] %v938
          %963 = vst [vmem:[#allocation5 + $0x70] sm:$0xff] %v943
          %964 = vst [vmem:[#allocation5 + $0x78] sm:$0xff] %v946
          %v965 = vld [vmem:[%s3] sm:$0xff]
          %v966 = vpack.c.bf16 %v965, %v965
          %v967 = vld [vmem:[#allocation19] sm:$0xf]
          %v968 = vld [vmem:[#allocation19 + $0x4] sm:$0xf]
          %v969 = vld [vmem:[#allocation19 + $0x8] sm:$0xf]
          %v970 = vld [vmem:[#allocation19 + $0xc] sm:$0xf]
          %v971 = vld [vmem:[#allocation19 + $0x10] sm:$0xf]
          %v972 = vld [vmem:[#allocation19 + $0x14] sm:$0xf]
          %v973 = vld [vmem:[#allocation19 + $0x18] sm:$0xf]
          %v974 = vld [vmem:[#allocation19 + $0x1c] sm:$0xf]
          %v975 = vld [vmem:[#allocation19 + $0x20] sm:$0xf]
          %v976 = vld [vmem:[#allocation19 + $0x24] sm:$0xf]
          %v977 = vld [vmem:[#allocation19 + $0x28] sm:$0xf]
          %v978 = vld [vmem:[#allocation19 + $0x2c] sm:$0xf]
          %v979 = vld [vmem:[#allocation19 + $0x30] sm:$0xf]
          %v980 = vld [vmem:[#allocation19 + $0x34] sm:$0xf]
          %v981 = vld [vmem:[#allocation19 + $0x38] sm:$0xf]
          %v982 = vld [vmem:[#allocation19 + $0x3c] sm:$0xf]
          %v983 = vld [vmem:[%s11] sm:$0x1]
          %v985 = vlaneseq
          %v986 = vshrl.u32 %v985, 7
          %v987 = vsub.s32 0, %v986
          %v988 = vrot.slane %v983, %v987
          %v1006 = vunpack.c.l.b16 %v967
          %v1007 = vunpack.c.l.b16 %v968
          %v1008 = vunpack.c.l.b16 %v969
          %v1009 = vunpack.c.l.b16 %v970
          %v1010 = vunpack.c.l.b16 %v971
          %v1011 = vunpack.c.l.b16 %v972
          %v1012 = vunpack.c.l.b16 %v973
          %v1013 = vunpack.c.l.b16 %v974
          %v1014 = vunpack.c.l.b16 %v975
          %v1015 = vunpack.c.l.b16 %v976
          %v1016 = vunpack.c.l.b16 %v977
          %v1017 = vunpack.c.l.b16 %v978
          %v1018 = vunpack.c.l.b16 %v979
          %v1019 = vunpack.c.l.b16 %v980
          %v1020 = vunpack.c.l.b16 %v981
          %v1021 = vunpack.c.l.b16 %v982
          %v1022 = vpack.c.b16 %v1007, %v1006
          %v1023 = vpack.c.b16 %v1009, %v1008
          %v1024 = vpack.c.b16 %v1011, %v1010
          %v1025 = vpack.c.b16 %v1013, %v1012
          %v1026 = vpack.c.b16 %v1015, %v1014
          %v1027 = vpack.c.b16 %v1017, %v1016
          %v1028 = vpack.c.b16 %v1019, %v1018
          %v1029 = vpack.c.b16 %v1021, %v1020
          %1038 = vmatprep.subr.bf16.mxu0 0
          %1039 = vmatpush1.bf16.msra.mxu0 %v1022
          %1040 = vmatprep.subr.bf16.mxu0 0
          %1041 = vmatpush1.bf16.msra.mxu0 %v1023
          %1042 = vmatprep.subr.bf16.mxu0 0
          %1043 = vmatpush1.bf16.msra.mxu0 %v1024
          %1044 = vmatprep.subr.bf16.mxu0 0
          %1045 = vmatpush1.bf16.msra.mxu0 %v1025
          %1046 = vmatprep.subr.bf16.mxu0 0
          %1047 = vmatpush1.bf16.msra.mxu0 %v1026
          %1048 = vmatprep.subr.bf16.mxu0 0
          %1049 = vmatpush1.bf16.msra.mxu0 %v1027
          %1050 = vmatprep.subr.bf16.mxu0 0
          %1051 = vmatpush1.bf16.msra.mxu0 %v1028
          %1052 = vmatprep.subr.bf16.mxu0 0
          %1053 = vmatpush1.bf16.msra.mxu0 %v1029
          %1054 = vmatprep.subr.bf16.mxu0 0
          %1055 = vmatpush1.bf16.msra.mxu0 0
          %1056 = vmatprep.subr.bf16.mxu0 0
          %1057 = vmatpush1.bf16.msra.mxu0 0
          %1058 = vmatprep.subr.bf16.mxu0 0
          %1059 = vmatpush1.bf16.msra.mxu0 0
          %1060 = vmatprep.subr.bf16.mxu0 0
          %1061 = vmatpush1.bf16.msra.mxu0 0
          %1062 = vmatprep.subr.bf16.mxu0 0
          %1063 = vmatpush1.bf16.msra.mxu0 0
          %1064 = vmatprep.subr.bf16.mxu0 0
          %1065 = vmatpush1.bf16.msra.mxu0 0
          %1066 = vmatprep.subr.bf16.mxu0 0
          %1067 = vmatpush1.bf16.msra.mxu0 0
          %1068 = vmatprep.subr.bf16.mxu0 0
          %1069 = vmatpush1.bf16.msra.mxu0 0
          %1070 = vmatprep.mubr.bf16.mxu0 0
          %1071 = vmatmul.mubr.bf16.gmra.mrb[0].mxu0 %v966
          %v1072 = vpop.f32.mrb[0].mxu0
          %v1073 = vadd.f32 %v988, %v1072
          %v1074 = vpop.f32.mrb[0].mxu0
          %v1075 = vpop.f32.mrb[0].mxu0
          %v1076 = vpop.f32.mrb[0].mxu0
          %1077 = vdwg.mxu0
          %1078 = vst [vmem:[#allocation6] sm:$0xff] %v1073
        $region136: #{tpu_custom_call.1} parent=87 // pred_fallthru
          _
        %v1079 = vld [vmem:[%s660] sm:$0xf]
        %v1080 = vld [vmem:[#allocation2] sm:$0xff]
        %v1081 = vld [vmem:[#allocation3] sm:$0xff]
        %v1082 = vpack.c.bf16 %v1080, %v1080
        %v1083 = vld [vmem:[#allocation17] sm:$0xff]
        %v1084 = vld [vmem:[#allocation17 + $0x8] sm:$0xff]
        %v1085 = vld [vmem:[#allocation17 + $0x10] sm:$0xff]
        %v1086 = vld [vmem:[#allocation17 + $0x18] sm:$0xff]
        %v1087 = vld [vmem:[#allocation17 + $0x20] sm:$0xff]
        %v1088 = vld [vmem:[#allocation17 + $0x28] sm:$0xff]
        %v1089 = vld [vmem:[#allocation17 + $0x30] sm:$0xff]
        %v1090 = vld [vmem:[#allocation17 + $0x38] sm:$0xff]
        %v1091 = vld [vmem:[#allocation17 + $0x40] sm:$0xff]
        %v1092 = vld [vmem:[#allocation17 + $0x48] sm:$0xff]
        %v1093 = vld [vmem:[#allocation17 + $0x50] sm:$0xff]
        %v1094 = vld [vmem:[#allocation17 + $0x58] sm:$0xff]
        %v1095 = vld [vmem:[#allocation17 + $0x60] sm:$0xff]
        %v1096 = vld [vmem:[#allocation17 + $0x68] sm:$0xff]
        %v1097 = vld [vmem:[#allocation17 + $0x70] sm:$0xff]
        %v1098 = vld [vmem:[#allocation17 + $0x78] sm:$0xff]
        %v1099 = vld [vmem:[#allocation17 + $0x80] sm:$0xff]
        %v1100 = vld [vmem:[#allocation17 + $0x88] sm:$0xff]
        %v1101 = vld [vmem:[#allocation17 + $0x90] sm:$0xff]
        %v1102 = vld [vmem:[#allocation17 + $0x98] sm:$0xff]
        %v1103 = vld [vmem:[#allocation17 + $0xa0] sm:$0xff]
        %v1104 = vld [vmem:[#allocation17 + $0xa8] sm:$0xff]
        %v1105 = vld [vmem:[#allocation17 + $0xb0] sm:$0xff]
        %v1106 = vld [vmem:[#allocation17 + $0xb8] sm:$0xff]
        %v1107 = vld [vmem:[#allocation17 + $0xc0] sm:$0xff]
        %v1108 = vld [vmem:[#allocation17 + $0xc8] sm:$0xff]
        %v1109 = vld [vmem:[#allocation17 + $0xd0] sm:$0xff]
        %v1110 = vld [vmem:[#allocation17 + $0xd8] sm:$0xff]
        %v1111 = vld [vmem:[#allocation17 + $0xe0] sm:$0xff]
        %v1112 = vld [vmem:[#allocation17 + $0xe8] sm:$0xff]
        %v1113 = vld [vmem:[#allocation17 + $0xf0] sm:$0xff]
        %v1114 = vld [vmem:[#allocation17 + $0xf8] sm:$0xff]
        %v1115 = vld [vmem:[#allocation17 + $0x100] sm:$0xff]
        %v1116 = vld [vmem:[#allocation17 + $0x108] sm:$0xff]
        %v1117 = vld [vmem:[#allocation17 + $0x110] sm:$0xff]
        %v1118 = vld [vmem:[#allocation17 + $0x118] sm:$0xff]
        %v1119 = vld [vmem:[#allocation17 + $0x120] sm:$0xff]
        %v1120 = vld [vmem:[#allocation17 + $0x128] sm:$0xff]
        %v1121 = vld [vmem:[#allocation17 + $0x130] sm:$0xff]
        %v1122 = vld [vmem:[#allocation17 + $0x138] sm:$0xff]
        %v1123 = vld [vmem:[#allocation17 + $0x140] sm:$0xff]
        %v1124 = vld [vmem:[#allocation17 + $0x148] sm:$0xff]
        %v1125 = vld [vmem:[#allocation17 + $0x150] sm:$0xff]
        %v1126 = vld [vmem:[#allocation17 + $0x158] sm:$0xff]
        %v1127 = vld [vmem:[#allocation17 + $0x160] sm:$0xff]
        %v1128 = vld [vmem:[#allocation17 + $0x168] sm:$0xff]
        %v1129 = vld [vmem:[#allocation17 + $0x170] sm:$0xff]
        %v1130 = vld [vmem:[#allocation17 + $0x178] sm:$0xff]
        %v1131 = vld [vmem:[#allocation17 + $0x180] sm:$0xff]
        %v1132 = vld [vmem:[#allocation17 + $0x188] sm:$0xff]
        %v1133 = vld [vmem:[#allocation17 + $0x190] sm:$0xff]
        %v1134 = vld [vmem:[#allocation17 + $0x198] sm:$0xff]
        %v1135 = vld [vmem:[#allocation17 + $0x1a0] sm:$0xff]
        %v1136 = vld [vmem:[#allocation17 + $0x1a8] sm:$0xff]
        %v1137 = vld [vmem:[#allocation17 + $0x1b0] sm:$0xff]
        %v1138 = vld [vmem:[#allocation17 + $0x1b8] sm:$0xff]
        %v1139 = vld [vmem:[#allocation17 + $0x1c0] sm:$0xff]
        %v1140 = vld [vmem:[#allocation17 + $0x1c8] sm:$0xff]
        %v1141 = vld [vmem:[#allocation17 + $0x1d0] sm:$0xff]
        %v1142 = vld [vmem:[#allocation17 + $0x1d8] sm:$0xff]
        %v1143 = vld [vmem:[#allocation17 + $0x1e0] sm:$0xff]
        %v1144 = vld [vmem:[#allocation17 + $0x1e8] sm:$0xff]
        %v1145 = vld [vmem:[#allocation17 + $0x1f0] sm:$0xff]
        %v1146 = vld [vmem:[#allocation17 + $0x1f8] sm:$0xff]
        %v1147 = vld [vmem:[%s7] sm:$0xf]
        %v1149 = vlaneseq
        %v1150 = vshrl.u32 %v1149, 7
        %v1151 = vsub.s32 0, %v1150
        %v1152 = vrot.slane %v1147, %v1151
        %v1153 = vlaneseq
        %v1154 = vshrl.u32 %v1153, 7
        %v1155 = vsub.s32 1, %v1154
        %v1156 = vrot.slane %v1147, %v1155
        %v1157 = vlaneseq
        %v1158 = vshrl.u32 %v1157, 7
        %v1159 = vsub.s32 2, %v1158
        %v1160 = vrot.slane %v1147, %v1159
        %v1161 = vlaneseq
        %v1162 = vshrl.u32 %v1161, 7
        %v1163 = vsub.s32 3, %v1162
        %v1164 = vrot.slane %v1147, %v1163
        %v1233 = vunpack.c.l.b16 %v1083
        %v1234 = vunpack.c.h.b16 %v1083
        %v1235 = vunpack.c.l.b16 %v1084
        %v1236 = vunpack.c.h.b16 %v1084
        %v1237 = vunpack.c.l.b16 %v1085
        %v1238 = vunpack.c.h.b16 %v1085
        %v1239 = vunpack.c.l.b16 %v1086
        %v1240 = vunpack.c.h.b16 %v1086
        %v1241 = vunpack.c.l.b16 %v1087
        %v1242 = vunpack.c.h.b16 %v1087
        %v1243 = vunpack.c.l.b16 %v1088
        %v1244 = vunpack.c.h.b16 %v1088
        %v1245 = vunpack.c.l.b16 %v1089
        %v1246 = vunpack.c.h.b16 %v1089
        %v1247 = vunpack.c.l.b16 %v1090
        %v1248 = vunpack.c.h.b16 %v1090
        %v1249 = vunpack.c.l.b16 %v1091
        %v1250 = vunpack.c.h.b16 %v1091
        %v1251 = vunpack.c.l.b16 %v1092
        %v1252 = vunpack.c.h.b16 %v1092
        %v1253 = vunpack.c.l.b16 %v1093
        %v1254 = vunpack.c.h.b16 %v1093
        %v1255 = vunpack.c.l.b16 %v1094
        %v1256 = vunpack.c.h.b16 %v1094
        %v1257 = vunpack.c.l.b16 %v1095
        %v1258 = vunpack.c.h.b16 %v1095
        %v1259 = vunpack.c.l.b16 %v1096
        %v1260 = vunpack.c.h.b16 %v1096
        %v1261 = vunpack.c.l.b16 %v1097
        %v1262 = vunpack.c.h.b16 %v1097
        %v1263 = vunpack.c.l.b16 %v1098
        %v1264 = vunpack.c.h.b16 %v1098
        %v1265 = vunpack.c.l.b16 %v1099
        %v1266 = vunpack.c.h.b16 %v1099
        %v1267 = vunpack.c.l.b16 %v1100
        %v1268 = vunpack.c.h.b16 %v1100
        %v1269 = vunpack.c.l.b16 %v1101
        %v1270 = vunpack.c.h.b16 %v1101
        %v1271 = vunpack.c.l.b16 %v1102
        %v1272 = vunpack.c.h.b16 %v1102
        %v1273 = vunpack.c.l.b16 %v1103
        %v1274 = vunpack.c.h.b16 %v1103
        %v1275 = vunpack.c.l.b16 %v1104
        %v1276 = vunpack.c.h.b16 %v1104
        %v1277 = vunpack.c.l.b16 %v1105
        %v1278 = vunpack.c.h.b16 %v1105
        %v1279 = vunpack.c.l.b16 %v1106
        %v1280 = vunpack.c.h.b16 %v1106
        %v1281 = vunpack.c.l.b16 %v1107
        %v1282 = vunpack.c.h.b16 %v1107
        %v1283 = vunpack.c.l.b16 %v1108
        %v1284 = vunpack.c.h.b16 %v1108
        %v1285 = vunpack.c.l.b16 %v1109
        %v1286 = vunpack.c.h.b16 %v1109
        %v1287 = vunpack.c.l.b16 %v1110
        %v1288 = vunpack.c.h.b16 %v1110
        %v1289 = vunpack.c.l.b16 %v1111
        %v1290 = vunpack.c.h.b16 %v1111
        %v1291 = vunpack.c.l.b16 %v1112
        %v1292 = vunpack.c.h.b16 %v1112
        %v1293 = vunpack.c.l.b16 %v1113
        %v1294 = vunpack.c.h.b16 %v1113
        %v1295 = vunpack.c.l.b16 %v1114
        %v1296 = vunpack.c.h.b16 %v1114
        %v1297 = vunpack.c.l.b16 %v1115
        %v1298 = vunpack.c.h.b16 %v1115
        %v1299 = vunpack.c.l.b16 %v1116
        %v1300 = vunpack.c.h.b16 %v1116
        %v1301 = vunpack.c.l.b16 %v1117
        %v1302 = vunpack.c.h.b16 %v1117
        %v1303 = vunpack.c.l.b16 %v1118
        %v1304 = vunpack.c.h.b16 %v1118
        %v1305 = vunpack.c.l.b16 %v1119
        %v1306 = vunpack.c.h.b16 %v1119
        %v1307 = vunpack.c.l.b16 %v1120
        %v1308 = vunpack.c.h.b16 %v1120
        %v1309 = vunpack.c.l.b16 %v1121
        %v1310 = vunpack.c.h.b16 %v1121
        %v1311 = vunpack.c.l.b16 %v1122
        %v1312 = vunpack.c.h.b16 %v1122
        %v1313 = vunpack.c.l.b16 %v1123
        %v1314 = vunpack.c.h.b16 %v1123
        %v1315 = vunpack.c.l.b16 %v1124
        %v1316 = vunpack.c.h.b16 %v1124
        %v1317 = vunpack.c.l.b16 %v1125
        %v1318 = vunpack.c.h.b16 %v1125
        %v1319 = vunpack.c.l.b16 %v1126
        %v1320 = vunpack.c.h.b16 %v1126
        %v1321 = vunpack.c.l.b16 %v1127
        %v1322 = vunpack.c.h.b16 %v1127
        %v1323 = vunpack.c.l.b16 %v1128
        %v1324 = vunpack.c.h.b16 %v1128
        %v1325 = vunpack.c.l.b16 %v1129
        %v1326 = vunpack.c.h.b16 %v1129
        %v1327 = vunpack.c.l.b16 %v1130
        %v1328 = vunpack.c.h.b16 %v1130
        %v1329 = vunpack.c.l.b16 %v1131
        %v1330 = vunpack.c.h.b16 %v1131
        %v1331 = vunpack.c.l.b16 %v1132
        %v1332 = vunpack.c.h.b16 %v1132
        %v1333 = vunpack.c.l.b16 %v1133
        %v1334 = vunpack.c.h.b16 %v1133
        %v1335 = vunpack.c.l.b16 %v1134
        %v1336 = vunpack.c.h.b16 %v1134
        %v1337 = vunpack.c.l.b16 %v1135
        %v1338 = vunpack.c.h.b16 %v1135
        %v1339 = vunpack.c.l.b16 %v1136
        %v1340 = vunpack.c.h.b16 %v1136
        %v1341 = vunpack.c.l.b16 %v1137
        %v1342 = vunpack.c.h.b16 %v1137
        %v1343 = vunpack.c.l.b16 %v1138
        %v1344 = vunpack.c.h.b16 %v1138
        %v1345 = vunpack.c.l.b16 %v1139
        %v1346 = vunpack.c.h.b16 %v1139
        %v1347 = vunpack.c.l.b16 %v1140
        %v1348 = vunpack.c.h.b16 %v1140
        %v1349 = vunpack.c.l.b16 %v1141
        %v1350 = vunpack.c.h.b16 %v1141
        %v1351 = vunpack.c.l.b16 %v1142
        %v1352 = vunpack.c.h.b16 %v1142
        %v1353 = vunpack.c.l.b16 %v1143
        %v1354 = vunpack.c.h.b16 %v1143
        %v1355 = vunpack.c.l.b16 %v1144
        %v1356 = vunpack.c.h.b16 %v1144
        %v1357 = vunpack.c.l.b16 %v1145
        %v1358 = vunpack.c.h.b16 %v1145
        %v1359 = vunpack.c.l.b16 %v1146
        %v1360 = vunpack.c.h.b16 %v1146
        %v1361 = vpack.c.b16 %v1237, %v1233
        %v1362 = vpack.c.b16 %v1238, %v1234
        %v1363 = vpack.c.b16 %v1239, %v1235
        %v1364 = vpack.c.b16 %v1240, %v1236
        %v1365 = vpack.c.b16 %v1245, %v1241
        %v1366 = vpack.c.b16 %v1246, %v1242
        %v1367 = vpack.c.b16 %v1247, %v1243
        %v1368 = vpack.c.b16 %v1248, %v1244
        %v1369 = vpack.c.b16 %v1253, %v1249
        %v1370 = vpack.c.b16 %v1254, %v1250
        %v1371 = vpack.c.b16 %v1255, %v1251
        %v1372 = vpack.c.b16 %v1256, %v1252
        %v1373 = vpack.c.b16 %v1261, %v1257
        %v1374 = vpack.c.b16 %v1262, %v1258
        %v1375 = vpack.c.b16 %v1263, %v1259
        %v1376 = vpack.c.b16 %v1264, %v1260
        %v1377 = vpack.c.b16 %v1269, %v1265
        %v1378 = vpack.c.b16 %v1270, %v1266
        %v1379 = vpack.c.b16 %v1271, %v1267
        %v1380 = vpack.c.b16 %v1272, %v1268
        %v1381 = vpack.c.b16 %v1277, %v1273
        %v1382 = vpack.c.b16 %v1278, %v1274
        %v1383 = vpack.c.b16 %v1279, %v1275
        %v1384 = vpack.c.b16 %v1280, %v1276
        %v1385 = vpack.c.b16 %v1285, %v1281
        %v1386 = vpack.c.b16 %v1286, %v1282
        %v1387 = vpack.c.b16 %v1287, %v1283
        %v1388 = vpack.c.b16 %v1288, %v1284
        %v1389 = vpack.c.b16 %v1293, %v1289
        %v1390 = vpack.c.b16 %v1294, %v1290
        %v1391 = vpack.c.b16 %v1295, %v1291
        %v1392 = vpack.c.b16 %v1296, %v1292
        %v1393 = vpack.c.b16 %v1301, %v1297
        %v1394 = vpack.c.b16 %v1302, %v1298
        %v1395 = vpack.c.b16 %v1303, %v1299
        %v1396 = vpack.c.b16 %v1304, %v1300
        %v1397 = vpack.c.b16 %v1309, %v1305
        %v1398 = vpack.c.b16 %v1310, %v1306
        %v1399 = vpack.c.b16 %v1311, %v1307
        %v1400 = vpack.c.b16 %v1312, %v1308
        %v1401 = vpack.c.b16 %v1317, %v1313
        %v1402 = vpack.c.b16 %v1318, %v1314
        %v1403 = vpack.c.b16 %v1319, %v1315
        %v1404 = vpack.c.b16 %v1320, %v1316
        %v1405 = vpack.c.b16 %v1325, %v1321
        %v1406 = vpack.c.b16 %v1326, %v1322
        %v1407 = vpack.c.b16 %v1327, %v1323
        %v1408 = vpack.c.b16 %v1328, %v1324
        %v1409 = vpack.c.b16 %v1333, %v1329
        %v1410 = vpack.c.b16 %v1334, %v1330
        %v1411 = vpack.c.b16 %v1335, %v1331
        %v1412 = vpack.c.b16 %v1336, %v1332
        %v1413 = vpack.c.b16 %v1341, %v1337
        %v1414 = vpack.c.b16 %v1342, %v1338
        %v1415 = vpack.c.b16 %v1343, %v1339
        %v1416 = vpack.c.b16 %v1344, %v1340
        %v1417 = vpack.c.b16 %v1349, %v1345
        %v1418 = vpack.c.b16 %v1350, %v1346
        %v1419 = vpack.c.b16 %v1351, %v1347
        %v1420 = vpack.c.b16 %v1352, %v1348
        %v1421 = vpack.c.b16 %v1357, %v1353
        %v1422 = vpack.c.b16 %v1358, %v1354
        %v1423 = vpack.c.b16 %v1359, %v1355
        %v1424 = vpack.c.b16 %v1360, %v1356
        %1489 = vmatprep.subr.bf16.mxu0 %v1362
        %1490 = vmatpush1.bf16.msra.mxu0 %v1361
        %1491 = vmatprep.subr.bf16.mxu0 %v1366
        %1492 = vmatpush1.bf16.msra.mxu0 %v1365
        %1493 = vmatprep.subr.bf16.mxu0 %v1370
        %1494 = vmatpush1.bf16.msra.mxu0 %v1369
        %1495 = vmatprep.subr.bf16.mxu0 %v1374
        %1496 = vmatpush1.bf16.msra.mxu0 %v1373
        %1497 = vmatprep.subr.bf16.mxu0 %v1378
        %1498 = vmatpush1.bf16.msra.mxu0 %v1377
        %1499 = vmatprep.subr.bf16.mxu0 %v1382
        %1500 = vmatpush1.bf16.msra.mxu0 %v1381
        %1501 = vmatprep.subr.bf16.mxu0 %v1386
        %1502 = vmatpush1.bf16.msra.mxu0 %v1385
        %1503 = vmatprep.subr.bf16.mxu0 %v1390
        %1504 = vmatpush1.bf16.msra.mxu0 %v1389
        %1505 = vmatprep.subr.bf16.mxu0 %v1394
        %1506 = vmatpush1.bf16.msra.mxu0 %v1393
        %1507 = vmatprep.subr.bf16.mxu0 %v1398
        %1508 = vmatpush1.bf16.msra.mxu0 %v1397
        %1509 = vmatprep.subr.bf16.mxu0 %v1402
        %1510 = vmatpush1.bf16.msra.mxu0 %v1401
        %1511 = vmatprep.subr.bf16.mxu0 %v1406
        %1512 = vmatpush1.bf16.msra.mxu0 %v1405
        %1513 = vmatprep.subr.bf16.mxu0 %v1410
        %1514 = vmatpush1.bf16.msra.mxu0 %v1409
        %1515 = vmatprep.subr.bf16.mxu0 %v1414
        %1516 = vmatpush1.bf16.msra.mxu0 %v1413
        %1517 = vmatprep.subr.bf16.mxu0 %v1418
        %1518 = vmatpush1.bf16.msra.mxu0 %v1417
        %1519 = vmatprep.subr.bf16.mxu0 %v1422
        %1520 = vmatpush1.bf16.msra.mxu0 %v1421
        %1521 = vmatprep.mubr.bf16.mxu0 %v1082
        %1522 = vmatmul.mubr.bf16.gmra.mrb[0].mxu0 %v1079
        %v1523 = vpop.f32.mrb[0].mxu0
        %v1524 = vadd.f32 %v1152, %v1523
        %v1525 = vpop.f32.mrb[0].mxu0
        %v1526 = vadd.f32 %v1156, %v1525
        %v1527 = vpop.f32.mrb[0].mxu0
        %v1528 = vpop.f32.mrb[0].mxu0
        %1529 = vdwg.mxu0
        %1530 = vmatprep.subr.bf16.mxu0 %v1364
        %1531 = vmatpush1.bf16.msra.mxu0 %v1363
        %1532 = vmatprep.subr.bf16.mxu0 %v1368
        %1533 = vmatpush1.bf16.msra.mxu0 %v1367
        %1534 = vmatprep.subr.bf16.mxu0 %v1372
        %1535 = vmatpush1.bf16.msra.mxu0 %v1371
        %1536 = vmatprep.subr.bf16.mxu0 %v1376
        %1537 = vmatpush1.bf16.msra.mxu0 %v1375
        %1538 = vmatprep.subr.bf16.mxu0 %v1380
        %1539 = vmatpush1.bf16.msra.mxu0 %v1379
        %1540 = vmatprep.subr.bf16.mxu0 %v1384
        %1541 = vmatpush1.bf16.msra.mxu0 %v1383
        %1542 = vmatprep.subr.bf16.mxu0 %v1388
        %1543 = vmatpush1.bf16.msra.mxu0 %v1387
        %1544 = vmatprep.subr.bf16.mxu0 %v1392
        %1545 = vmatpush1.bf16.msra.mxu0 %v1391
        %1546 = vmatprep.subr.bf16.mxu0 %v1396
        %1547 = vmatpush1.bf16.msra.mxu0 %v1395
        %1548 = vmatprep.subr.bf16.mxu0 %v1400
        %1549 = vmatpush1.bf16.msra.mxu0 %v1399
        %1550 = vmatprep.subr.bf16.mxu0 %v1404
        %1551 = vmatpush1.bf16.msra.mxu0 %v1403
        %1552 = vmatprep.subr.bf16.mxu0 %v1408
        %1553 = vmatpush1.bf16.msra.mxu0 %v1407
        %1554 = vmatprep.subr.bf16.mxu0 %v1412
        %1555 = vmatpush1.bf16.msra.mxu0 %v1411
        %1556 = vmatprep.subr.bf16.mxu0 %v1416
        %1557 = vmatpush1.bf16.msra.mxu0 %v1415
        %1558 = vmatprep.subr.bf16.mxu0 %v1420
        %1559 = vmatpush1.bf16.msra.mxu0 %v1419
        %1560 = vmatprep.subr.bf16.mxu0 %v1424
        %1561 = vmatpush1.bf16.msra.mxu0 %v1423
        %1562 = vmatprep.mubr.bf16.mxu0 %v1082
        %1563 = vmatmul.mubr.bf16.gmra.mrb[0].mxu0 %v1079
        %v1564 = vpop.f32.mrb[0].mxu0
        %v1565 = vadd.f32 %v1160, %v1564
        %v1566 = vpop.f32.mrb[0].mxu0
        %v1567 = vadd.f32 %v1164, %v1566
        %v1568 = vpop.f32.mrb[0].mxu0
        %v1569 = vpop.f32.mrb[0].mxu0
        %1570 = vdwg.mxu0
        %v1571 = vxor.u32 %v1524, 2147483648
        %v1572 = vmul.f32 %v1571, 1.442695
        %v1573 = vpow.pop %v1572
        %v1574 = vadd.f32 %v1573, 1.0
        %v1575 = vrcp.pop %v1574
        %v1576 = vmul.f32 1.0, %v1575
        %v1577 = vxor.u32 %v1526, 2147483648
        %v1578 = vmul.f32 %v1577, 1.442695
        %v1579 = vpow.pop %v1578
        %v1580 = vadd.f32 %v1579, 1.0
        %v1581 = vrcp.pop %v1580
        %v1582 = vmul.f32 1.0, %v1581
        %v1583 = vtanh.pop %v1565
        %v1584 = vxor.u32 %v1567, 2147483648
        %v1585 = vmul.f32 %v1584, 1.442695
        %v1586 = vpow.pop %v1585
        %v1587 = vadd.f32 %v1586, 1.0
        %v1588 = vrcp.pop %v1587
        %v1589 = vmul.f32 1.0, %v1588
        %v1590 = vmul.f32 %v1582, %v1081
        %v1591 = vmul.f32 %v1576, %v1583
        %v1592 = vadd.f32 %v1590, %v1591
        %v1593 = vtanh.pop %v1592
        %v1594 = vmul.f32 %v1589, %v1593
        %v1595 = vld [vmem:[#allocation6] sm:$0xff]
        %v1596 = vpack.c.bf16 %v1594, %v1594
        %v1597 = vld [vmem:[#allocation20] sm:$0xf]
        %v1598 = vld [vmem:[#allocation20 + $0x4] sm:$0xf]
        %v1599 = vld [vmem:[#allocation20 + $0x8] sm:$0xf]
        %v1600 = vld [vmem:[#allocation20 + $0xc] sm:$0xf]
        %v1601 = vld [vmem:[#allocation20 + $0x10] sm:$0xf]
        %v1602 = vld [vmem:[#allocation20 + $0x14] sm:$0xf]
        %v1603 = vld [vmem:[#allocation20 + $0x18] sm:$0xf]
        %v1604 = vld [vmem:[#allocation20 + $0x1c] sm:$0xf]
        %v1605 = vld [vmem:[#allocation20 + $0x20] sm:$0xf]
        %v1606 = vld [vmem:[#allocation20 + $0x24] sm:$0xf]
        %v1607 = vld [vmem:[#allocation20 + $0x28] sm:$0xf]
        %v1608 = vld [vmem:[#allocation20 + $0x2c] sm:$0xf]
        %v1609 = vld [vmem:[#allocation20 + $0x30] sm:$0xf]
        %v1610 = vld [vmem:[#allocation20 + $0x34] sm:$0xf]
        %v1611 = vld [vmem:[#allocation20 + $0x38] sm:$0xf]
        %v1612 = vld [vmem:[#allocation20 + $0x3c] sm:$0xf]
        %v1629 = vunpack.c.l.b16 %v1597
        %v1630 = vunpack.c.l.b16 %v1598
        %v1631 = vunpack.c.l.b16 %v1599
        %v1632 = vunpack.c.l.b16 %v1600
        %v1633 = vunpack.c.l.b16 %v1601
        %v1634 = vunpack.c.l.b16 %v1602
        %v1635 = vunpack.c.l.b16 %v1603
        %v1636 = vunpack.c.l.b16 %v1604
        %v1637 = vunpack.c.l.b16 %v1605
        %v1638 = vunpack.c.l.b16 %v1606
        %v1639 = vunpack.c.l.b16 %v1607
        %v1640 = vunpack.c.l.b16 %v1608
        %v1641 = vunpack.c.l.b16 %v1609
        %v1642 = vunpack.c.l.b16 %v1610
        %v1643 = vunpack.c.l.b16 %v1611
        %v1644 = vunpack.c.l.b16 %v1612
        %v1645 = vpack.c.b16 %v1630, %v1629
        %v1646 = vpack.c.b16 %v1632, %v1631
        %v1647 = vpack.c.b16 %v1634, %v1633
        %v1648 = vpack.c.b16 %v1636, %v1635
        %v1649 = vpack.c.b16 %v1638, %v1637
        %v1650 = vpack.c.b16 %v1640, %v1639
        %v1651 = vpack.c.b16 %v1642, %v1641
        %v1652 = vpack.c.b16 %v1644, %v1643
        %1661 = vmatprep.subr.bf16.mxu0 0
        %1662 = vmatpush1.bf16.msra.mxu0 %v1645
        %1663 = vmatprep.subr.bf16.mxu0 0
        %1664 = vmatpush1.bf16.msra.mxu0 %v1646
        %1665 = vmatprep.subr.bf16.mxu0 0
        %1666 = vmatpush1.bf16.msra.mxu0 %v1647
        %1667 = vmatprep.subr.bf16.mxu0 0
        %1668 = vmatpush1.bf16.msra.mxu0 %v1648
        %1669 = vmatprep.subr.bf16.mxu0 0
        %1670 = vmatpush1.bf16.msra.mxu0 %v1649
        %1671 = vmatprep.subr.bf16.mxu0 0
        %1672 = vmatpush1.bf16.msra.mxu0 %v1650
        %1673 = vmatprep.subr.bf16.mxu0 0
        %1674 = vmatpush1.bf16.msra.mxu0 %v1651
        %1675 = vmatprep.subr.bf16.mxu0 0
        %1676 = vmatpush1.bf16.msra.mxu0 %v1652
        %1677 = vmatprep.subr.bf16.mxu0 0
        %1678 = vmatpush1.bf16.msra.mxu0 0
        %1679 = vmatprep.subr.bf16.mxu0 0
        %1680 = vmatpush1.bf16.msra.mxu0 0
        %1681 = vmatprep.subr.bf16.mxu0 0
        %1682 = vmatpush1.bf16.msra.mxu0 0
        %1683 = vmatprep.subr.bf16.mxu0 0
        %1684 = vmatpush1.bf16.msra.mxu0 0
        %1685 = vmatprep.subr.bf16.mxu0 0
        %1686 = vmatpush1.bf16.msra.mxu0 0
        %1687 = vmatprep.subr.bf16.mxu0 0
        %1688 = vmatpush1.bf16.msra.mxu0 0
        %1689 = vmatprep.subr.bf16.mxu0 0
        %1690 = vmatpush1.bf16.msra.mxu0 0
        %1691 = vmatprep.subr.bf16.mxu0 0
        %1692 = vmatpush1.bf16.msra.mxu0 0
        %1693 = vmatprep.mubr.bf16.mxu0 0
        %1694 = vmatmul.mubr.bf16.gmra.mrb[0].mxu0 %v1596
        %v1695 = vpop.f32.mrb[0].mxu0
        %v1696 = vadd.f32 0.0, %v1695
        %v1697 = vpop.f32.mrb[0].mxu0
        %v1698 = vpop.f32.mrb[0].mxu0
        %v1699 = vpop.f32.mrb[0].mxu0
        %1700 = vdwg.mxu0
        %v1701 = vadd.f32 %v1595, %v1696
        %v1702 = vld [vmem:[%s14] sm:$0x1]
        %v1703 = vld [vmem:[#allocation5] sm:$0xff]
        %v1704 = vld [vmem:[#allocation5 + $0x8] sm:$0xff]
        %v1706 = vcombine.high %v1701, %v1701
        %v1708 = vunpack.c.l.s4 1966171168
        %v1709 = vunpack.c.0.s8 %v1708
        %v1710 = vlaneseq
        %v1711 = vshrl.u32 %v1710, 7
        %v1712 = vsub.s32 %v1709, %v1711
        %v1713 = vrot.slane %v1701, %v1712
        %v1715 = vunpack.c.l.s4 1966171168
        %v1716 = vunpack.c.0.s8 %v1715
        %v1717 = vlaneseq
        %v1718 = vshrl.u32 %v1717, 7
        %v1719 = vsub.s32 %v1716, %v1718
        %v1720 = vrot.slane %v1706, %v1719
        %v1721 = vcombine.high %v1713, %v1713
        %v1722 = vcombine.high %v1720, %v1720
        %v1724 = vunpack.c.l.s4 1966171168
        %v1725 = vunpack.c.0.s8 %v1724
        %v1726 = vlaneseq
        %v1727 = vshrl.u32 %v1726, 7
        %v1728 = vsub.s32 %v1725, %v1727
        %v1729 = vrot.slane %v1713, %v1728
        %v1731 = vunpack.c.l.s4 1966171168
        %v1732 = vunpack.c.0.s8 %v1731
        %v1733 = vlaneseq
        %v1734 = vshrl.u32 %v1733, 7
        %v1735 = vsub.s32 %v1732, %v1734
        %v1736 = vrot.slane %v1720, %v1735
        %v1738 = vunpack.c.l.s4 1966171168
        %v1739 = vunpack.c.0.s8 %v1738
        %v1740 = vlaneseq
        %v1741 = vshrl.u32 %v1740, 7
        %v1742 = vsub.s32 %v1739, %v1741
        %v1743 = vrot.slane %v1721, %v1742
        %v1745 = vunpack.c.l.s4 1966171168
        %v1746 = vunpack.c.0.s8 %v1745
        %v1747 = vlaneseq
        %v1748 = vshrl.u32 %v1747, 7
        %v1749 = vsub.s32 %v1746, %v1748
        %v1750 = vrot.slane %v1722, %v1749
        %v1751 = vcombine.high %v1729, %v1729
        %v1752 = vcombine.high %v1736, %v1736
        %v1753 = vcombine.high %v1743, %v1743
        %v1754 = vcombine.high %v1750, %v1750
        %v1755 = vlaneseq
        %v1756 = vshrl.u32 %v1755, 7
        %v1757 = vsub.s32 0, %v1756
        %v1758 = vrot.slane %v1729, %v1757
        %v1759 = vlaneseq
        %v1760 = vshrl.u32 %v1759, 7
        %v1761 = vsub.s32 0, %v1760
        %v1762 = vrot.slane %v1743, %v1761
        %v1763 = vlaneseq
        %v1764 = vshrl.u32 %v1763, 7
        %v1765 = vsub.s32 0, %v1764
        %v1766 = vrot.slane %v1751, %v1765
        %v1767 = vlaneseq
        %v1768 = vshrl.u32 %v1767, 7
        %v1769 = vsub.s32 0, %v1768
        %v1770 = vrot.slane %v1753, %v1769
        %v1771 = vlaneseq
        %v1772 = vshrl.u32 %v1771, 7
        %v1773 = vsub.s32 0, %v1772
        %v1774 = vrot.slane %v1736, %v1773
        %v1775 = vlaneseq
        %v1776 = vshrl.u32 %v1775, 7
        %v1777 = vsub.s32 0, %v1776
        %v1778 = vrot.slane %v1750, %v1777
        %v1779 = vlaneseq
        %v1780 = vshrl.u32 %v1779, 7
        %v1781 = vsub.s32 0, %v1780
        %v1782 = vrot.slane %v1752, %v1781
        %v1783 = vlaneseq
        %v1784 = vshrl.u32 %v1783, 7
        %v1785 = vsub.s32 0, %v1784
        %v1786 = vrot.slane %v1754, %v1785
        %v1795 = vadd.f32 %v1758, %v1703
        %v1796 = vadd.f32 %v1758, %v1704
        %v1797 = vadd.f32 %v1762, %v1703
        %v1798 = vadd.f32 %v1762, %v1704
        %v1799 = vadd.f32 %v1766, %v1703
        %v1800 = vadd.f32 %v1766, %v1704
        %v1801 = vadd.f32 %v1770, %v1703
        %v1802 = vadd.f32 %v1770, %v1704
        %v1803 = vadd.f32 %v1774, %v1703
        %v1804 = vadd.f32 %v1774, %v1704
        %v1805 = vadd.f32 %v1778, %v1703
        %v1806 = vadd.f32 %v1778, %v1704
        %v1807 = vadd.f32 %v1782, %v1703
        %v1808 = vadd.f32 %v1782, %v1704
        %v1809 = vadd.f32 %v1786, %v1703
        %v1810 = vadd.f32 %v1786, %v1704
        %v1811 = vtanh.pop %v1795
        %v1812 = vtanh.pop %v1796
        %v1813 = vtanh.pop %v1797
        %v1814 = vtanh.pop %v1798
        %v1815 = vtanh.pop %v1799
        %v1816 = vtanh.pop %v1800
        %v1817 = vtanh.pop %v1801
        %v1818 = vtanh.pop %v1802
        %v1819 = vtanh.pop %v1803
        %v1820 = vtanh.pop %v1804
        %v1821 = vtanh.pop %v1805
        %v1822 = vtanh.pop %v1806
        %v1823 = vtanh.pop %v1807
        %v1824 = vtanh.pop %v1808
        %v1825 = vtanh.pop %v1809
        %v1826 = vtanh.pop %v1810
        %v1827 = vpack.c.bf16 %v1812, %v1811
        %v1828 = vpack.c.bf16 %v1814, %v1813
        %v1829 = vpack.c.bf16 %v1816, %v1815
        %v1830 = vpack.c.bf16 %v1818, %v1817
        %v1831 = vpack.c.bf16 %v1820, %v1819
        %v1832 = vpack.c.bf16 %v1822, %v1821
        %v1833 = vpack.c.bf16 %v1824, %v1823
        %v1834 = vpack.c.bf16 %v1826, %v1825
        %v1835 = vld [vmem:[#allocation23] sm:$0xf]
        %v1836 = vld [vmem:[#allocation23 + $0x4] sm:$0xf]
        %v1837 = vld [vmem:[#allocation23 + $0x8] sm:$0xf]
        %v1838 = vld [vmem:[#allocation23 + $0xc] sm:$0xf]
        %v1839 = vld [vmem:[#allocation23 + $0x10] sm:$0xf]
        %v1840 = vld [vmem:[#allocation23 + $0x14] sm:$0xf]
        %v1841 = vld [vmem:[#allocation23 + $0x18] sm:$0xf]
        %v1842 = vld [vmem:[#allocation23 + $0x1c] sm:$0xf]
        %v1843 = vld [vmem:[#allocation23 + $0x20] sm:$0xf]
        %v1844 = vld [vmem:[#allocation23 + $0x24] sm:$0xf]
        %v1845 = vld [vmem:[#allocation23 + $0x28] sm:$0xf]
        %v1846 = vld [vmem:[#allocation23 + $0x2c] sm:$0xf]
        %v1847 = vld [vmem:[#allocation23 + $0x30] sm:$0xf]
        %v1848 = vld [vmem:[#allocation23 + $0x34] sm:$0xf]
        %v1849 = vld [vmem:[#allocation23 + $0x38] sm:$0xf]
        %v1850 = vld [vmem:[#allocation23 + $0x3c] sm:$0xf]
        %v1851 = vld [vmem:[%s13] sm:$0x1]
        %v1853 = vlaneseq
        %v1854 = vshrl.u32 %v1853, 7
        %v1855 = vsub.s32 0, %v1854
        %v1856 = vrot.slane %v1851, %v1855
        %v1874 = vunpack.c.l.b16 %v1835
        %v1875 = vunpack.c.l.b16 %v1836
        %v1876 = vunpack.c.l.b16 %v1837
        %v1877 = vunpack.c.l.b16 %v1838
        %v1878 = vunpack.c.l.b16 %v1839
        %v1879 = vunpack.c.l.b16 %v1840
        %v1880 = vunpack.c.l.b16 %v1841
        %v1881 = vunpack.c.l.b16 %v1842
        %v1882 = vunpack.c.l.b16 %v1843
        %v1883 = vunpack.c.l.b16 %v1844
        %v1884 = vunpack.c.l.b16 %v1845
        %v1885 = vunpack.c.l.b16 %v1846
        %v1886 = vunpack.c.l.b16 %v1847
        %v1887 = vunpack.c.l.b16 %v1848
        %v1888 = vunpack.c.l.b16 %v1849
        %v1889 = vunpack.c.l.b16 %v1850
        %v1890 = vpack.c.b16 %v1875, %v1874
        %v1891 = vpack.c.b16 %v1877, %v1876
        %v1892 = vpack.c.b16 %v1879, %v1878
        %v1893 = vpack.c.b16 %v1881, %v1880
        %v1894 = vpack.c.b16 %v1883, %v1882
        %v1895 = vpack.c.b16 %v1885, %v1884
        %v1896 = vpack.c.b16 %v1887, %v1886
        %v1897 = vpack.c.b16 %v1889, %v1888
        %1906 = vmatprep.subr.bf16.mxu0 0
        %1907 = vmatpush1.bf16.msra.mxu0 %v1890
        %1908 = vmatprep.subr.bf16.mxu0 0
        %1909 = vmatpush1.bf16.msra.mxu0 %v1891
        %1910 = vmatprep.subr.bf16.mxu0 0
        %1911 = vmatpush1.bf16.msra.mxu0 %v1892
        %1912 = vmatprep.subr.bf16.mxu0 0
        %1913 = vmatpush1.bf16.msra.mxu0 %v1893
        %1914 = vmatprep.subr.bf16.mxu0 0
        %1915 = vmatpush1.bf16.msra.mxu0 %v1894
        %1916 = vmatprep.subr.bf16.mxu0 0
        %1917 = vmatpush1.bf16.msra.mxu0 %v1895
        %1918 = vmatprep.subr.bf16.mxu0 0
        %1919 = vmatpush1.bf16.msra.mxu0 %v1896
        %1920 = vmatprep.subr.bf16.mxu0 0
        %1921 = vmatpush1.bf16.msra.mxu0 %v1897
        %1922 = vmatprep.subr.bf16.mxu0 0
        %1923 = vmatpush1.bf16.msra.mxu0 0
        %1924 = vmatprep.subr.bf16.mxu0 0
        %1925 = vmatpush1.bf16.msra.mxu0 0
        %1926 = vmatprep.subr.bf16.mxu0 0
        %1927 = vmatpush1.bf16.msra.mxu0 0
        %1928 = vmatprep.subr.bf16.mxu0 0
        %1929 = vmatpush1.bf16.msra.mxu0 0
        %1930 = vmatprep.subr.bf16.mxu0 0
        %1931 = vmatpush1.bf16.msra.mxu0 0
        %1932 = vmatprep.subr.bf16.mxu0 0
        %1933 = vmatpush1.bf16.msra.mxu0 0
        %1934 = vmatprep.subr.bf16.mxu0 0
        %1935 = vmatpush1.bf16.msra.mxu0 0
        %1936 = vmatprep.subr.bf16.mxu0 0
        %1937 = vmatpush1.bf16.msra.mxu0 0
        %1938 = vmatprep.mubr.bf16.mxu0 0
        %1939 = vmatmul.mubr.bf16.gmra.mrb[0].mxu0 %v1827
        %v1940 = vpop.f32.mrb[0].mxu0
        %v1941 = vadd.f32 %v1856, %v1940
        %v1942 = vpop.f32.mrb[0].mxu0
        %v1943 = vpop.f32.mrb[0].mxu0
        %v1944 = vadd.f32 %v1856, %v1943
        %v1945 = vpop.f32.mrb[0].mxu0
        %1946 = vmatprep.mubr.bf16.mxu0 0
        %1947 = vmatmul.mubr.bf16.gmra.mrb[0].mxu0 %v1828
        %v1948 = vpop.f32.mrb[0].mxu0
        %v1949 = vadd.f32 %v1856, %v1948
        %v1950 = vpop.f32.mrb[0].mxu0
        %v1951 = vpop.f32.mrb[0].mxu0
        %v1952 = vadd.f32 %v1856, %v1951
        %v1953 = vpop.f32.mrb[0].mxu0
        %1954 = vmatprep.mubr.bf16.mxu0 0
        %1955 = vmatmul.mubr.bf16.gmra.mrb[0].mxu0 %v1829
        %v1956 = vpop.f32.mrb[0].mxu0
        %v1957 = vadd.f32 %v1856, %v1956
        %v1958 = vpop.f32.mrb[0].mxu0
        %v1959 = vpop.f32.mrb[0].mxu0
        %v1960 = vadd.f32 %v1856, %v1959
        %v1961 = vpop.f32.mrb[0].mxu0
        %1962 = vmatprep.mubr.bf16.mxu0 0
        %1963 = vmatmul.mubr.bf16.gmra.mrb[0].mxu0 %v1830
        %v1964 = vpop.f32.mrb[0].mxu0
        %v1965 = vadd.f32 %v1856, %v1964
        %v1966 = vpop.f32.mrb[0].mxu0
        %v1967 = vpop.f32.mrb[0].mxu0
        %v1968 = vadd.f32 %v1856, %v1967
        %v1969 = vpop.f32.mrb[0].mxu0
        %1970 = vmatprep.mubr.bf16.mxu0 0
        %1971 = vmatmul.mubr.bf16.gmra.mrb[0].mxu0 %v1831
        %v1972 = vpop.f32.mrb[0].mxu0
        %v1973 = vadd.f32 %v1856, %v1972
        %v1974 = vpop.f32.mrb[0].mxu0
        %v1975 = vpop.f32.mrb[0].mxu0
        %v1976 = vadd.f32 %v1856, %v1975
        %v1977 = vpop.f32.mrb[0].mxu0
        %1978 = vmatprep.mubr.bf16.mxu0 0
        %1979 = vmatmul.mubr.bf16.gmra.mrb[0].mxu0 %v1832
        %v1980 = vpop.f32.mrb[0].mxu0
        %v1981 = vadd.f32 %v1856, %v1980
        %v1982 = vpop.f32.mrb[0].mxu0
        %v1983 = vpop.f32.mrb[0].mxu0
        %v1984 = vadd.f32 %v1856, %v1983
        %v1985 = vpop.f32.mrb[0].mxu0
        %1986 = vmatprep.mubr.bf16.mxu0 0
        %1987 = vmatmul.mubr.bf16.gmra.mrb[0].mxu0 %v1833
        %v1988 = vpop.f32.mrb[0].mxu0
        %v1989 = vadd.f32 %v1856, %v1988
        %v1990 = vpop.f32.mrb[0].mxu0
        %v1991 = vpop.f32.mrb[0].mxu0
        %v1992 = vadd.f32 %v1856, %v1991
        %v1993 = vpop.f32.mrb[0].mxu0
        %1994 = vmatprep.mubr.bf16.mxu0 0
        %1995 = vmatmul.mubr.bf16.gmra.mrb[0].mxu0 %v1834
        %v1996 = vpop.f32.mrb[0].mxu0
        %v1997 = vadd.f32 %v1856, %v1996
        %v1998 = vpop.f32.mrb[0].mxu0
        %v1999 = vpop.f32.mrb[0].mxu0
        %v2000 = vadd.f32 %v1856, %v1999
        %v2001 = vpop.f32.mrb[0].mxu0
        %2002 = vdwg.mxu0
        %v2003 = vtanh.pop %v1941
        %v2004 = vtanh.pop %v1944
        %v2005 = vtanh.pop %v1949
        %v2006 = vtanh.pop %v1952
        %v2007 = vtanh.pop %v1957
        %v2008 = vtanh.pop %v1960
        %v2009 = vtanh.pop %v1965
        %v2010 = vtanh.pop %v1968
        %v2011 = vtanh.pop %v1973
        %v2012 = vtanh.pop %v1976
        %v2013 = vtanh.pop %v1981
        %v2014 = vtanh.pop %v1984
        %v2015 = vtanh.pop %v1989
        %v2016 = vtanh.pop %v1992
        %v2017 = vtanh.pop %v1997
        %v2018 = vtanh.pop %v2000
        %v2020 = vlaneseq
        %v2021 = vshrl.u32 %v2020, 7
        %v2022 = vsub.s32 0, %v2021
        %v2023 = vrot.slane %v1702, %v2022
        %v2025 = vmul.f32 %v2003, %v2023
        %v2026 = vmul.f32 %v2004, %v2023
        %v2027 = vmul.f32 %v2005, %v2023
        %v2028 = vmul.f32 %v2006, %v2023
        %v2029 = vmul.f32 %v2007, %v2023
        %v2030 = vmul.f32 %v2008, %v2023
        %v2031 = vmul.f32 %v2009, %v2023
        %v2032 = vmul.f32 %v2010, %v2023
        %v2033 = vmul.f32 %v2011, %v2023
        %v2034 = vmul.f32 %v2012, %v2023
        %v2035 = vmul.f32 %v2013, %v2023
        %v2036 = vmul.f32 %v2014, %v2023
        %v2037 = vmul.f32 %v2015, %v2023
        %v2038 = vmul.f32 %v2016, %v2023
        %v2039 = vmul.f32 %v2017, %v2023
        %v2040 = vmul.f32 %v2018, %v2023
        %2041 = vadd.xlane.f32.xlu0 %v2025
        %v2042 = vpop.xlane.xlu0 %2041
        %2043 = vadd.xlane.f32.xlu0 %v2026
        %v2044 = vpop.xlane.xlu0 %2043
        %2045 = vadd.xlane.f32.xlu0 %v2027
        %v2046 = vpop.xlane.xlu0 %2045
        %2047 = vadd.xlane.f32.xlu0 %v2028
        %v2048 = vpop.xlane.xlu0 %2047
        %2049 = vadd.xlane.f32.xlu0 %v2029
        %v2050 = vpop.xlane.xlu0 %2049
        %2051 = vadd.xlane.f32.xlu0 %v2030
        %v2052 = vpop.xlane.xlu0 %2051
        %2053 = vadd.xlane.f32.xlu0 %v2031
        %v2054 = vpop.xlane.xlu0 %2053
        %2055 = vadd.xlane.f32.xlu0 %v2032
        %v2056 = vpop.xlane.xlu0 %2055
        %2057 = vadd.xlane.f32.xlu0 %v2033
        %v2058 = vpop.xlane.xlu0 %2057
        %2059 = vadd.xlane.f32.xlu0 %v2034
        %v2060 = vpop.xlane.xlu0 %2059
        %2061 = vadd.xlane.f32.xlu0 %v2035
        %v2062 = vpop.xlane.xlu0 %2061
        %2063 = vadd.xlane.f32.xlu0 %v2036
        %v2064 = vpop.xlane.xlu0 %2063
        %2065 = vadd.xlane.f32.xlu0 %v2037
        %v2066 = vpop.xlane.xlu0 %2065
        %2067 = vadd.xlane.f32.xlu0 %v2038
        %v2068 = vpop.xlane.xlu0 %2067
        %2069 = vadd.xlane.f32.xlu0 %v2039
        %v2070 = vpop.xlane.xlu0 %2069
        %2071 = vadd.xlane.f32.xlu0 %v2040
        %v2072 = vpop.xlane.xlu0 %2071
        %v2089 = vlaneseq
        %v2090 = vand.u32 %v2089, 127
        %v2091 = vlaneseq
        %v2092 = vshrl.u32 %v2091, 7
        %v2093 = vsub.s32 %v2090, %v2092
        %v2094 = vrot.slane %v2042, %v2093
        %v2095 = vadd.s32 %v2090, 4294967288
        %v2096 = vlaneseq
        %v2097 = vshrl.u32 %v2096, 7
        %v2098 = vsub.s32 %v2095, %v2097
        %v2099 = vrot.slane %v2044, %v2098
        %vm2100 = vcmask 130112
        %v2101 = vsel %vm2100, %v2099, %v2094
        %v2102 = vlaneseq
        %v2103 = vshrl.u32 %v2102, 7
        %v2104 = vsub.s32 %v2090, %v2103
        %v2105 = vrot.slane %v2046, %v2104
        %v2106 = vlaneseq
        %v2107 = vshrl.u32 %v2106, 7
        %v2108 = vsub.s32 %v2095, %v2107
        %v2109 = vrot.slane %v2048, %v2108
        %v2110 = vsel %vm2100, %v2109, %v2105
        %v2111 = vlaneseq
        %v2112 = vshrl.u32 %v2111, 7
        %v2113 = vsub.s32 %v2090, %v2112
        %v2114 = vrot.slane %v2050, %v2113
        %v2115 = vlaneseq
        %v2116 = vshrl.u32 %v2115, 7
        %v2117 = vsub.s32 %v2095, %v2116
        %v2118 = vrot.slane %v2052, %v2117
        %v2119 = vsel %vm2100, %v2118, %v2114
        %v2120 = vlaneseq
        %v2121 = vshrl.u32 %v2120, 7
        %v2122 = vsub.s32 %v2090, %v2121
        %v2123 = vrot.slane %v2054, %v2122
        %v2124 = vlaneseq
        %v2125 = vshrl.u32 %v2124, 7
        %v2126 = vsub.s32 %v2095, %v2125
        %v2127 = vrot.slane %v2056, %v2126
        %v2128 = vsel %vm2100, %v2127, %v2123
        %v2129 = vlaneseq
        %v2130 = vshrl.u32 %v2129, 7
        %v2131 = vsub.s32 %v2090, %v2130
        %v2132 = vrot.slane %v2058, %v2131
        %v2133 = vlaneseq
        %v2134 = vshrl.u32 %v2133, 7
        %v2135 = vsub.s32 %v2095, %v2134
        %v2136 = vrot.slane %v2060, %v2135
        %v2137 = vsel %vm2100, %v2136, %v2132
        %v2138 = vlaneseq
        %v2139 = vshrl.u32 %v2138, 7
        %v2140 = vsub.s32 %v2090, %v2139
        %v2141 = vrot.slane %v2062, %v2140
        %v2142 = vlaneseq
        %v2143 = vshrl.u32 %v2142, 7
        %v2144 = vsub.s32 %v2095, %v2143
        %v2145 = vrot.slane %v2064, %v2144
        %v2146 = vsel %vm2100, %v2145, %v2141
        %v2147 = vlaneseq
        %v2148 = vshrl.u32 %v2147, 7
        %v2149 = vsub.s32 %v2090, %v2148
        %v2150 = vrot.slane %v2066, %v2149
        %v2151 = vlaneseq
        %v2152 = vshrl.u32 %v2151, 7
        %v2153 = vsub.s32 %v2095, %v2152
        %v2154 = vrot.slane %v2068, %v2153
        %v2155 = vsel %vm2100, %v2154, %v2150
        %v2156 = vlaneseq
        %v2157 = vshrl.u32 %v2156, 7
        %v2158 = vsub.s32 %v2090, %v2157
        %v2159 = vrot.slane %v2070, %v2158
        %v2160 = vlaneseq
        %v2161 = vshrl.u32 %v2160, 7
        %v2162 = vsub.s32 %v2095, %v2161
        %v2163 = vrot.slane %v2072, %v2162
        %v2164 = vsel %vm2100, %v2163, %v2159
        %vm2165 = vcmask 1041409
        %v2166 = vsel %vm2165, %v2110, %v2101
        %vm2167 = vcmask 1042434
        %v2168 = vsel %vm2167, %v2119, %v2166
        %vm2169 = vcmask 1043459
        %v2170 = vsel %vm2169, %v2128, %v2168
        %vm2171 = vcmask 1044484
        %v2172 = vsel %vm2171, %v2137, %v2170
        %vm2173 = vcmask 1045509
        %v2174 = vsel %vm2173, %v2146, %v2172
        %vm2175 = vcmask 1046534
        %v2176 = vsel %vm2175, %v2155, %v2174
        %vm2177 = vcmask 1047559
        %v2178 = vsel %vm2177, %v2164, %v2176
        %vm2180 = vcmask 130048
        %2181 = vst.msk [vmem:[#allocation7] sm:$0xff] %vm2180, %v2178
        %v2182 = vld [vmem:[#allocation5 + $0x10] sm:$0xff]
        %v2183 = vld [vmem:[#allocation5 + $0x18] sm:$0xff]
        %v2184 = vadd.f32 %v1758, %v2182
        %v2185 = vadd.f32 %v1758, %v2183
        %v2186 = vadd.f32 %v1762, %v2182
        %v2187 = vadd.f32 %v1762, %v2183
        %v2188 = vadd.f32 %v1766, %v2182
        %v2189 = vadd.f32 %v1766, %v2183
        %v2190 = vadd.f32 %v1770, %v2182
        %v2191 = vadd.f32 %v1770, %v2183
        %v2192 = vadd.f32 %v1774, %v2182
        %v2193 = vadd.f32 %v1774, %v2183
        %v2194 = vadd.f32 %v1778, %v2182
        %v2195 = vadd.f32 %v1778, %v2183
        %v2196 = vadd.f32 %v1782, %v2182
        %v2197 = vadd.f32 %v1782, %v2183
        %v2198 = vadd.f32 %v1786, %v2182
        %v2199 = vadd.f32 %v1786, %v2183
        %v2200 = vtanh.pop %v2184
        %v2201 = vtanh.pop %v2185
        %v2202 = vtanh.pop %v2186
        %v2203 = vtanh.pop %v2187
        %v2204 = vtanh.pop %v2188
        %v2205 = vtanh.pop %v2189
        %v2206 = vtanh.pop %v2190
        %v2207 = vtanh.pop %v2191
        %v2208 = vtanh.pop %v2192
        %v2209 = vtanh.pop %v2193
        %v2210 = vtanh.pop %v2194
        %v2211 = vtanh.pop %v2195
        %v2212 = vtanh.pop %v2196
        %v2213 = vtanh.pop %v2197
        %v2214 = vtanh.pop %v2198
        %v2215 = vtanh.pop %v2199
        %v2216 = vpack.c.bf16 %v2201, %v2200
        %v2217 = vpack.c.bf16 %v2203, %v2202
        %v2218 = vpack.c.bf16 %v2205, %v2204
        %v2219 = vpack.c.bf16 %v2207, %v2206
        %v2220 = vpack.c.bf16 %v2209, %v2208
        %v2221 = vpack.c.bf16 %v2211, %v2210
        %v2222 = vpack.c.bf16 %v2213, %v2212
        %v2223 = vpack.c.bf16 %v2215, %v2214
        %v2224 = vld [vmem:[#allocation23] sm:$0xf]
        %v2225 = vld [vmem:[#allocation23 + $0x4] sm:$0xf]
        %v2226 = vld [vmem:[#allocation23 + $0x8] sm:$0xf]
        %v2227 = vld [vmem:[#allocation23 + $0xc] sm:$0xf]
        %v2228 = vld [vmem:[#allocation23 + $0x10] sm:$0xf]
        %v2229 = vld [vmem:[#allocation23 + $0x14] sm:$0xf]
        %v2230 = vld [vmem:[#allocation23 + $0x18] sm:$0xf]
        %v2231 = vld [vmem:[#allocation23 + $0x1c] sm:$0xf]
        %v2232 = vld [vmem:[#allocation23 + $0x20] sm:$0xf]
        %v2233 = vld [vmem:[#allocation23 + $0x24] sm:$0xf]
        %v2234 = vld [vmem:[#allocation23 + $0x28] sm:$0xf]
        %v2235 = vld [vmem:[#allocation23 + $0x2c] sm:$0xf]
        %v2236 = vld [vmem:[#allocation23 + $0x30] sm:$0xf]
        %v2237 = vld [vmem:[#allocation23 + $0x34] sm:$0xf]
        %v2238 = vld [vmem:[#allocation23 + $0x38] sm:$0xf]
        %v2239 = vld [vmem:[#allocation23 + $0x3c] sm:$0xf]
        %v2240 = vld [vmem:[%s13] sm:$0x1]
        %v2242 = vlaneseq
        %v2243 = vshrl.u32 %v2242, 7
        %v2244 = vsub.s32 0, %v2243
        %v2245 = vrot.slane %v2240, %v2244
        %v2263 = vunpack.c.l.b16 %v2224
        %v2264 = vunpack.c.l.b16 %v2225
        %v2265 = vunpack.c.l.b16 %v2226
        %v2266 = vunpack.c.l.b16 %v2227
        %v2267 = vunpack.c.l.b16 %v2228
        %v2268 = vunpack.c.l.b16 %v2229
        %v2269 = vunpack.c.l.b16 %v2230
        %v2270 = vunpack.c.l.b16 %v2231
        %v2271 = vunpack.c.l.b16 %v2232
        %v2272 = vunpack.c.l.b16 %v2233
        %v2273 = vunpack.c.l.b16 %v2234
        %v2274 = vunpack.c.l.b16 %v2235
        %v2275 = vunpack.c.l.b16 %v2236
        %v2276 = vunpack.c.l.b16 %v2237
        %v2277 = vunpack.c.l.b16 %v2238
        %v2278 = vunpack.c.l.b16 %v2239
        %v2279 = vpack.c.b16 %v2264, %v2263
        %v2280 = vpack.c.b16 %v2266, %v2265
        %v2281 = vpack.c.b16 %v2268, %v2267
        %v2282 = vpack.c.b16 %v2270, %v2269
        %v2283 = vpack.c.b16 %v2272, %v2271
        %v2284 = vpack.c.b16 %v2274, %v2273
        %v2285 = vpack.c.b16 %v2276, %v2275
        %v2286 = vpack.c.b16 %v2278, %v2277
        %2295 = vmatprep.subr.bf16.mxu0 0
        %2296 = vmatpush1.bf16.msra.mxu0 %v2279
        %2297 = vmatprep.subr.bf16.mxu0 0
        %2298 = vmatpush1.bf16.msra.mxu0 %v2280
        %2299 = vmatprep.subr.bf16.mxu0 0
        %2300 = vmatpush1.bf16.msra.mxu0 %v2281
        %2301 = vmatprep.subr.bf16.mxu0 0
        %2302 = vmatpush1.bf16.msra.mxu0 %v2282
        %2303 = vmatprep.subr.bf16.mxu0 0
        %2304 = vmatpush1.bf16.msra.mxu0 %v2283
        %2305 = vmatprep.subr.bf16.mxu0 0
        %2306 = vmatpush1.bf16.msra.mxu0 %v2284
        %2307 = vmatprep.subr.bf16.mxu0 0
        %2308 = vmatpush1.bf16.msra.mxu0 %v2285
        %2309 = vmatprep.subr.bf16.mxu0 0
        %2310 = vmatpush1.bf16.msra.mxu0 %v2286
        %2311 = vmatprep.subr.bf16.mxu0 0
        %2312 = vmatpush1.bf16.msra.mxu0 0
        %2313 = vmatprep.subr.bf16.mxu0 0
        %2314 = vmatpush1.bf16.msra.mxu0 0
        %2315 = vmatprep.subr.bf16.mxu0 0
        %2316 = vmatpush1.bf16.msra.mxu0 0
        %2317 = vmatprep.subr.bf16.mxu0 0
        %2318 = vmatpush1.bf16.msra.mxu0 0
        %2319 = vmatprep.subr.bf16.mxu0 0
        %2320 = vmatpush1.bf16.msra.mxu0 0
        %2321 = vmatprep.subr.bf16.mxu0 0
        %2322 = vmatpush1.bf16.msra.mxu0 0
        %2323 = vmatprep.subr.bf16.mxu0 0
        %2324 = vmatpush1.bf16.msra.mxu0 0
        %2325 = vmatprep.subr.bf16.mxu0 0
        %2326 = vmatpush1.bf16.msra.mxu0 0
        %2327 = vmatprep.mubr.bf16.mxu0 0
        %2328 = vmatmul.mubr.bf16.gmra.mrb[0].mxu0 %v2216
        %v2329 = vpop.f32.mrb[0].mxu0
        %v2330 = vadd.f32 %v2245, %v2329
        %v2331 = vpop.f32.mrb[0].mxu0
        %v2332 = vpop.f32.mrb[0].mxu0
        %v2333 = vadd.f32 %v2245, %v2332
        %v2334 = vpop.f32.mrb[0].mxu0
        %2335 = vmatprep.mubr.bf16.mxu0 0
        %2336 = vmatmul.mubr.bf16.gmra.mrb[0].mxu0 %v2217
        %v2337 = vpop.f32.mrb[0].mxu0
        %v2338 = vadd.f32 %v2245, %v2337
        %v2339 = vpop.f32.mrb[0].mxu0
        %v2340 = vpop.f32.mrb[0].mxu0
        %v2341 = vadd.f32 %v2245, %v2340
        %v2342 = vpop.f32.mrb[0].mxu0
        %2343 = vmatprep.mubr.bf16.mxu0 0
        %2344 = vmatmul.mubr.bf16.gmra.mrb[0].mxu0 %v2218
        %v2345 = vpop.f32.mrb[0].mxu0
        %v2346 = vadd.f32 %v2245, %v2345
        %v2347 = vpop.f32.mrb[0].mxu0
        %v2348 = vpop.f32.mrb[0].mxu0
        %v2349 = vadd.f32 %v2245, %v2348
        %v2350 = vpop.f32.mrb[0].mxu0
        %2351 = vmatprep.mubr.bf16.mxu0 0
        %2352 = vmatmul.mubr.bf16.gmra.mrb[0].mxu0 %v2219
        %v2353 = vpop.f32.mrb[0].mxu0
        %v2354 = vadd.f32 %v2245, %v2353
        %v2355 = vpop.f32.mrb[0].mxu0
        %v2356 = vpop.f32.mrb[0].mxu0
        %v2357 = vadd.f32 %v2245, %v2356
        %v2358 = vpop.f32.mrb[0].mxu0
        %2359 = vmatprep.mubr.bf16.mxu0 0
        %2360 = vmatmul.mubr.bf16.gmra.mrb[0].mxu0 %v2220
        %v2361 = vpop.f32.mrb[0].mxu0
        %v2362 = vadd.f32 %v2245, %v2361
        %v2363 = vpop.f32.mrb[0].mxu0
        %v2364 = vpop.f32.mrb[0].mxu0
        %v2365 = vadd.f32 %v2245, %v2364
        %v2366 = vpop.f32.mrb[0].mxu0
        %2367 = vmatprep.mubr.bf16.mxu0 0
        %2368 = vmatmul.mubr.bf16.gmra.mrb[0].mxu0 %v2221
        %v2369 = vpop.f32.mrb[0].mxu0
        %v2370 = vadd.f32 %v2245, %v2369
        %v2371 = vpop.f32.mrb[0].mxu0
        %v2372 = vpop.f32.mrb[0].mxu0
        %v2373 = vadd.f32 %v2245, %v2372
        %v2374 = vpop.f32.mrb[0].mxu0
        %2375 = vmatprep.mubr.bf16.mxu0 0
        %2376 = vmatmul.mubr.bf16.gmra.mrb[0].mxu0 %v2222
        %v2377 = vpop.f32.mrb[0].mxu0
        %v2378 = vadd.f32 %v2245, %v2377
        %v2379 = vpop.f32.mrb[0].mxu0
        %v2380 = vpop.f32.mrb[0].mxu0
        %v2381 = vadd.f32 %v2245, %v2380
        %v2382 = vpop.f32.mrb[0].mxu0
        %2383 = vmatprep.mubr.bf16.mxu0 0
        %2384 = vmatmul.mubr.bf16.gmra.mrb[0].mxu0 %v2223
        %v2385 = vpop.f32.mrb[0].mxu0
        %v2386 = vadd.f32 %v2245, %v2385
        %v2387 = vpop.f32.mrb[0].mxu0
        %v2388 = vpop.f32.mrb[0].mxu0
        %v2389 = vadd.f32 %v2245, %v2388
        %v2390 = vpop.f32.mrb[0].mxu0
        %2391 = vdwg.mxu0
        %v2392 = vtanh.pop %v2330
        %v2393 = vtanh.pop %v2333
        %v2394 = vtanh.pop %v2338
        %v2395 = vtanh.pop %v2341
        %v2396 = vtanh.pop %v2346
        %v2397 = vtanh.pop %v2349
        %v2398 = vtanh.pop %v2354
        %v2399 = vtanh.pop %v2357
        %v2400 = vtanh.pop %v2362
        %v2401 = vtanh.pop %v2365
        %v2402 = vtanh.pop %v2370
        %v2403 = vtanh.pop %v2373
        %v2404 = vtanh.pop %v2378
        %v2405 = vtanh.pop %v2381
        %v2406 = vtanh.pop %v2386
        %v2407 = vtanh.pop %v2389
        %v2408 = vmul.f32 %v2392, %v2023
        %v2409 = vmul.f32 %v2393, %v2023
        %v2410 = vmul.f32 %v2394, %v2023
        %v2411 = vmul.f32 %v2395, %v2023
        %v2412 = vmul.f32 %v2396, %v2023
        %v2413 = vmul.f32 %v2397, %v2023
        %v2414 = vmul.f32 %v2398, %v2023
        %v2415 = vmul.f32 %v2399, %v2023
        %v2416 = vmul.f32 %v2400, %v2023
        %v2417 = vmul.f32 %v2401, %v2023
        %v2418 = vmul.f32 %v2402, %v2023
        %v2419 = vmul.f32 %v2403, %v2023
        %v2420 = vmul.f32 %v2404, %v2023
        %v2421 = vmul.f32 %v2405, %v2023
        %v2422 = vmul.f32 %v2406, %v2023
        %v2423 = vmul.f32 %v2407, %v2023
        %2424 = vadd.xlane.f32.xlu0 %v2408
        %v2425 = vpop.xlane.xlu0 %2424
        %2426 = vadd.xlane.f32.xlu0 %v2409
        %v2427 = vpop.xlane.xlu0 %2426
        %2428 = vadd.xlane.f32.xlu0 %v2410
        %v2429 = vpop.xlane.xlu0 %2428
        %2430 = vadd.xlane.f32.xlu0 %v2411
        %v2431 = vpop.xlane.xlu0 %2430
        %2432 = vadd.xlane.f32.xlu0 %v2412
        %v2433 = vpop.xlane.xlu0 %2432
        %2434 = vadd.xlane.f32.xlu0 %v2413
        %v2435 = vpop.xlane.xlu0 %2434
        %2436 = vadd.xlane.f32.xlu0 %v2414
        %v2437 = vpop.xlane.xlu0 %2436
        %2438 = vadd.xlane.f32.xlu0 %v2415
        %v2439 = vpop.xlane.xlu0 %2438
        %2440 = vadd.xlane.f32.xlu0 %v2416
        %v2441 = vpop.xlane.xlu0 %2440
        %2442 = vadd.xlane.f32.xlu0 %v2417
        %v2443 = vpop.xlane.xlu0 %2442
        %2444 = vadd.xlane.f32.xlu0 %v2418
        %v2445 = vpop.xlane.xlu0 %2444
        %2446 = vadd.xlane.f32.xlu0 %v2419
        %v2447 = vpop.xlane.xlu0 %2446
        %2448 = vadd.xlane.f32.xlu0 %v2420
        %v2449 = vpop.xlane.xlu0 %2448
        %2450 = vadd.xlane.f32.xlu0 %v2421
        %v2451 = vpop.xlane.xlu0 %2450
        %2452 = vadd.xlane.f32.xlu0 %v2422
        %v2453 = vpop.xlane.xlu0 %2452
        %2454 = vadd.xlane.f32.xlu0 %v2423
        %v2455 = vpop.xlane.xlu0 %2454
        %v2472 = vadd.s32 %v2090, 4294967280
        %v2473 = vlaneseq
        %v2474 = vshrl.u32 %v2473, 7
        %v2475 = vsub.s32 %v2472, %v2474
        %v2476 = vrot.slane %v2425, %v2475
        %v2477 = vadd.s32 %v2090, 4294967272
        %v2478 = vlaneseq
        %v2479 = vshrl.u32 %v2478, 7
        %v2480 = vsub.s32 %v2477, %v2479
        %v2481 = vrot.slane %v2427, %v2480
        %vm2482 = vcmask 261312
        %v2483 = vsel %vm2482, %v2481, %v2476
        %v2484 = vlaneseq
        %v2485 = vshrl.u32 %v2484, 7
        %v2486 = vsub.s32 %v2472, %v2485
        %v2487 = vrot.slane %v2429, %v2486
        %v2488 = vlaneseq
        %v2489 = vshrl.u32 %v2488, 7
        %v2490 = vsub.s32 %v2477, %v2489
        %v2491 = vrot.slane %v2431, %v2490
        %v2492 = vsel %vm2482, %v2491, %v2487
        %v2493 = vlaneseq
        %v2494 = vshrl.u32 %v2493, 7
        %v2495 = vsub.s32 %v2472, %v2494
        %v2496 = vrot.slane %v2433, %v2495
        %v2497 = vlaneseq
        %v2498 = vshrl.u32 %v2497, 7
        %v2499 = vsub.s32 %v2477, %v2498
        %v2500 = vrot.slane %v2435, %v2499
        %v2501 = vsel %vm2482, %v2500, %v2496
        %v2502 = vlaneseq
        %v2503 = vshrl.u32 %v2502, 7
        %v2504 = vsub.s32 %v2472, %v2503
        %v2505 = vrot.slane %v2437, %v2504
        %v2506 = vlaneseq
        %v2507 = vshrl.u32 %v2506, 7
        %v2508 = vsub.s32 %v2477, %v2507
        %v2509 = vrot.slane %v2439, %v2508
        %v2510 = vsel %vm2482, %v2509, %v2505
        %v2511 = vlaneseq
        %v2512 = vshrl.u32 %v2511, 7
        %v2513 = vsub.s32 %v2472, %v2512
        %v2514 = vrot.slane %v2441, %v2513
        %v2515 = vlaneseq
        %v2516 = vshrl.u32 %v2515, 7
        %v2517 = vsub.s32 %v2477, %v2516
        %v2518 = vrot.slane %v2443, %v2517
        %v2519 = vsel %vm2482, %v2518, %v2514
        %v2520 = vlaneseq
        %v2521 = vshrl.u32 %v2520, 7
        %v2522 = vsub.s32 %v2472, %v2521
        %v2523 = vrot.slane %v2445, %v2522
        %v2524 = vlaneseq
        %v2525 = vshrl.u32 %v2524, 7
        %v2526 = vsub.s32 %v2477, %v2525
        %v2527 = vrot.slane %v2447, %v2526
        %v2528 = vsel %vm2482, %v2527, %v2523
        %v2529 = vlaneseq
        %v2530 = vshrl.u32 %v2529, 7
        %v2531 = vsub.s32 %v2472, %v2530
        %v2532 = vrot.slane %v2449, %v2531
        %v2533 = vlaneseq
        %v2534 = vshrl.u32 %v2533, 7
        %v2535 = vsub.s32 %v2477, %v2534
        %v2536 = vrot.slane %v2451, %v2535
        %v2537 = vsel %vm2482, %v2536, %v2532
        %v2538 = vlaneseq
        %v2539 = vshrl.u32 %v2538, 7
        %v2540 = vsub.s32 %v2472, %v2539
        %v2541 = vrot.slane %v2453, %v2540
        %v2542 = vlaneseq
        %v2543 = vshrl.u32 %v2542, 7
        %v2544 = vsub.s32 %v2477, %v2543
        %v2545 = vrot.slane %v2455, %v2544
        %v2546 = vsel %vm2482, %v2545, %v2541
        %v2547 = vsel %vm2165, %v2492, %v2483
        %v2548 = vsel %vm2167, %v2501, %v2547
        %v2549 = vsel %vm2169, %v2510, %v2548
        %v2550 = vsel %vm2171, %v2519, %v2549
        %v2551 = vsel %vm2173, %v2528, %v2550
        %v2552 = vsel %vm2175, %v2537, %v2551
        %v2553 = vsel %vm2177, %v2546, %v2552
        %vm2555 = vcmask 261248
        %2556 = vst.msk [vmem:[#allocation7] sm:$0xff] %vm2555, %v2553
        %v2557 = vld [vmem:[#allocation5 + $0x20] sm:$0xff]
        %v2558 = vld [vmem:[#allocation5 + $0x28] sm:$0xff]
        %v2559 = vadd.f32 %v1758, %v2557
        %v2560 = vadd.f32 %v1758, %v2558
        %v2561 = vadd.f32 %v1762, %v2557
        %v2562 = vadd.f32 %v1762, %v2558
        %v2563 = vadd.f32 %v1766, %v2557
        %v2564 = vadd.f32 %v1766, %v2558
        %v2565 = vadd.f32 %v1770, %v2557
        %v2566 = vadd.f32 %v1770, %v2558
        %v2567 = vadd.f32 %v1774, %v2557
        %v2568 = vadd.f32 %v1774, %v2558
        %v2569 = vadd.f32 %v1778, %v2557
        %v2570 = vadd.f32 %v1778, %v2558
        %v2571 = vadd.f32 %v1782, %v2557
        %v2572 = vadd.f32 %v1782, %v2558
        %v2573 = vadd.f32 %v1786, %v2557
        %v2574 = vadd.f32 %v1786, %v2558
        %v2575 = vtanh.pop %v2559
        %v2576 = vtanh.pop %v2560
        %v2577 = vtanh.pop %v2561
        %v2578 = vtanh.pop %v2562
        %v2579 = vtanh.pop %v2563
        %v2580 = vtanh.pop %v2564
        %v2581 = vtanh.pop %v2565
        %v2582 = vtanh.pop %v2566
        %v2583 = vtanh.pop %v2567
        %v2584 = vtanh.pop %v2568
        %v2585 = vtanh.pop %v2569
        %v2586 = vtanh.pop %v2570
        %v2587 = vtanh.pop %v2571
        %v2588 = vtanh.pop %v2572
        %v2589 = vtanh.pop %v2573
        %v2590 = vtanh.pop %v2574
        %v2591 = vpack.c.bf16 %v2576, %v2575
        %v2592 = vpack.c.bf16 %v2578, %v2577
        %v2593 = vpack.c.bf16 %v2580, %v2579
        %v2594 = vpack.c.bf16 %v2582, %v2581
        %v2595 = vpack.c.bf16 %v2584, %v2583
        %v2596 = vpack.c.bf16 %v2586, %v2585
        %v2597 = vpack.c.bf16 %v2588, %v2587
        %v2598 = vpack.c.bf16 %v2590, %v2589
        %v2599 = vld [vmem:[#allocation23] sm:$0xf]
        %v2600 = vld [vmem:[#allocation23 + $0x4] sm:$0xf]
        %v2601 = vld [vmem:[#allocation23 + $0x8] sm:$0xf]
        %v2602 = vld [vmem:[#allocation23 + $0xc] sm:$0xf]
        %v2603 = vld [vmem:[#allocation23 + $0x10] sm:$0xf]
        %v2604 = vld [vmem:[#allocation23 + $0x14] sm:$0xf]
        %v2605 = vld [vmem:[#allocation23 + $0x18] sm:$0xf]
        %v2606 = vld [vmem:[#allocation23 + $0x1c] sm:$0xf]
        %v2607 = vld [vmem:[#allocation23 + $0x20] sm:$0xf]
        %v2608 = vld [vmem:[#allocation23 + $0x24] sm:$0xf]
        %v2609 = vld [vmem:[#allocation23 + $0x28] sm:$0xf]
        %v2610 = vld [vmem:[#allocation23 + $0x2c] sm:$0xf]
        %v2611 = vld [vmem:[#allocation23 + $0x30] sm:$0xf]
        %v2612 = vld [vmem:[#allocation23 + $0x34] sm:$0xf]
        %v2613 = vld [vmem:[#allocation23 + $0x38] sm:$0xf]
        %v2614 = vld [vmem:[#allocation23 + $0x3c] sm:$0xf]
        %v2615 = vld [vmem:[%s13] sm:$0x1]
        %v2617 = vlaneseq
        %v2618 = vshrl.u32 %v2617, 7
        %v2619 = vsub.s32 0, %v2618
        %v2620 = vrot.slane %v2615, %v2619
        %v2638 = vunpack.c.l.b16 %v2599
        %v2639 = vunpack.c.l.b16 %v2600
        %v2640 = vunpack.c.l.b16 %v2601
        %v2641 = vunpack.c.l.b16 %v2602
        %v2642 = vunpack.c.l.b16 %v2603
        %v2643 = vunpack.c.l.b16 %v2604
        %v2644 = vunpack.c.l.b16 %v2605
        %v2645 = vunpack.c.l.b16 %v2606
        %v2646 = vunpack.c.l.b16 %v2607
        %v2647 = vunpack.c.l.b16 %v2608
        %v2648 = vunpack.c.l.b16 %v2609
        %v2649 = vunpack.c.l.b16 %v2610
        %v2650 = vunpack.c.l.b16 %v2611
        %v2651 = vunpack.c.l.b16 %v2612
        %v2652 = vunpack.c.l.b16 %v2613
        %v2653 = vunpack.c.l.b16 %v2614
        %v2654 = vpack.c.b16 %v2639, %v2638
        %v2655 = vpack.c.b16 %v2641, %v2640
        %v2656 = vpack.c.b16 %v2643, %v2642
        %v2657 = vpack.c.b16 %v2645, %v2644
        %v2658 = vpack.c.b16 %v2647, %v2646
        %v2659 = vpack.c.b16 %v2649, %v2648
        %v2660 = vpack.c.b16 %v2651, %v2650
        %v2661 = vpack.c.b16 %v2653, %v2652
        %2670 = vmatprep.subr.bf16.mxu0 0
        %2671 = vmatpush1.bf16.msra.mxu0 %v2654
        %2672 = vmatprep.subr.bf16.mxu0 0
        %2673 = vmatpush1.bf16.msra.mxu0 %v2655
        %2674 = vmatprep.subr.bf16.mxu0 0
        %2675 = vmatpush1.bf16.msra.mxu0 %v2656
        %2676 = vmatprep.subr.bf16.mxu0 0
        %2677 = vmatpush1.bf16.msra.mxu0 %v2657
        %2678 = vmatprep.subr.bf16.mxu0 0
        %2679 = vmatpush1.bf16.msra.mxu0 %v2658
        %2680 = vmatprep.subr.bf16.mxu0 0
        %2681 = vmatpush1.bf16.msra.mxu0 %v2659
        %2682 = vmatprep.subr.bf16.mxu0 0
        %2683 = vmatpush1.bf16.msra.mxu0 %v2660
        %2684 = vmatprep.subr.bf16.mxu0 0
        %2685 = vmatpush1.bf16.msra.mxu0 %v2661
        %2686 = vmatprep.subr.bf16.mxu0 0
        %2687 = vmatpush1.bf16.msra.mxu0 0
        %2688 = vmatprep.subr.bf16.mxu0 0
        %2689 = vmatpush1.bf16.msra.mxu0 0
        %2690 = vmatprep.subr.bf16.mxu0 0
        %2691 = vmatpush1.bf16.msra.mxu0 0
        %2692 = vmatprep.subr.bf16.mxu0 0
        %2693 = vmatpush1.bf16.msra.mxu0 0
        %2694 = vmatprep.subr.bf16.mxu0 0
        %2695 = vmatpush1.bf16.msra.mxu0 0
        %2696 = vmatprep.subr.bf16.mxu0 0
        %2697 = vmatpush1.bf16.msra.mxu0 0
        %2698 = vmatprep.subr.bf16.mxu0 0
        %2699 = vmatpush1.bf16.msra.mxu0 0
        %2700 = vmatprep.subr.bf16.mxu0 0
        %2701 = vmatpush1.bf16.msra.mxu0 0
        %2702 = vmatprep.mubr.bf16.mxu0 0
        %2703 = vmatmul.mubr.bf16.gmra.mrb[0].mxu0 %v2591
        %v2704 = vpop.f32.mrb[0].mxu0
        %v2705 = vadd.f32 %v2620, %v2704
        %v2706 = vpop.f32.mrb[0].mxu0
        %v2707 = vpop.f32.mrb[0].mxu0
        %v2708 = vadd.f32 %v2620, %v2707
        %v2709 = vpop.f32.mrb[0].mxu0
        %2710 = vmatprep.mubr.bf16.mxu0 0
        %2711 = vmatmul.mubr.bf16.gmra.mrb[0].mxu0 %v2592
        %v2712 = vpop.f32.mrb[0].mxu0
        %v2713 = vadd.f32 %v2620, %v2712
        %v2714 = vpop.f32.mrb[0].mxu0
        %v2715 = vpop.f32.mrb[0].mxu0
        %v2716 = vadd.f32 %v2620, %v2715
        %v2717 = vpop.f32.mrb[0].mxu0
        %2718 = vmatprep.mubr.bf16.mxu0 0
        %2719 = vmatmul.mubr.bf16.gmra.mrb[0].mxu0 %v2593
        %v2720 = vpop.f32.mrb[0].mxu0
        %v2721 = vadd.f32 %v2620, %v2720
        %v2722 = vpop.f32.mrb[0].mxu0
        %v2723 = vpop.f32.mrb[0].mxu0
        %v2724 = vadd.f32 %v2620, %v2723
        %v2725 = vpop.f32.mrb[0].mxu0
        %2726 = vmatprep.mubr.bf16.mxu0 0
        %2727 = vmatmul.mubr.bf16.gmra.mrb[0].mxu0 %v2594
        %v2728 = vpop.f32.mrb[0].mxu0
        %v2729 = vadd.f32 %v2620, %v2728
        %v2730 = vpop.f32.mrb[0].mxu0
        %v2731 = vpop.f32.mrb[0].mxu0
        %v2732 = vadd.f32 %v2620, %v2731
        %v2733 = vpop.f32.mrb[0].mxu0
        %2734 = vmatprep.mubr.bf16.mxu0 0
        %2735 = vmatmul.mubr.bf16.gmra.mrb[0].mxu0 %v2595
        %v2736 = vpop.f32.mrb[0].mxu0
        %v2737 = vadd.f32 %v2620, %v2736
        %v2738 = vpop.f32.mrb[0].mxu0
        %v2739 = vpop.f32.mrb[0].mxu0
        %v2740 = vadd.f32 %v2620, %v2739
        %v2741 = vpop.f32.mrb[0].mxu0
        %2742 = vmatprep.mubr.bf16.mxu0 0
        %2743 = vmatmul.mubr.bf16.gmra.mrb[0].mxu0 %v2596
        %v2744 = vpop.f32.mrb[0].mxu0
        %v2745 = vadd.f32 %v2620, %v2744
        %v2746 = vpop.f32.mrb[0].mxu0
        %v2747 = vpop.f32.mrb[0].mxu0
        %v2748 = vadd.f32 %v2620, %v2747
        %v2749 = vpop.f32.mrb[0].mxu0
        %2750 = vmatprep.mubr.bf16.mxu0 0
        %2751 = vmatmul.mubr.bf16.gmra.mrb[0].mxu0 %v2597
        %v2752 = vpop.f32.mrb[0].mxu0
        %v2753 = vadd.f32 %v2620, %v2752
        %v2754 = vpop.f32.mrb[0].mxu0
        %v2755 = vpop.f32.mrb[0].mxu0
        %v2756 = vadd.f32 %v2620, %v2755
        %v2757 = vpop.f32.mrb[0].mxu0
        %2758 = vmatprep.mubr.bf16.mxu0 0
        %2759 = vmatmul.mubr.bf16.gmra.mrb[0].mxu0 %v2598
        %v2760 = vpop.f32.mrb[0].mxu0
        %v2761 = vadd.f32 %v2620, %v2760
        %v2762 = vpop.f32.mrb[0].mxu0
        %v2763 = vpop.f32.mrb[0].mxu0
        %v2764 = vadd.f32 %v2620, %v2763
        %v2765 = vpop.f32.mrb[0].mxu0
        %2766 = vdwg.mxu0
        %v2767 = vtanh.pop %v2705
        %v2768 = vtanh.pop %v2708
        %v2769 = vtanh.pop %v2713
        %v2770 = vtanh.pop %v2716
        %v2771 = vtanh.pop %v2721
        %v2772 = vtanh.pop %v2724
        %v2773 = vtanh.pop %v2729
        %v2774 = vtanh.pop %v2732
        %v2775 = vtanh.pop %v2737
        %v2776 = vtanh.pop %v2740
        %v2777 = vtanh.pop %v2745
        %v2778 = vtanh.pop %v2748
        %v2779 = vtanh.pop %v2753
        %v2780 = vtanh.pop %v2756
        %v2781 = vtanh.pop %v2761
        %v2782 = vtanh.pop %v2764
        %v2783 = vmul.f32 %v2767, %v2023
        %v2784 = vmul.f32 %v2768, %v2023
        %v2785 = vmul.f32 %v2769, %v2023
        %v2786 = vmul.f32 %v2770, %v2023
        %v2787 = vmul.f32 %v2771, %v2023
        %v2788 = vmul.f32 %v2772, %v2023
        %v2789 = vmul.f32 %v2773, %v2023
        %v2790 = vmul.f32 %v2774, %v2023
        %v2791 = vmul.f32 %v2775, %v2023
        %v2792 = vmul.f32 %v2776, %v2023
        %v2793 = vmul.f32 %v2777, %v2023
        %v2794 = vmul.f32 %v2778, %v2023
        %v2795 = vmul.f32 %v2779, %v2023
        %v2796 = vmul.f32 %v2780, %v2023
        %v2797 = vmul.f32 %v2781, %v2023
        %v2798 = vmul.f32 %v2782, %v2023
        %2799 = vadd.xlane.f32.xlu0 %v2783
        %v2800 = vpop.xlane.xlu0 %2799
        %2801 = vadd.xlane.f32.xlu0 %v2784
        %v2802 = vpop.xlane.xlu0 %2801
        %2803 = vadd.xlane.f32.xlu0 %v2785
        %v2804 = vpop.xlane.xlu0 %2803
        %2805 = vadd.xlane.f32.xlu0 %v2786
        %v2806 = vpop.xlane.xlu0 %2805
        %2807 = vadd.xlane.f32.xlu0 %v2787
        %v2808 = vpop.xlane.xlu0 %2807
        %2809 = vadd.xlane.f32.xlu0 %v2788
        %v2810 = vpop.xlane.xlu0 %2809
        %2811 = vadd.xlane.f32.xlu0 %v2789
        %v2812 = vpop.xlane.xlu0 %2811
        %2813 = vadd.xlane.f32.xlu0 %v2790
        %v2814 = vpop.xlane.xlu0 %2813
        %2815 = vadd.xlane.f32.xlu0 %v2791
        %v2816 = vpop.xlane.xlu0 %2815
        %2817 = vadd.xlane.f32.xlu0 %v2792
        %v2818 = vpop.xlane.xlu0 %2817
        %2819 = vadd.xlane.f32.xlu0 %v2793
        %v2820 = vpop.xlane.xlu0 %2819
        %2821 = vadd.xlane.f32.xlu0 %v2794
        %v2822 = vpop.xlane.xlu0 %2821
        %2823 = vadd.xlane.f32.xlu0 %v2795
        %v2824 = vpop.xlane.xlu0 %2823
        %2825 = vadd.xlane.f32.xlu0 %v2796
        %v2826 = vpop.xlane.xlu0 %2825
        %2827 = vadd.xlane.f32.xlu0 %v2797
        %v2828 = vpop.xlane.xlu0 %2827
        %2829 = vadd.xlane.f32.xlu0 %v2798
        %v2830 = vpop.xlane.xlu0 %2829
        %v2847 = vadd.s32 %v2090, 4294967264
        %v2848 = vlaneseq
        %v2849 = vshrl.u32 %v2848, 7
        %v2850 = vsub.s32 %v2847, %v2849
        %v2851 = vrot.slane %v2800, %v2850
        %v2852 = vadd.s32 %v2090, 4294967256
        %v2853 = vlaneseq
        %v2854 = vshrl.u32 %v2853, 7
        %v2855 = vsub.s32 %v2852, %v2854
        %v2856 = vrot.slane %v2802, %v2855
        %vm2857 = vcmask 392512
        %v2858 = vsel %vm2857, %v2856, %v2851
        %v2859 = vlaneseq
        %v2860 = vshrl.u32 %v2859, 7
        %v2861 = vsub.s32 %v2847, %v2860
        %v2862 = vrot.slane %v2804, %v2861
        %v2863 = vlaneseq
        %v2864 = vshrl.u32 %v2863, 7
        %v2865 = vsub.s32 %v2852, %v2864
        %v2866 = vrot.slane %v2806, %v2865
        %v2867 = vsel %vm2857, %v2866, %v2862
        %v2868 = vlaneseq
        %v2869 = vshrl.u32 %v2868, 7
        %v2870 = vsub.s32 %v2847, %v2869
        %v2871 = vrot.slane %v2808, %v2870
        %v2872 = vlaneseq
        %v2873 = vshrl.u32 %v2872, 7
        %v2874 = vsub.s32 %v2852, %v2873
        %v2875 = vrot.slane %v2810, %v2874
        %v2876 = vsel %vm2857, %v2875, %v2871
        %v2877 = vlaneseq
        %v2878 = vshrl.u32 %v2877, 7
        %v2879 = vsub.s32 %v2847, %v2878
        %v2880 = vrot.slane %v2812, %v2879
        %v2881 = vlaneseq
        %v2882 = vshrl.u32 %v2881, 7
        %v2883 = vsub.s32 %v2852, %v2882
        %v2884 = vrot.slane %v2814, %v2883
        %v2885 = vsel %vm2857, %v2884, %v2880
        %v2886 = vlaneseq
        %v2887 = vshrl.u32 %v2886, 7
        %v2888 = vsub.s32 %v2847, %v2887
        %v2889 = vrot.slane %v2816, %v2888
        %v2890 = vlaneseq
        %v2891 = vshrl.u32 %v2890, 7
        %v2892 = vsub.s32 %v2852, %v2891
        %v2893 = vrot.slane %v2818, %v2892
        %v2894 = vsel %vm2857, %v2893, %v2889
        %v2895 = vlaneseq
        %v2896 = vshrl.u32 %v2895, 7
        %v2897 = vsub.s32 %v2847, %v2896
        %v2898 = vrot.slane %v2820, %v2897
        %v2899 = vlaneseq
        %v2900 = vshrl.u32 %v2899, 7
        %v2901 = vsub.s32 %v2852, %v2900
        %v2902 = vrot.slane %v2822, %v2901
        %v2903 = vsel %vm2857, %v2902, %v2898
        %v2904 = vlaneseq
        %v2905 = vshrl.u32 %v2904, 7
        %v2906 = vsub.s32 %v2847, %v2905
        %v2907 = vrot.slane %v2824, %v2906
        %v2908 = vlaneseq
        %v2909 = vshrl.u32 %v2908, 7
        %v2910 = vsub.s32 %v2852, %v2909
        %v2911 = vrot.slane %v2826, %v2910
        %v2912 = vsel %vm2857, %v2911, %v2907
        %v2913 = vlaneseq
        %v2914 = vshrl.u32 %v2913, 7
        %v2915 = vsub.s32 %v2847, %v2914
        %v2916 = vrot.slane %v2828, %v2915
        %v2917 = vlaneseq
        %v2918 = vshrl.u32 %v2917, 7
        %v2919 = vsub.s32 %v2852, %v2918
        %v2920 = vrot.slane %v2830, %v2919
        %v2921 = vsel %vm2857, %v2920, %v2916
        %v2922 = vsel %vm2165, %v2867, %v2858
        %v2923 = vsel %vm2167, %v2876, %v2922
        %v2924 = vsel %vm2169, %v2885, %v2923
        %v2925 = vsel %vm2171, %v2894, %v2924
        %v2926 = vsel %vm2173, %v2903, %v2925
        %v2927 = vsel %vm2175, %v2912, %v2926
        %v2928 = vsel %vm2177, %v2921, %v2927
        %vm2930 = vcmask 392448
        %2931 = vst.msk [vmem:[#allocation7] sm:$0xff] %vm2930, %v2928
        %v2932 = vld [vmem:[#allocation5 + $0x30] sm:$0xff]
        %v2933 = vld [vmem:[#allocation5 + $0x38] sm:$0xff]
        %v2934 = vadd.f32 %v1758, %v2932
        %v2935 = vadd.f32 %v1758, %v2933
        %v2936 = vadd.f32 %v1762, %v2932
        %v2937 = vadd.f32 %v1762, %v2933
        %v2938 = vadd.f32 %v1766, %v2932
        %v2939 = vadd.f32 %v1766, %v2933
        %v2940 = vadd.f32 %v1770, %v2932
        %v2941 = vadd.f32 %v1770, %v2933
        %v2942 = vadd.f32 %v1774, %v2932
        %v2943 = vadd.f32 %v1774, %v2933
        %v2944 = vadd.f32 %v1778, %v2932
        %v2945 = vadd.f32 %v1778, %v2933
        %v2946 = vadd.f32 %v1782, %v2932
        %v2947 = vadd.f32 %v1782, %v2933
        %v2948 = vadd.f32 %v1786, %v2932
        %v2949 = vadd.f32 %v1786, %v2933
        %v2950 = vtanh.pop %v2934
        %v2951 = vtanh.pop %v2935
        %v2952 = vtanh.pop %v2936
        %v2953 = vtanh.pop %v2937
        %v2954 = vtanh.pop %v2938
        %v2955 = vtanh.pop %v2939
        %v2956 = vtanh.pop %v2940
        %v2957 = vtanh.pop %v2941
        %v2958 = vtanh.pop %v2942
        %v2959 = vtanh.pop %v2943
        %v2960 = vtanh.pop %v2944
        %v2961 = vtanh.pop %v2945
        %v2962 = vtanh.pop %v2946
        %v2963 = vtanh.pop %v2947
        %v2964 = vtanh.pop %v2948
        %v2965 = vtanh.pop %v2949
        %v2966 = vpack.c.bf16 %v2951, %v2950
        %v2967 = vpack.c.bf16 %v2953, %v2952
        %v2968 = vpack.c.bf16 %v2955, %v2954
        %v2969 = vpack.c.bf16 %v2957, %v2956
        %v2970 = vpack.c.bf16 %v2959, %v2958
        %v2971 = vpack.c.bf16 %v2961, %v2960
        %v2972 = vpack.c.bf16 %v2963, %v2962
        %v2973 = vpack.c.bf16 %v2965, %v2964
        %v2974 = vld [vmem:[#allocation23] sm:$0xf]
        %v2975 = vld [vmem:[#allocation23 + $0x4] sm:$0xf]
        %v2976 = vld [vmem:[#allocation23 + $0x8] sm:$0xf]
        %v2977 = vld [vmem:[#allocation23 + $0xc] sm:$0xf]
        %v2978 = vld [vmem:[#allocation23 + $0x10] sm:$0xf]
        %v2979 = vld [vmem:[#allocation23 + $0x14] sm:$0xf]
        %v2980 = vld [vmem:[#allocation23 + $0x18] sm:$0xf]
        %v2981 = vld [vmem:[#allocation23 + $0x1c] sm:$0xf]
        %v2982 = vld [vmem:[#allocation23 + $0x20] sm:$0xf]
        %v2983 = vld [vmem:[#allocation23 + $0x24] sm:$0xf]
        %v2984 = vld [vmem:[#allocation23 + $0x28] sm:$0xf]
        %v2985 = vld [vmem:[#allocation23 + $0x2c] sm:$0xf]
        %v2986 = vld [vmem:[#allocation23 + $0x30] sm:$0xf]
        %v2987 = vld [vmem:[#allocation23 + $0x34] sm:$0xf]
        %v2988 = vld [vmem:[#allocation23 + $0x38] sm:$0xf]
        %v2989 = vld [vmem:[#allocation23 + $0x3c] sm:$0xf]
        %v2990 = vld [vmem:[%s13] sm:$0x1]
        %v2992 = vlaneseq
        %v2993 = vshrl.u32 %v2992, 7
        %v2994 = vsub.s32 0, %v2993
        %v2995 = vrot.slane %v2990, %v2994
        %v3013 = vunpack.c.l.b16 %v2974
        %v3014 = vunpack.c.l.b16 %v2975
        %v3015 = vunpack.c.l.b16 %v2976
        %v3016 = vunpack.c.l.b16 %v2977
        %v3017 = vunpack.c.l.b16 %v2978
        %v3018 = vunpack.c.l.b16 %v2979
        %v3019 = vunpack.c.l.b16 %v2980
        %v3020 = vunpack.c.l.b16 %v2981
        %v3021 = vunpack.c.l.b16 %v2982
        %v3022 = vunpack.c.l.b16 %v2983
        %v3023 = vunpack.c.l.b16 %v2984
        %v3024 = vunpack.c.l.b16 %v2985
        %v3025 = vunpack.c.l.b16 %v2986
        %v3026 = vunpack.c.l.b16 %v2987
        %v3027 = vunpack.c.l.b16 %v2988
        %v3028 = vunpack.c.l.b16 %v2989
        %v3029 = vpack.c.b16 %v3014, %v3013
        %v3030 = vpack.c.b16 %v3016, %v3015
        %v3031 = vpack.c.b16 %v3018, %v3017
        %v3032 = vpack.c.b16 %v3020, %v3019
        %v3033 = vpack.c.b16 %v3022, %v3021
        %v3034 = vpack.c.b16 %v3024, %v3023
        %v3035 = vpack.c.b16 %v3026, %v3025
        %v3036 = vpack.c.b16 %v3028, %v3027
        %3045 = vmatprep.subr.bf16.mxu0 0
        %3046 = vmatpush1.bf16.msra.mxu0 %v3029
        %3047 = vmatprep.subr.bf16.mxu0 0
        %3048 = vmatpush1.bf16.msra.mxu0 %v3030
        %3049 = vmatprep.subr.bf16.mxu0 0
        %3050 = vmatpush1.bf16.msra.mxu0 %v3031
        %3051 = vmatprep.subr.bf16.mxu0 0
        %3052 = vmatpush1.bf16.msra.mxu0 %v3032
        %3053 = vmatprep.subr.bf16.mxu0 0
        %3054 = vmatpush1.bf16.msra.mxu0 %v3033
        %3055 = vmatprep.subr.bf16.mxu0 0
        %3056 = vmatpush1.bf16.msra.mxu0 %v3034
        %3057 = vmatprep.subr.bf16.mxu0 0
        %3058 = vmatpush1.bf16.msra.mxu0 %v3035
        %3059 = vmatprep.subr.bf16.mxu0 0
        %3060 = vmatpush1.bf16.msra.mxu0 %v3036
        %3061 = vmatprep.subr.bf16.mxu0 0
        %3062 = vmatpush1.bf16.msra.mxu0 0
        %3063 = vmatprep.subr.bf16.mxu0 0
        %3064 = vmatpush1.bf16.msra.mxu0 0
        %3065 = vmatprep.subr.bf16.mxu0 0
        %3066 = vmatpush1.bf16.msra.mxu0 0
        %3067 = vmatprep.subr.bf16.mxu0 0
        %3068 = vmatpush1.bf16.msra.mxu0 0
        %3069 = vmatprep.subr.bf16.mxu0 0
        %3070 = vmatpush1.bf16.msra.mxu0 0
        %3071 = vmatprep.subr.bf16.mxu0 0
        %3072 = vmatpush1.bf16.msra.mxu0 0
        %3073 = vmatprep.subr.bf16.mxu0 0
        %3074 = vmatpush1.bf16.msra.mxu0 0
        %3075 = vmatprep.subr.bf16.mxu0 0
        %3076 = vmatpush1.bf16.msra.mxu0 0
        %3077 = vmatprep.mubr.bf16.mxu0 0
        %3078 = vmatmul.mubr.bf16.gmra.mrb[0].mxu0 %v2966
        %v3079 = vpop.f32.mrb[0].mxu0
        %v3080 = vadd.f32 %v2995, %v3079
        %v3081 = vpop.f32.mrb[0].mxu0
        %v3082 = vpop.f32.mrb[0].mxu0
        %v3083 = vadd.f32 %v2995, %v3082
        %v3084 = vpop.f32.mrb[0].mxu0
        %3085 = vmatprep.mubr.bf16.mxu0 0
        %3086 = vmatmul.mubr.bf16.gmra.mrb[0].mxu0 %v2967
        %v3087 = vpop.f32.mrb[0].mxu0
        %v3088 = vadd.f32 %v2995, %v3087
        %v3089 = vpop.f32.mrb[0].mxu0
        %v3090 = vpop.f32.mrb[0].mxu0
        %v3091 = vadd.f32 %v2995, %v3090
        %v3092 = vpop.f32.mrb[0].mxu0
        %3093 = vmatprep.mubr.bf16.mxu0 0
        %3094 = vmatmul.mubr.bf16.gmra.mrb[0].mxu0 %v2968
        %v3095 = vpop.f32.mrb[0].mxu0
        %v3096 = vadd.f32 %v2995, %v3095
        %v3097 = vpop.f32.mrb[0].mxu0
        %v3098 = vpop.f32.mrb[0].mxu0
        %v3099 = vadd.f32 %v2995, %v3098
        %v3100 = vpop.f32.mrb[0].mxu0
        %3101 = vmatprep.mubr.bf16.mxu0 0
        %3102 = vmatmul.mubr.bf16.gmra.mrb[0].mxu0 %v2969
        %v3103 = vpop.f32.mrb[0].mxu0
        %v3104 = vadd.f32 %v2995, %v3103
        %v3105 = vpop.f32.mrb[0].mxu0
        %v3106 = vpop.f32.mrb[0].mxu0
        %v3107 = vadd.f32 %v2995, %v3106
        %v3108 = vpop.f32.mrb[0].mxu0
        %3109 = vmatprep.mubr.bf16.mxu0 0
        %3110 = vmatmul.mubr.bf16.gmra.mrb[0].mxu0 %v2970
        %v3111 = vpop.f32.mrb[0].mxu0
        %v3112 = vadd.f32 %v2995, %v3111
        %v3113 = vpop.f32.mrb[0].mxu0
        %v3114 = vpop.f32.mrb[0].mxu0
        %v3115 = vadd.f32 %v2995, %v3114
        %v3116 = vpop.f32.mrb[0].mxu0
        %3117 = vmatprep.mubr.bf16.mxu0 0
        %3118 = vmatmul.mubr.bf16.gmra.mrb[0].mxu0 %v2971
        %v3119 = vpop.f32.mrb[0].mxu0
        %v3120 = vadd.f32 %v2995, %v3119
        %v3121 = vpop.f32.mrb[0].mxu0
        %v3122 = vpop.f32.mrb[0].mxu0
        %v3123 = vadd.f32 %v2995, %v3122
        %v3124 = vpop.f32.mrb[0].mxu0
        %3125 = vmatprep.mubr.bf16.mxu0 0
        %3126 = vmatmul.mubr.bf16.gmra.mrb[0].mxu0 %v2972
        %v3127 = vpop.f32.mrb[0].mxu0
        %v3128 = vadd.f32 %v2995, %v3127
        %v3129 = vpop.f32.mrb[0].mxu0
        %v3130 = vpop.f32.mrb[0].mxu0
        %v3131 = vadd.f32 %v2995, %v3130
        %v3132 = vpop.f32.mrb[0].mxu0
        %3133 = vmatprep.mubr.bf16.mxu0 0
        %3134 = vmatmul.mubr.bf16.gmra.mrb[0].mxu0 %v2973
        %v3135 = vpop.f32.mrb[0].mxu0
        %v3136 = vadd.f32 %v2995, %v3135
        %v3137 = vpop.f32.mrb[0].mxu0
        %v3138 = vpop.f32.mrb[0].mxu0
        %v3139 = vadd.f32 %v2995, %v3138
        %v3140 = vpop.f32.mrb[0].mxu0
        %3141 = vdwg.mxu0
        %v3142 = vtanh.pop %v3080
        %v3143 = vtanh.pop %v3083
        %v3144 = vtanh.pop %v3088
        %v3145 = vtanh.pop %v3091
        %v3146 = vtanh.pop %v3096
        %v3147 = vtanh.pop %v3099
        %v3148 = vtanh.pop %v3104
        %v3149 = vtanh.pop %v3107
        %v3150 = vtanh.pop %v3112
        %v3151 = vtanh.pop %v3115
        %v3152 = vtanh.pop %v3120
        %v3153 = vtanh.pop %v3123
        %v3154 = vtanh.pop %v3128
        %v3155 = vtanh.pop %v3131
        %v3156 = vtanh.pop %v3136
        %v3157 = vtanh.pop %v3139
        %v3158 = vmul.f32 %v3142, %v2023
        %v3159 = vmul.f32 %v3143, %v2023
        %v3160 = vmul.f32 %v3144, %v2023
        %v3161 = vmul.f32 %v3145, %v2023
        %v3162 = vmul.f32 %v3146, %v2023
        %v3163 = vmul.f32 %v3147, %v2023
        %v3164 = vmul.f32 %v3148, %v2023
        %v3165 = vmul.f32 %v3149, %v2023
        %v3166 = vmul.f32 %v3150, %v2023
        %v3167 = vmul.f32 %v3151, %v2023
        %v3168 = vmul.f32 %v3152, %v2023
        %v3169 = vmul.f32 %v3153, %v2023
        %v3170 = vmul.f32 %v3154, %v2023
        %v3171 = vmul.f32 %v3155, %v2023
        %v3172 = vmul.f32 %v3156, %v2023
        %v3173 = vmul.f32 %v3157, %v2023
        %3174 = vadd.xlane.f32.xlu0 %v3158
        %v3175 = vpop.xlane.xlu0 %3174
        %3176 = vadd.xlane.f32.xlu0 %v3159
        %v3177 = vpop.xlane.xlu0 %3176
        %3178 = vadd.xlane.f32.xlu0 %v3160
        %v3179 = vpop.xlane.xlu0 %3178
        %3180 = vadd.xlane.f32.xlu0 %v3161
        %v3181 = vpop.xlane.xlu0 %3180
        %3182 = vadd.xlane.f32.xlu0 %v3162
        %v3183 = vpop.xlane.xlu0 %3182
        %3184 = vadd.xlane.f32.xlu0 %v3163
        %v3185 = vpop.xlane.xlu0 %3184
        %3186 = vadd.xlane.f32.xlu0 %v3164
        %v3187 = vpop.xlane.xlu0 %3186
        %3188 = vadd.xlane.f32.xlu0 %v3165
        %v3189 = vpop.xlane.xlu0 %3188
        %3190 = vadd.xlane.f32.xlu0 %v3166
        %v3191 = vpop.xlane.xlu0 %3190
        %3192 = vadd.xlane.f32.xlu0 %v3167
        %v3193 = vpop.xlane.xlu0 %3192
        %3194 = vadd.xlane.f32.xlu0 %v3168
        %v3195 = vpop.xlane.xlu0 %3194
        %3196 = vadd.xlane.f32.xlu0 %v3169
        %v3197 = vpop.xlane.xlu0 %3196
        %3198 = vadd.xlane.f32.xlu0 %v3170
        %v3199 = vpop.xlane.xlu0 %3198
        %3200 = vadd.xlane.f32.xlu0 %v3171
        %v3201 = vpop.xlane.xlu0 %3200
        %3202 = vadd.xlane.f32.xlu0 %v3172
        %v3203 = vpop.xlane.xlu0 %3202
        %3204 = vadd.xlane.f32.xlu0 %v3173
        %v3205 = vpop.xlane.xlu0 %3204
        %v3222 = vadd.s32 %v2090, 4294967248
        %v3223 = vlaneseq
        %v3224 = vshrl.u32 %v3223, 7
        %v3225 = vsub.s32 %v3222, %v3224
        %v3226 = vrot.slane %v3175, %v3225
        %v3227 = vadd.s32 %v2090, 4294967240
        %v3228 = vlaneseq
        %v3229 = vshrl.u32 %v3228, 7
        %v3230 = vsub.s32 %v3227, %v3229
        %v3231 = vrot.slane %v3177, %v3230
        %vm3232 = vcmask 523712
        %v3233 = vsel %vm3232, %v3231, %v3226
        %v3234 = vlaneseq
        %v3235 = vshrl.u32 %v3234, 7
        %v3236 = vsub.s32 %v3222, %v3235
        %v3237 = vrot.slane %v3179, %v3236
        %v3238 = vlaneseq
        %v3239 = vshrl.u32 %v3238, 7
        %v3240 = vsub.s32 %v3227, %v3239
        %v3241 = vrot.slane %v3181, %v3240
        %v3242 = vsel %vm3232, %v3241, %v3237
        %v3243 = vlaneseq
        %v3244 = vshrl.u32 %v3243, 7
        %v3245 = vsub.s32 %v3222, %v3244
        %v3246 = vrot.slane %v3183, %v3245
        %v3247 = vlaneseq
        %v3248 = vshrl.u32 %v3247, 7
        %v3249 = vsub.s32 %v3227, %v3248
        %v3250 = vrot.slane %v3185, %v3249
        %v3251 = vsel %vm3232, %v3250, %v3246
        %v3252 = vlaneseq
        %v3253 = vshrl.u32 %v3252, 7
        %v3254 = vsub.s32 %v3222, %v3253
        %v3255 = vrot.slane %v3187, %v3254
        %v3256 = vlaneseq
        %v3257 = vshrl.u32 %v3256, 7
        %v3258 = vsub.s32 %v3227, %v3257
        %v3259 = vrot.slane %v3189, %v3258
        %v3260 = vsel %vm3232, %v3259, %v3255
        %v3261 = vlaneseq
        %v3262 = vshrl.u32 %v3261, 7
        %v3263 = vsub.s32 %v3222, %v3262
        %v3264 = vrot.slane %v3191, %v3263
        %v3265 = vlaneseq
        %v3266 = vshrl.u32 %v3265, 7
        %v3267 = vsub.s32 %v3227, %v3266
        %v3268 = vrot.slane %v3193, %v3267
        %v3269 = vsel %vm3232, %v3268, %v3264
        %v3270 = vlaneseq
        %v3271 = vshrl.u32 %v3270, 7
        %v3272 = vsub.s32 %v3222, %v3271
        %v3273 = vrot.slane %v3195, %v3272
        %v3274 = vlaneseq
        %v3275 = vshrl.u32 %v3274, 7
        %v3276 = vsub.s32 %v3227, %v3275
        %v3277 = vrot.slane %v3197, %v3276
        %v3278 = vsel %vm3232, %v3277, %v3273
        %v3279 = vlaneseq
        %v3280 = vshrl.u32 %v3279, 7
        %v3281 = vsub.s32 %v3222, %v3280
        %v3282 = vrot.slane %v3199, %v3281
        %v3283 = vlaneseq
        %v3284 = vshrl.u32 %v3283, 7
        %v3285 = vsub.s32 %v3227, %v3284
        %v3286 = vrot.slane %v3201, %v3285
        %v3287 = vsel %vm3232, %v3286, %v3282
        %v3288 = vlaneseq
        %v3289 = vshrl.u32 %v3288, 7
        %v3290 = vsub.s32 %v3222, %v3289
        %v3291 = vrot.slane %v3203, %v3290
        %v3292 = vlaneseq
        %v3293 = vshrl.u32 %v3292, 7
        %v3294 = vsub.s32 %v3227, %v3293
        %v3295 = vrot.slane %v3205, %v3294
        %v3296 = vsel %vm3232, %v3295, %v3291
        %v3297 = vsel %vm2165, %v3242, %v3233
        %v3298 = vsel %vm2167, %v3251, %v3297
        %v3299 = vsel %vm2169, %v3260, %v3298
        %v3300 = vsel %vm2171, %v3269, %v3299
        %v3301 = vsel %vm2173, %v3278, %v3300
        %v3302 = vsel %vm2175, %v3287, %v3301
        %v3303 = vsel %vm2177, %v3296, %v3302
        %vm3305 = vcmask 523648
        %3306 = vst.msk [vmem:[#allocation7] sm:$0xff] %vm3305, %v3303
        %v3307 = vld [vmem:[#allocation5 + $0x40] sm:$0xff]
        %v3308 = vld [vmem:[#allocation5 + $0x48] sm:$0xff]
        %v3309 = vadd.f32 %v1758, %v3307
        %v3310 = vadd.f32 %v1758, %v3308
        %v3311 = vadd.f32 %v1762, %v3307
        %v3312 = vadd.f32 %v1762, %v3308
        %v3313 = vadd.f32 %v1766, %v3307
        %v3314 = vadd.f32 %v1766, %v3308
        %v3315 = vadd.f32 %v1770, %v3307
        %v3316 = vadd.f32 %v1770, %v3308
        %v3317 = vadd.f32 %v1774, %v3307
        %v3318 = vadd.f32 %v1774, %v3308
        %v3319 = vadd.f32 %v1778, %v3307
        %v3320 = vadd.f32 %v1778, %v3308
        %v3321 = vadd.f32 %v1782, %v3307
        %v3322 = vadd.f32 %v1782, %v3308
        %v3323 = vadd.f32 %v1786, %v3307
        %v3324 = vadd.f32 %v1786, %v3308
        %v3325 = vtanh.pop %v3309
        %v3326 = vtanh.pop %v3310
        %v3327 = vtanh.pop %v3311
        %v3328 = vtanh.pop %v3312
        %v3329 = vtanh.pop %v3313
        %v3330 = vtanh.pop %v3314
        %v3331 = vtanh.pop %v3315
        %v3332 = vtanh.pop %v3316
        %v3333 = vtanh.pop %v3317
        %v3334 = vtanh.pop %v3318
        %v3335 = vtanh.pop %v3319
        %v3336 = vtanh.pop %v3320
        %v3337 = vtanh.pop %v3321
        %v3338 = vtanh.pop %v3322
        %v3339 = vtanh.pop %v3323
        %v3340 = vtanh.pop %v3324
        %v3341 = vpack.c.bf16 %v3326, %v3325
        %v3342 = vpack.c.bf16 %v3328, %v3327
        %v3343 = vpack.c.bf16 %v3330, %v3329
        %v3344 = vpack.c.bf16 %v3332, %v3331
        %v3345 = vpack.c.bf16 %v3334, %v3333
        %v3346 = vpack.c.bf16 %v3336, %v3335
        %v3347 = vpack.c.bf16 %v3338, %v3337
        %v3348 = vpack.c.bf16 %v3340, %v3339
        %v3349 = vld [vmem:[#allocation23] sm:$0xf]
        %v3350 = vld [vmem:[#allocation23 + $0x4] sm:$0xf]
        %v3351 = vld [vmem:[#allocation23 + $0x8] sm:$0xf]
        %v3352 = vld [vmem:[#allocation23 + $0xc] sm:$0xf]
        %v3353 = vld [vmem:[#allocation23 + $0x10] sm:$0xf]
        %v3354 = vld [vmem:[#allocation23 + $0x14] sm:$0xf]
        %v3355 = vld [vmem:[#allocation23 + $0x18] sm:$0xf]
        %v3356 = vld [vmem:[#allocation23 + $0x1c] sm:$0xf]
        %v3357 = vld [vmem:[#allocation23 + $0x20] sm:$0xf]
        %v3358 = vld [vmem:[#allocation23 + $0x24] sm:$0xf]
        %v3359 = vld [vmem:[#allocation23 + $0x28] sm:$0xf]
        %v3360 = vld [vmem:[#allocation23 + $0x2c] sm:$0xf]
        %v3361 = vld [vmem:[#allocation23 + $0x30] sm:$0xf]
        %v3362 = vld [vmem:[#allocation23 + $0x34] sm:$0xf]
        %v3363 = vld [vmem:[#allocation23 + $0x38] sm:$0xf]
        %v3364 = vld [vmem:[#allocation23 + $0x3c] sm:$0xf]
        %v3365 = vld [vmem:[%s13] sm:$0x1]
        %v3367 = vlaneseq
        %v3368 = vshrl.u32 %v3367, 7
        %v3369 = vsub.s32 0, %v3368
        %v3370 = vrot.slane %v3365, %v3369
        %v3388 = vunpack.c.l.b16 %v3349
        %v3389 = vunpack.c.l.b16 %v3350
        %v3390 = vunpack.c.l.b16 %v3351
        %v3391 = vunpack.c.l.b16 %v3352
        %v3392 = vunpack.c.l.b16 %v3353
        %v3393 = vunpack.c.l.b16 %v3354
        %v3394 = vunpack.c.l.b16 %v3355
        %v3395 = vunpack.c.l.b16 %v3356
        %v3396 = vunpack.c.l.b16 %v3357
        %v3397 = vunpack.c.l.b16 %v3358
        %v3398 = vunpack.c.l.b16 %v3359
        %v3399 = vunpack.c.l.b16 %v3360
        %v3400 = vunpack.c.l.b16 %v3361
        %v3401 = vunpack.c.l.b16 %v3362
        %v3402 = vunpack.c.l.b16 %v3363
        %v3403 = vunpack.c.l.b16 %v3364
        %v3404 = vpack.c.b16 %v3389, %v3388
        %v3405 = vpack.c.b16 %v3391, %v3390
        %v3406 = vpack.c.b16 %v3393, %v3392
        %v3407 = vpack.c.b16 %v3395, %v3394
        %v3408 = vpack.c.b16 %v3397, %v3396
        %v3409 = vpack.c.b16 %v3399, %v3398
        %v3410 = vpack.c.b16 %v3401, %v3400
        %v3411 = vpack.c.b16 %v3403, %v3402
        %3420 = vmatprep.subr.bf16.mxu0 0
        %3421 = vmatpush1.bf16.msra.mxu0 %v3404
        %3422 = vmatprep.subr.bf16.mxu0 0
        %3423 = vmatpush1.bf16.msra.mxu0 %v3405
        %3424 = vmatprep.subr.bf16.mxu0 0
        %3425 = vmatpush1.bf16.msra.mxu0 %v3406
        %3426 = vmatprep.subr.bf16.mxu0 0
        %3427 = vmatpush1.bf16.msra.mxu0 %v3407
        %3428 = vmatprep.subr.bf16.mxu0 0
        %3429 = vmatpush1.bf16.msra.mxu0 %v3408
        %3430 = vmatprep.subr.bf16.mxu0 0
        %3431 = vmatpush1.bf16.msra.mxu0 %v3409
        %3432 = vmatprep.subr.bf16.mxu0 0
        %3433 = vmatpush1.bf16.msra.mxu0 %v3410
        %3434 = vmatprep.subr.bf16.mxu0 0
        %3435 = vmatpush1.bf16.msra.mxu0 %v3411
        %3436 = vmatprep.subr.bf16.mxu0 0
        %3437 = vmatpush1.bf16.msra.mxu0 0
        %3438 = vmatprep.subr.bf16.mxu0 0
        %3439 = vmatpush1.bf16.msra.mxu0 0
        %3440 = vmatprep.subr.bf16.mxu0 0
        %3441 = vmatpush1.bf16.msra.mxu0 0
        %3442 = vmatprep.subr.bf16.mxu0 0
        %3443 = vmatpush1.bf16.msra.mxu0 0
        %3444 = vmatprep.subr.bf16.mxu0 0
        %3445 = vmatpush1.bf16.msra.mxu0 0
        %3446 = vmatprep.subr.bf16.mxu0 0
        %3447 = vmatpush1.bf16.msra.mxu0 0
        %3448 = vmatprep.subr.bf16.mxu0 0
        %3449 = vmatpush1.bf16.msra.mxu0 0
        %3450 = vmatprep.subr.bf16.mxu0 0
        %3451 = vmatpush1.bf16.msra.mxu0 0
        %3452 = vmatprep.mubr.bf16.mxu0 0
        %3453 = vmatmul.mubr.bf16.gmra.mrb[0].mxu0 %v3341
        %v3454 = vpop.f32.mrb[0].mxu0
        %v3455 = vadd.f32 %v3370, %v3454
        %v3456 = vpop.f32.mrb[0].mxu0
        %v3457 = vpop.f32.mrb[0].mxu0
        %v3458 = vadd.f32 %v3370, %v3457
        %v3459 = vpop.f32.mrb[0].mxu0
        %3460 = vmatprep.mubr.bf16.mxu0 0
        %3461 = vmatmul.mubr.bf16.gmra.mrb[0].mxu0 %v3342
        %v3462 = vpop.f32.mrb[0].mxu0
        %v3463 = vadd.f32 %v3370, %v3462
        %v3464 = vpop.f32.mrb[0].mxu0
        %v3465 = vpop.f32.mrb[0].mxu0
        %v3466 = vadd.f32 %v3370, %v3465
        %v3467 = vpop.f32.mrb[0].mxu0
        %3468 = vmatprep.mubr.bf16.mxu0 0
        %3469 = vmatmul.mubr.bf16.gmra.mrb[0].mxu0 %v3343
        %v3470 = vpop.f32.mrb[0].mxu0
        %v3471 = vadd.f32 %v3370, %v3470
        %v3472 = vpop.f32.mrb[0].mxu0
        %v3473 = vpop.f32.mrb[0].mxu0
        %v3474 = vadd.f32 %v3370, %v3473
        %v3475 = vpop.f32.mrb[0].mxu0
        %3476 = vmatprep.mubr.bf16.mxu0 0
        %3477 = vmatmul.mubr.bf16.gmra.mrb[0].mxu0 %v3344
        %v3478 = vpop.f32.mrb[0].mxu0
        %v3479 = vadd.f32 %v3370, %v3478
        %v3480 = vpop.f32.mrb[0].mxu0
        %v3481 = vpop.f32.mrb[0].mxu0
        %v3482 = vadd.f32 %v3370, %v3481
        %v3483 = vpop.f32.mrb[0].mxu0
        %3484 = vmatprep.mubr.bf16.mxu0 0
        %3485 = vmatmul.mubr.bf16.gmra.mrb[0].mxu0 %v3345
        %v3486 = vpop.f32.mrb[0].mxu0
        %v3487 = vadd.f32 %v3370, %v3486
        %v3488 = vpop.f32.mrb[0].mxu0
        %v3489 = vpop.f32.mrb[0].mxu0
        %v3490 = vadd.f32 %v3370, %v3489
        %v3491 = vpop.f32.mrb[0].mxu0
        %3492 = vmatprep.mubr.bf16.mxu0 0
        %3493 = vmatmul.mubr.bf16.gmra.mrb[0].mxu0 %v3346
        %v3494 = vpop.f32.mrb[0].mxu0
        %v3495 = vadd.f32 %v3370, %v3494
        %v3496 = vpop.f32.mrb[0].mxu0
        %v3497 = vpop.f32.mrb[0].mxu0
        %v3498 = vadd.f32 %v3370, %v3497
        %v3499 = vpop.f32.mrb[0].mxu0
        %3500 = vmatprep.mubr.bf16.mxu0 0
        %3501 = vmatmul.mubr.bf16.gmra.mrb[0].mxu0 %v3347
        %v3502 = vpop.f32.mrb[0].mxu0
        %v3503 = vadd.f32 %v3370, %v3502
        %v3504 = vpop.f32.mrb[0].mxu0
        %v3505 = vpop.f32.mrb[0].mxu0
        %v3506 = vadd.f32 %v3370, %v3505
        %v3507 = vpop.f32.mrb[0].mxu0
        %3508 = vmatprep.mubr.bf16.mxu0 0
        %3509 = vmatmul.mubr.bf16.gmra.mrb[0].mxu0 %v3348
        %v3510 = vpop.f32.mrb[0].mxu0
        %v3511 = vadd.f32 %v3370, %v3510
        %v3512 = vpop.f32.mrb[0].mxu0
        %v3513 = vpop.f32.mrb[0].mxu0
        %v3514 = vadd.f32 %v3370, %v3513
        %v3515 = vpop.f32.mrb[0].mxu0
        %3516 = vdwg.mxu0
        %v3517 = vtanh.pop %v3455
        %v3518 = vtanh.pop %v3458
        %v3519 = vtanh.pop %v3463
        %v3520 = vtanh.pop %v3466
        %v3521 = vtanh.pop %v3471
        %v3522 = vtanh.pop %v3474
        %v3523 = vtanh.pop %v3479
        %v3524 = vtanh.pop %v3482
        %v3525 = vtanh.pop %v3487
        %v3526 = vtanh.pop %v3490
        %v3527 = vtanh.pop %v3495
        %v3528 = vtanh.pop %v3498
        %v3529 = vtanh.pop %v3503
        %v3530 = vtanh.pop %v3506
        %v3531 = vtanh.pop %v3511
        %v3532 = vtanh.pop %v3514
        %v3533 = vmul.f32 %v3517, %v2023
        %v3534 = vmul.f32 %v3518, %v2023
        %v3535 = vmul.f32 %v3519, %v2023
        %v3536 = vmul.f32 %v3520, %v2023
        %v3537 = vmul.f32 %v3521, %v2023
        %v3538 = vmul.f32 %v3522, %v2023
        %v3539 = vmul.f32 %v3523, %v2023
        %v3540 = vmul.f32 %v3524, %v2023
        %v3541 = vmul.f32 %v3525, %v2023
        %v3542 = vmul.f32 %v3526, %v2023
        %v3543 = vmul.f32 %v3527, %v2023
        %v3544 = vmul.f32 %v3528, %v2023
        %v3545 = vmul.f32 %v3529, %v2023
        %v3546 = vmul.f32 %v3530, %v2023
        %v3547 = vmul.f32 %v3531, %v2023
        %v3548 = vmul.f32 %v3532, %v2023
        %3549 = vadd.xlane.f32.xlu0 %v3533
        %v3550 = vpop.xlane.xlu0 %3549
        %3551 = vadd.xlane.f32.xlu0 %v3534
        %v3552 = vpop.xlane.xlu0 %3551
        %3553 = vadd.xlane.f32.xlu0 %v3535
        %v3554 = vpop.xlane.xlu0 %3553
        %3555 = vadd.xlane.f32.xlu0 %v3536
        %v3556 = vpop.xlane.xlu0 %3555
        %3557 = vadd.xlane.f32.xlu0 %v3537
        %v3558 = vpop.xlane.xlu0 %3557
        %3559 = vadd.xlane.f32.xlu0 %v3538
        %v3560 = vpop.xlane.xlu0 %3559
        %3561 = vadd.xlane.f32.xlu0 %v3539
        %v3562 = vpop.xlane.xlu0 %3561
        %3563 = vadd.xlane.f32.xlu0 %v3540
        %v3564 = vpop.xlane.xlu0 %3563
        %3565 = vadd.xlane.f32.xlu0 %v3541
        %v3566 = vpop.xlane.xlu0 %3565
        %3567 = vadd.xlane.f32.xlu0 %v3542
        %v3568 = vpop.xlane.xlu0 %3567
        %3569 = vadd.xlane.f32.xlu0 %v3543
        %v3570 = vpop.xlane.xlu0 %3569
        %3571 = vadd.xlane.f32.xlu0 %v3544
        %v3572 = vpop.xlane.xlu0 %3571
        %3573 = vadd.xlane.f32.xlu0 %v3545
        %v3574 = vpop.xlane.xlu0 %3573
        %3575 = vadd.xlane.f32.xlu0 %v3546
        %v3576 = vpop.xlane.xlu0 %3575
        %3577 = vadd.xlane.f32.xlu0 %v3547
        %v3578 = vpop.xlane.xlu0 %3577
        %3579 = vadd.xlane.f32.xlu0 %v3548
        %v3580 = vpop.xlane.xlu0 %3579
        %v3597 = vadd.s32 %v2090, 4294967232
        %v3598 = vlaneseq
        %v3599 = vshrl.u32 %v3598, 7
        %v3600 = vsub.s32 %v3597, %v3599
        %v3601 = vrot.slane %v3550, %v3600
        %v3602 = vadd.s32 %v2090, 4294967224
        %v3603 = vlaneseq
        %v3604 = vshrl.u32 %v3603, 7
        %v3605 = vsub.s32 %v3602, %v3604
        %v3606 = vrot.slane %v3552, %v3605
        %vm3607 = vcmask 654912
        %v3608 = vsel %vm3607, %v3606, %v3601
        %v3609 = vlaneseq
        %v3610 = vshrl.u32 %v3609, 7
        %v3611 = vsub.s32 %v3597, %v3610
        %v3612 = vrot.slane %v3554, %v3611
        %v3613 = vlaneseq
        %v3614 = vshrl.u32 %v3613, 7
        %v3615 = vsub.s32 %v3602, %v3614
        %v3616 = vrot.slane %v3556, %v3615
        %v3617 = vsel %vm3607, %v3616, %v3612
        %v3618 = vlaneseq
        %v3619 = vshrl.u32 %v3618, 7
        %v3620 = vsub.s32 %v3597, %v3619
        %v3621 = vrot.slane %v3558, %v3620
        %v3622 = vlaneseq
        %v3623 = vshrl.u32 %v3622, 7
        %v3624 = vsub.s32 %v3602, %v3623
        %v3625 = vrot.slane %v3560, %v3624
        %v3626 = vsel %vm3607, %v3625, %v3621
        %v3627 = vlaneseq
        %v3628 = vshrl.u32 %v3627, 7
        %v3629 = vsub.s32 %v3597, %v3628
        %v3630 = vrot.slane %v3562, %v3629
        %v3631 = vlaneseq
        %v3632 = vshrl.u32 %v3631, 7
        %v3633 = vsub.s32 %v3602, %v3632
        %v3634 = vrot.slane %v3564, %v3633
        %v3635 = vsel %vm3607, %v3634, %v3630
        %v3636 = vlaneseq
        %v3637 = vshrl.u32 %v3636, 7
        %v3638 = vsub.s32 %v3597, %v3637
        %v3639 = vrot.slane %v3566, %v3638
        %v3640 = vlaneseq
        %v3641 = vshrl.u32 %v3640, 7
        %v3642 = vsub.s32 %v3602, %v3641
        %v3643 = vrot.slane %v3568, %v3642
        %v3644 = vsel %vm3607, %v3643, %v3639
        %v3645 = vlaneseq
        %v3646 = vshrl.u32 %v3645, 7
        %v3647 = vsub.s32 %v3597, %v3646
        %v3648 = vrot.slane %v3570, %v3647
        %v3649 = vlaneseq
        %v3650 = vshrl.u32 %v3649, 7
        %v3651 = vsub.s32 %v3602, %v3650
        %v3652 = vrot.slane %v3572, %v3651
        %v3653 = vsel %vm3607, %v3652, %v3648
        %v3654 = vlaneseq
        %v3655 = vshrl.u32 %v3654, 7
        %v3656 = vsub.s32 %v3597, %v3655
        %v3657 = vrot.slane %v3574, %v3656
        %v3658 = vlaneseq
        %v3659 = vshrl.u32 %v3658, 7
        %v3660 = vsub.s32 %v3602, %v3659
        %v3661 = vrot.slane %v3576, %v3660
        %v3662 = vsel %vm3607, %v3661, %v3657
        %v3663 = vlaneseq
        %v3664 = vshrl.u32 %v3663, 7
        %v3665 = vsub.s32 %v3597, %v3664
        %v3666 = vrot.slane %v3578, %v3665
        %v3667 = vlaneseq
        %v3668 = vshrl.u32 %v3667, 7
        %v3669 = vsub.s32 %v3602, %v3668
        %v3670 = vrot.slane %v3580, %v3669
        %v3671 = vsel %vm3607, %v3670, %v3666
        %v3672 = vsel %vm2165, %v3617, %v3608
        %v3673 = vsel %vm2167, %v3626, %v3672
        %v3674 = vsel %vm2169, %v3635, %v3673
        %v3675 = vsel %vm2171, %v3644, %v3674
        %v3676 = vsel %vm2173, %v3653, %v3675
        %v3677 = vsel %vm2175, %v3662, %v3676
        %v3678 = vsel %vm2177, %v3671, %v3677
        %vm3680 = vcmask 654848
        %3681 = vst.msk [vmem:[#allocation7] sm:$0xff] %vm3680, %v3678
        %v3682 = vld [vmem:[#allocation5 + $0x50] sm:$0xff]
        %v3683 = vld [vmem:[#allocation5 + $0x58] sm:$0xff]
        %v3684 = vadd.f32 %v1758, %v3682
        %v3685 = vadd.f32 %v1758, %v3683
        %v3686 = vadd.f32 %v1762, %v3682
        %v3687 = vadd.f32 %v1762, %v3683
        %v3688 = vadd.f32 %v1766, %v3682
        %v3689 = vadd.f32 %v1766, %v3683
        %v3690 = vadd.f32 %v1770, %v3682
        %v3691 = vadd.f32 %v1770, %v3683
        %v3692 = vadd.f32 %v1774, %v3682
        %v3693 = vadd.f32 %v1774, %v3683
        %v3694 = vadd.f32 %v1778, %v3682
        %v3695 = vadd.f32 %v1778, %v3683
        %v3696 = vadd.f32 %v1782, %v3682
        %v3697 = vadd.f32 %v1782, %v3683
        %v3698 = vadd.f32 %v1786, %v3682
        %v3699 = vadd.f32 %v1786, %v3683
        %v3700 = vtanh.pop %v3684
        %v3701 = vtanh.pop %v3685
        %v3702 = vtanh.pop %v3686
        %v3703 = vtanh.pop %v3687
        %v3704 = vtanh.pop %v3688
        %v3705 = vtanh.pop %v3689
        %v3706 = vtanh.pop %v3690
        %v3707 = vtanh.pop %v3691
        %v3708 = vtanh.pop %v3692
        %v3709 = vtanh.pop %v3693
        %v3710 = vtanh.pop %v3694
        %v3711 = vtanh.pop %v3695
        %v3712 = vtanh.pop %v3696
        %v3713 = vtanh.pop %v3697
        %v3714 = vtanh.pop %v3698
        %v3715 = vtanh.pop %v3699
        %v3716 = vpack.c.bf16 %v3701, %v3700
        %v3717 = vpack.c.bf16 %v3703, %v3702
        %v3718 = vpack.c.bf16 %v3705, %v3704
        %v3719 = vpack.c.bf16 %v3707, %v3706
        %v3720 = vpack.c.bf16 %v3709, %v3708
        %v3721 = vpack.c.bf16 %v3711, %v3710
        %v3722 = vpack.c.bf16 %v3713, %v3712
        %v3723 = vpack.c.bf16 %v3715, %v3714
        %v3724 = vld [vmem:[#allocation23] sm:$0xf]
        %v3725 = vld [vmem:[#allocation23 + $0x4] sm:$0xf]
        %v3726 = vld [vmem:[#allocation23 + $0x8] sm:$0xf]
        %v3727 = vld [vmem:[#allocation23 + $0xc] sm:$0xf]
        %v3728 = vld [vmem:[#allocation23 + $0x10] sm:$0xf]
        %v3729 = vld [vmem:[#allocation23 + $0x14] sm:$0xf]
        %v3730 = vld [vmem:[#allocation23 + $0x18] sm:$0xf]
        %v3731 = vld [vmem:[#allocation23 + $0x1c] sm:$0xf]
        %v3732 = vld [vmem:[#allocation23 + $0x20] sm:$0xf]
        %v3733 = vld [vmem:[#allocation23 + $0x24] sm:$0xf]
        %v3734 = vld [vmem:[#allocation23 + $0x28] sm:$0xf]
        %v3735 = vld [vmem:[#allocation23 + $0x2c] sm:$0xf]
        %v3736 = vld [vmem:[#allocation23 + $0x30] sm:$0xf]
        %v3737 = vld [vmem:[#allocation23 + $0x34] sm:$0xf]
        %v3738 = vld [vmem:[#allocation23 + $0x38] sm:$0xf]
        %v3739 = vld [vmem:[#allocation23 + $0x3c] sm:$0xf]
        %v3740 = vld [vmem:[%s13] sm:$0x1]
        %v3742 = vlaneseq
        %v3743 = vshrl.u32 %v3742, 7
        %v3744 = vsub.s32 0, %v3743
        %v3745 = vrot.slane %v3740, %v3744
        %v3763 = vunpack.c.l.b16 %v3724
        %v3764 = vunpack.c.l.b16 %v3725
        %v3765 = vunpack.c.l.b16 %v3726
        %v3766 = vunpack.c.l.b16 %v3727
        %v3767 = vunpack.c.l.b16 %v3728
        %v3768 = vunpack.c.l.b16 %v3729
        %v3769 = vunpack.c.l.b16 %v3730
        %v3770 = vunpack.c.l.b16 %v3731
        %v3771 = vunpack.c.l.b16 %v3732
        %v3772 = vunpack.c.l.b16 %v3733
        %v3773 = vunpack.c.l.b16 %v3734
        %v3774 = vunpack.c.l.b16 %v3735
        %v3775 = vunpack.c.l.b16 %v3736
        %v3776 = vunpack.c.l.b16 %v3737
        %v3777 = vunpack.c.l.b16 %v3738
        %v3778 = vunpack.c.l.b16 %v3739
        %v3779 = vpack.c.b16 %v3764, %v3763
        %v3780 = vpack.c.b16 %v3766, %v3765
        %v3781 = vpack.c.b16 %v3768, %v3767
        %v3782 = vpack.c.b16 %v3770, %v3769
        %v3783 = vpack.c.b16 %v3772, %v3771
        %v3784 = vpack.c.b16 %v3774, %v3773
        %v3785 = vpack.c.b16 %v3776, %v3775
        %v3786 = vpack.c.b16 %v3778, %v3777
        %3795 = vmatprep.subr.bf16.mxu0 0
        %3796 = vmatpush1.bf16.msra.mxu0 %v3779
        %3797 = vmatprep.subr.bf16.mxu0 0
        %3798 = vmatpush1.bf16.msra.mxu0 %v3780
        %3799 = vmatprep.subr.bf16.mxu0 0
        %3800 = vmatpush1.bf16.msra.mxu0 %v3781
        %3801 = vmatprep.subr.bf16.mxu0 0
        %3802 = vmatpush1.bf16.msra.mxu0 %v3782
        %3803 = vmatprep.subr.bf16.mxu0 0
        %3804 = vmatpush1.bf16.msra.mxu0 %v3783
        %3805 = vmatprep.subr.bf16.mxu0 0
        %3806 = vmatpush1.bf16.msra.mxu0 %v3784
        %3807 = vmatprep.subr.bf16.mxu0 0
        %3808 = vmatpush1.bf16.msra.mxu0 %v3785
        %3809 = vmatprep.subr.bf16.mxu0 0
        %3810 = vmatpush1.bf16.msra.mxu0 %v3786
        %3811 = vmatprep.subr.bf16.mxu0 0
        %3812 = vmatpush1.bf16.msra.mxu0 0
        %3813 = vmatprep.subr.bf16.mxu0 0
        %3814 = vmatpush1.bf16.msra.mxu0 0
        %3815 = vmatprep.subr.bf16.mxu0 0
        %3816 = vmatpush1.bf16.msra.mxu0 0
        %3817 = vmatprep.subr.bf16.mxu0 0
        %3818 = vmatpush1.bf16.msra.mxu0 0
        %3819 = vmatprep.subr.bf16.mxu0 0
        %3820 = vmatpush1.bf16.msra.mxu0 0
        %3821 = vmatprep.subr.bf16.mxu0 0
        %3822 = vmatpush1.bf16.msra.mxu0 0
        %3823 = vmatprep.subr.bf16.mxu0 0
        %3824 = vmatpush1.bf16.msra.mxu0 0
        %3825 = vmatprep.subr.bf16.mxu0 0
        %3826 = vmatpush1.bf16.msra.mxu0 0
        %3827 = vmatprep.mubr.bf16.mxu0 0
        %3828 = vmatmul.mubr.bf16.gmra.mrb[0].mxu0 %v3716
        %v3829 = vpop.f32.mrb[0].mxu0
        %v3830 = vadd.f32 %v3745, %v3829
        %v3831 = vpop.f32.mrb[0].mxu0
        %v3832 = vpop.f32.mrb[0].mxu0
        %v3833 = vadd.f32 %v3745, %v3832
        %v3834 = vpop.f32.mrb[0].mxu0
        %3835 = vmatprep.mubr.bf16.mxu0 0
        %3836 = vmatmul.mubr.bf16.gmra.mrb[0].mxu0 %v3717
        %v3837 = vpop.f32.mrb[0].mxu0
        %v3838 = vadd.f32 %v3745, %v3837
        %v3839 = vpop.f32.mrb[0].mxu0
        %v3840 = vpop.f32.mrb[0].mxu0
        %v3841 = vadd.f32 %v3745, %v3840
        %v3842 = vpop.f32.mrb[0].mxu0
        %3843 = vmatprep.mubr.bf16.mxu0 0
        %3844 = vmatmul.mubr.bf16.gmra.mrb[0].mxu0 %v3718
        %v3845 = vpop.f32.mrb[0].mxu0
        %v3846 = vadd.f32 %v3745, %v3845
        %v3847 = vpop.f32.mrb[0].mxu0
        %v3848 = vpop.f32.mrb[0].mxu0
        %v3849 = vadd.f32 %v3745, %v3848
        %v3850 = vpop.f32.mrb[0].mxu0
        %3851 = vmatprep.mubr.bf16.mxu0 0
        %3852 = vmatmul.mubr.bf16.gmra.mrb[0].mxu0 %v3719
        %v3853 = vpop.f32.mrb[0].mxu0
        %v3854 = vadd.f32 %v3745, %v3853
        %v3855 = vpop.f32.mrb[0].mxu0
        %v3856 = vpop.f32.mrb[0].mxu0
        %v3857 = vadd.f32 %v3745, %v3856
        %v3858 = vpop.f32.mrb[0].mxu0
        %3859 = vmatprep.mubr.bf16.mxu0 0
        %3860 = vmatmul.mubr.bf16.gmra.mrb[0].mxu0 %v3720
        %v3861 = vpop.f32.mrb[0].mxu0
        %v3862 = vadd.f32 %v3745, %v3861
        %v3863 = vpop.f32.mrb[0].mxu0
        %v3864 = vpop.f32.mrb[0].mxu0
        %v3865 = vadd.f32 %v3745, %v3864
        %v3866 = vpop.f32.mrb[0].mxu0
        %3867 = vmatprep.mubr.bf16.mxu0 0
        %3868 = vmatmul.mubr.bf16.gmra.mrb[0].mxu0 %v3721
        %v3869 = vpop.f32.mrb[0].mxu0
        %v3870 = vadd.f32 %v3745, %v3869
        %v3871 = vpop.f32.mrb[0].mxu0
        %v3872 = vpop.f32.mrb[0].mxu0
        %v3873 = vadd.f32 %v3745, %v3872
        %v3874 = vpop.f32.mrb[0].mxu0
        %3875 = vmatprep.mubr.bf16.mxu0 0
        %3876 = vmatmul.mubr.bf16.gmra.mrb[0].mxu0 %v3722
        %v3877 = vpop.f32.mrb[0].mxu0
        %v3878 = vadd.f32 %v3745, %v3877
        %v3879 = vpop.f32.mrb[0].mxu0
        %v3880 = vpop.f32.mrb[0].mxu0
        %v3881 = vadd.f32 %v3745, %v3880
        %v3882 = vpop.f32.mrb[0].mxu0
        %3883 = vmatprep.mubr.bf16.mxu0 0
        %3884 = vmatmul.mubr.bf16.gmra.mrb[0].mxu0 %v3723
        %v3885 = vpop.f32.mrb[0].mxu0
        %v3886 = vadd.f32 %v3745, %v3885
        %v3887 = vpop.f32.mrb[0].mxu0
        %v3888 = vpop.f32.mrb[0].mxu0
        %v3889 = vadd.f32 %v3745, %v3888
        %v3890 = vpop.f32.mrb[0].mxu0
        %3891 = vdwg.mxu0
        %v3892 = vtanh.pop %v3830
        %v3893 = vtanh.pop %v3833
        %v3894 = vtanh.pop %v3838
        %v3895 = vtanh.pop %v3841
        %v3896 = vtanh.pop %v3846
        %v3897 = vtanh.pop %v3849
        %v3898 = vtanh.pop %v3854
        %v3899 = vtanh.pop %v3857
        %v3900 = vtanh.pop %v3862
        %v3901 = vtanh.pop %v3865
        %v3902 = vtanh.pop %v3870
        %v3903 = vtanh.pop %v3873
        %v3904 = vtanh.pop %v3878
        %v3905 = vtanh.pop %v3881
        %v3906 = vtanh.pop %v3886
        %v3907 = vtanh.pop %v3889
        %v3908 = vmul.f32 %v3892, %v2023
        %v3909 = vmul.f32 %v3893, %v2023
        %v3910 = vmul.f32 %v3894, %v2023
        %v3911 = vmul.f32 %v3895, %v2023
        %v3912 = vmul.f32 %v3896, %v2023
        %v3913 = vmul.f32 %v3897, %v2023
        %v3914 = vmul.f32 %v3898, %v2023
        %v3915 = vmul.f32 %v3899, %v2023
        %v3916 = vmul.f32 %v3900, %v2023
        %v3917 = vmul.f32 %v3901, %v2023
        %v3918 = vmul.f32 %v3902, %v2023
        %v3919 = vmul.f32 %v3903, %v2023
        %v3920 = vmul.f32 %v3904, %v2023
        %v3921 = vmul.f32 %v3905, %v2023
        %v3922 = vmul.f32 %v3906, %v2023
        %v3923 = vmul.f32 %v3907, %v2023
        %3924 = vadd.xlane.f32.xlu0 %v3908
        %v3925 = vpop.xlane.xlu0 %3924
        %3926 = vadd.xlane.f32.xlu0 %v3909
        %v3927 = vpop.xlane.xlu0 %3926
        %3928 = vadd.xlane.f32.xlu0 %v3910
        %v3929 = vpop.xlane.xlu0 %3928
        %3930 = vadd.xlane.f32.xlu0 %v3911
        %v3931 = vpop.xlane.xlu0 %3930
        %3932 = vadd.xlane.f32.xlu0 %v3912
        %v3933 = vpop.xlane.xlu0 %3932
        %3934 = vadd.xlane.f32.xlu0 %v3913
        %v3935 = vpop.xlane.xlu0 %3934
        %3936 = vadd.xlane.f32.xlu0 %v3914
        %v3937 = vpop.xlane.xlu0 %3936
        %3938 = vadd.xlane.f32.xlu0 %v3915
        %v3939 = vpop.xlane.xlu0 %3938
        %3940 = vadd.xlane.f32.xlu0 %v3916
        %v3941 = vpop.xlane.xlu0 %3940
        %3942 = vadd.xlane.f32.xlu0 %v3917
        %v3943 = vpop.xlane.xlu0 %3942
        %3944 = vadd.xlane.f32.xlu0 %v3918
        %v3945 = vpop.xlane.xlu0 %3944
        %3946 = vadd.xlane.f32.xlu0 %v3919
        %v3947 = vpop.xlane.xlu0 %3946
        %3948 = vadd.xlane.f32.xlu0 %v3920
        %v3949 = vpop.xlane.xlu0 %3948
        %3950 = vadd.xlane.f32.xlu0 %v3921
        %v3951 = vpop.xlane.xlu0 %3950
        %3952 = vadd.xlane.f32.xlu0 %v3922
        %v3953 = vpop.xlane.xlu0 %3952
        %3954 = vadd.xlane.f32.xlu0 %v3923
        %v3955 = vpop.xlane.xlu0 %3954
        %v3972 = vadd.s32 %v2090, 4294967216
        %v3973 = vlaneseq
        %v3974 = vshrl.u32 %v3973, 7
        %v3975 = vsub.s32 %v3972, %v3974
        %v3976 = vrot.slane %v3925, %v3975
        %v3977 = vadd.s32 %v2090, 4294967208
        %v3978 = vlaneseq
        %v3979 = vshrl.u32 %v3978, 7
        %v3980 = vsub.s32 %v3977, %v3979
        %v3981 = vrot.slane %v3927, %v3980
        %vm3982 = vcmask 786112
        %v3983 = vsel %vm3982, %v3981, %v3976
        %v3984 = vlaneseq
        %v3985 = vshrl.u32 %v3984, 7
        %v3986 = vsub.s32 %v3972, %v3985
        %v3987 = vrot.slane %v3929, %v3986
        %v3988 = vlaneseq
        %v3989 = vshrl.u32 %v3988, 7
        %v3990 = vsub.s32 %v3977, %v3989
        %v3991 = vrot.slane %v3931, %v3990
        %v3992 = vsel %vm3982, %v3991, %v3987
        %v3993 = vlaneseq
        %v3994 = vshrl.u32 %v3993, 7
        %v3995 = vsub.s32 %v3972, %v3994
        %v3996 = vrot.slane %v3933, %v3995
        %v3997 = vlaneseq
        %v3998 = vshrl.u32 %v3997, 7
        %v3999 = vsub.s32 %v3977, %v3998
        %v4000 = vrot.slane %v3935, %v3999
        %v4001 = vsel %vm3982, %v4000, %v3996
        %v4002 = vlaneseq
        %v4003 = vshrl.u32 %v4002, 7
        %v4004 = vsub.s32 %v3972, %v4003
        %v4005 = vrot.slane %v3937, %v4004
        %v4006 = vlaneseq
        %v4007 = vshrl.u32 %v4006, 7
        %v4008 = vsub.s32 %v3977, %v4007
        %v4009 = vrot.slane %v3939, %v4008
        %v4010 = vsel %vm3982, %v4009, %v4005
        %v4011 = vlaneseq
        %v4012 = vshrl.u32 %v4011, 7
        %v4013 = vsub.s32 %v3972, %v4012
        %v4014 = vrot.slane %v3941, %v4013
        %v4015 = vlaneseq
        %v4016 = vshrl.u32 %v4015, 7
        %v4017 = vsub.s32 %v3977, %v4016
        %v4018 = vrot.slane %v3943, %v4017
        %v4019 = vsel %vm3982, %v4018, %v4014
        %v4020 = vlaneseq
        %v4021 = vshrl.u32 %v4020, 7
        %v4022 = vsub.s32 %v3972, %v4021
        %v4023 = vrot.slane %v3945, %v4022
        %v4024 = vlaneseq
        %v4025 = vshrl.u32 %v4024, 7
        %v4026 = vsub.s32 %v3977, %v4025
        %v4027 = vrot.slane %v3947, %v4026
        %v4028 = vsel %vm3982, %v4027, %v4023
        %v4029 = vlaneseq
        %v4030 = vshrl.u32 %v4029, 7
        %v4031 = vsub.s32 %v3972, %v4030
        %v4032 = vrot.slane %v3949, %v4031
        %v4033 = vlaneseq
        %v4034 = vshrl.u32 %v4033, 7
        %v4035 = vsub.s32 %v3977, %v4034
        %v4036 = vrot.slane %v3951, %v4035
        %v4037 = vsel %vm3982, %v4036, %v4032
        %v4038 = vlaneseq
        %v4039 = vshrl.u32 %v4038, 7
        %v4040 = vsub.s32 %v3972, %v4039
        %v4041 = vrot.slane %v3953, %v4040
        %v4042 = vlaneseq
        %v4043 = vshrl.u32 %v4042, 7
        %v4044 = vsub.s32 %v3977, %v4043
        %v4045 = vrot.slane %v3955, %v4044
        %v4046 = vsel %vm3982, %v4045, %v4041
        %v4047 = vsel %vm2165, %v3992, %v3983
        %v4048 = vsel %vm2167, %v4001, %v4047
        %v4049 = vsel %vm2169, %v4010, %v4048
        %v4050 = vsel %vm2171, %v4019, %v4049
        %v4051 = vsel %vm2173, %v4028, %v4050
        %v4052 = vsel %vm2175, %v4037, %v4051
        %v4053 = vsel %vm2177, %v4046, %v4052
        %vm4055 = vcmask 786048
        %4056 = vst.msk [vmem:[#allocation7] sm:$0xff] %vm4055, %v4053
        %v4057 = vld [vmem:[#allocation5 + $0x60] sm:$0xff]
        %v4058 = vld [vmem:[#allocation5 + $0x68] sm:$0xff]
        %v4059 = vadd.f32 %v1758, %v4057
        %v4060 = vadd.f32 %v1758, %v4058
        %v4061 = vadd.f32 %v1762, %v4057
        %v4062 = vadd.f32 %v1762, %v4058
        %v4063 = vadd.f32 %v1766, %v4057
        %v4064 = vadd.f32 %v1766, %v4058
        %v4065 = vadd.f32 %v1770, %v4057
        %v4066 = vadd.f32 %v1770, %v4058
        %v4067 = vadd.f32 %v1774, %v4057
        %v4068 = vadd.f32 %v1774, %v4058
        %v4069 = vadd.f32 %v1778, %v4057
        %v4070 = vadd.f32 %v1778, %v4058
        %v4071 = vadd.f32 %v1782, %v4057
        %v4072 = vadd.f32 %v1782, %v4058
        %v4073 = vadd.f32 %v1786, %v4057
        %v4074 = vadd.f32 %v1786, %v4058
        %v4075 = vtanh.pop %v4059
        %v4076 = vtanh.pop %v4060
        %v4077 = vtanh.pop %v4061
        %v4078 = vtanh.pop %v4062
        %v4079 = vtanh.pop %v4063
        %v4080 = vtanh.pop %v4064
        %v4081 = vtanh.pop %v4065
        %v4082 = vtanh.pop %v4066
        %v4083 = vtanh.pop %v4067
        %v4084 = vtanh.pop %v4068
        %v4085 = vtanh.pop %v4069
        %v4086 = vtanh.pop %v4070
        %v4087 = vtanh.pop %v4071
        %v4088 = vtanh.pop %v4072
        %v4089 = vtanh.pop %v4073
        %v4090 = vtanh.pop %v4074
        %v4091 = vpack.c.bf16 %v4076, %v4075
        %v4092 = vpack.c.bf16 %v4078, %v4077
        %v4093 = vpack.c.bf16 %v4080, %v4079
        %v4094 = vpack.c.bf16 %v4082, %v4081
        %v4095 = vpack.c.bf16 %v4084, %v4083
        %v4096 = vpack.c.bf16 %v4086, %v4085
        %v4097 = vpack.c.bf16 %v4088, %v4087
        %v4098 = vpack.c.bf16 %v4090, %v4089
        %v4099 = vld [vmem:[#allocation23] sm:$0xf]
        %v4100 = vld [vmem:[#allocation23 + $0x4] sm:$0xf]
        %v4101 = vld [vmem:[#allocation23 + $0x8] sm:$0xf]
        %v4102 = vld [vmem:[#allocation23 + $0xc] sm:$0xf]
        %v4103 = vld [vmem:[#allocation23 + $0x10] sm:$0xf]
        %v4104 = vld [vmem:[#allocation23 + $0x14] sm:$0xf]
        %v4105 = vld [vmem:[#allocation23 + $0x18] sm:$0xf]
        %v4106 = vld [vmem:[#allocation23 + $0x1c] sm:$0xf]
        %v4107 = vld [vmem:[#allocation23 + $0x20] sm:$0xf]
        %v4108 = vld [vmem:[#allocation23 + $0x24] sm:$0xf]
        %v4109 = vld [vmem:[#allocation23 + $0x28] sm:$0xf]
        %v4110 = vld [vmem:[#allocation23 + $0x2c] sm:$0xf]
        %v4111 = vld [vmem:[#allocation23 + $0x30] sm:$0xf]
        %v4112 = vld [vmem:[#allocation23 + $0x34] sm:$0xf]
        %v4113 = vld [vmem:[#allocation23 + $0x38] sm:$0xf]
        %v4114 = vld [vmem:[#allocation23 + $0x3c] sm:$0xf]
        %v4115 = vld [vmem:[%s13] sm:$0x1]
        %v4117 = vlaneseq
        %v4118 = vshrl.u32 %v4117, 7
        %v4119 = vsub.s32 0, %v4118
        %v4120 = vrot.slane %v4115, %v4119
        %v4138 = vunpack.c.l.b16 %v4099
        %v4139 = vunpack.c.l.b16 %v4100
        %v4140 = vunpack.c.l.b16 %v4101
        %v4141 = vunpack.c.l.b16 %v4102
        %v4142 = vunpack.c.l.b16 %v4103
        %v4143 = vunpack.c.l.b16 %v4104
        %v4144 = vunpack.c.l.b16 %v4105
        %v4145 = vunpack.c.l.b16 %v4106
        %v4146 = vunpack.c.l.b16 %v4107
        %v4147 = vunpack.c.l.b16 %v4108
        %v4148 = vunpack.c.l.b16 %v4109
        %v4149 = vunpack.c.l.b16 %v4110
        %v4150 = vunpack.c.l.b16 %v4111
        %v4151 = vunpack.c.l.b16 %v4112
        %v4152 = vunpack.c.l.b16 %v4113
        %v4153 = vunpack.c.l.b16 %v4114
        %v4154 = vpack.c.b16 %v4139, %v4138
        %v4155 = vpack.c.b16 %v4141, %v4140
        %v4156 = vpack.c.b16 %v4143, %v4142
        %v4157 = vpack.c.b16 %v4145, %v4144
        %v4158 = vpack.c.b16 %v4147, %v4146
        %v4159 = vpack.c.b16 %v4149, %v4148
        %v4160 = vpack.c.b16 %v4151, %v4150
        %v4161 = vpack.c.b16 %v4153, %v4152
        %4170 = vmatprep.subr.bf16.mxu0 0
        %4171 = vmatpush1.bf16.msra.mxu0 %v4154
        %4172 = vmatprep.subr.bf16.mxu0 0
        %4173 = vmatpush1.bf16.msra.mxu0 %v4155
        %4174 = vmatprep.subr.bf16.mxu0 0
        %4175 = vmatpush1.bf16.msra.mxu0 %v4156
        %4176 = vmatprep.subr.bf16.mxu0 0
        %4177 = vmatpush1.bf16.msra.mxu0 %v4157
        %4178 = vmatprep.subr.bf16.mxu0 0
        %4179 = vmatpush1.bf16.msra.mxu0 %v4158
        %4180 = vmatprep.subr.bf16.mxu0 0
        %4181 = vmatpush1.bf16.msra.mxu0 %v4159
        %4182 = vmatprep.subr.bf16.mxu0 0
        %4183 = vmatpush1.bf16.msra.mxu0 %v4160
        %4184 = vmatprep.subr.bf16.mxu0 0
        %4185 = vmatpush1.bf16.msra.mxu0 %v4161
        %4186 = vmatprep.subr.bf16.mxu0 0
        %4187 = vmatpush1.bf16.msra.mxu0 0
        %4188 = vmatprep.subr.bf16.mxu0 0
        %4189 = vmatpush1.bf16.msra.mxu0 0
        %4190 = vmatprep.subr.bf16.mxu0 0
        %4191 = vmatpush1.bf16.msra.mxu0 0
        %4192 = vmatprep.subr.bf16.mxu0 0
        %4193 = vmatpush1.bf16.msra.mxu0 0
        %4194 = vmatprep.subr.bf16.mxu0 0
        %4195 = vmatpush1.bf16.msra.mxu0 0
        %4196 = vmatprep.subr.bf16.mxu0 0
        %4197 = vmatpush1.bf16.msra.mxu0 0
        %4198 = vmatprep.subr.bf16.mxu0 0
        %4199 = vmatpush1.bf16.msra.mxu0 0
        %4200 = vmatprep.subr.bf16.mxu0 0
        %4201 = vmatpush1.bf16.msra.mxu0 0
        %4202 = vmatprep.mubr.bf16.mxu0 0
        %4203 = vmatmul.mubr.bf16.gmra.mrb[0].mxu0 %v4091
        %v4204 = vpop.f32.mrb[0].mxu0
        %v4205 = vadd.f32 %v4120, %v4204
        %v4206 = vpop.f32.mrb[0].mxu0
        %v4207 = vpop.f32.mrb[0].mxu0
        %v4208 = vadd.f32 %v4120, %v4207
        %v4209 = vpop.f32.mrb[0].mxu0
        %4210 = vmatprep.mubr.bf16.mxu0 0
        %4211 = vmatmul.mubr.bf16.gmra.mrb[0].mxu0 %v4092
        %v4212 = vpop.f32.mrb[0].mxu0
        %v4213 = vadd.f32 %v4120, %v4212
        %v4214 = vpop.f32.mrb[0].mxu0
        %v4215 = vpop.f32.mrb[0].mxu0
        %v4216 = vadd.f32 %v4120, %v4215
        %v4217 = vpop.f32.mrb[0].mxu0
        %4218 = vmatprep.mubr.bf16.mxu0 0
        %4219 = vmatmul.mubr.bf16.gmra.mrb[0].mxu0 %v4093
        %v4220 = vpop.f32.mrb[0].mxu0
        %v4221 = vadd.f32 %v4120, %v4220
        %v4222 = vpop.f32.mrb[0].mxu0
        %v4223 = vpop.f32.mrb[0].mxu0
        %v4224 = vadd.f32 %v4120, %v4223
        %v4225 = vpop.f32.mrb[0].mxu0
        %4226 = vmatprep.mubr.bf16.mxu0 0
        %4227 = vmatmul.mubr.bf16.gmra.mrb[0].mxu0 %v4094
        %v4228 = vpop.f32.mrb[0].mxu0
        %v4229 = vadd.f32 %v4120, %v4228
        %v4230 = vpop.f32.mrb[0].mxu0
        %v4231 = vpop.f32.mrb[0].mxu0
        %v4232 = vadd.f32 %v4120, %v4231
        %v4233 = vpop.f32.mrb[0].mxu0
        %4234 = vmatprep.mubr.bf16.mxu0 0
        %4235 = vmatmul.mubr.bf16.gmra.mrb[0].mxu0 %v4095
        %v4236 = vpop.f32.mrb[0].mxu0
        %v4237 = vadd.f32 %v4120, %v4236
        %v4238 = vpop.f32.mrb[0].mxu0
        %v4239 = vpop.f32.mrb[0].mxu0
        %v4240 = vadd.f32 %v4120, %v4239
        %v4241 = vpop.f32.mrb[0].mxu0
        %4242 = vmatprep.mubr.bf16.mxu0 0
        %4243 = vmatmul.mubr.bf16.gmra.mrb[0].mxu0 %v4096
        %v4244 = vpop.f32.mrb[0].mxu0
        %v4245 = vadd.f32 %v4120, %v4244
        %v4246 = vpop.f32.mrb[0].mxu0
        %v4247 = vpop.f32.mrb[0].mxu0
        %v4248 = vadd.f32 %v4120, %v4247
        %v4249 = vpop.f32.mrb[0].mxu0
        %4250 = vmatprep.mubr.bf16.mxu0 0
        %4251 = vmatmul.mubr.bf16.gmra.mrb[0].mxu0 %v4097
        %v4252 = vpop.f32.mrb[0].mxu0
        %v4253 = vadd.f32 %v4120, %v4252
        %v4254 = vpop.f32.mrb[0].mxu0
        %v4255 = vpop.f32.mrb[0].mxu0
        %v4256 = vadd.f32 %v4120, %v4255
        %v4257 = vpop.f32.mrb[0].mxu0
        %4258 = vmatprep.mubr.bf16.mxu0 0
        %4259 = vmatmul.mubr.bf16.gmra.mrb[0].mxu0 %v4098
        %v4260 = vpop.f32.mrb[0].mxu0
        %v4261 = vadd.f32 %v4120, %v4260
        %v4262 = vpop.f32.mrb[0].mxu0
        %v4263 = vpop.f32.mrb[0].mxu0
        %v4264 = vadd.f32 %v4120, %v4263
        %v4265 = vpop.f32.mrb[0].mxu0
        %4266 = vdwg.mxu0
        %v4267 = vtanh.pop %v4205
        %v4268 = vtanh.pop %v4208
        %v4269 = vtanh.pop %v4213
        %v4270 = vtanh.pop %v4216
        %v4271 = vtanh.pop %v4221
        %v4272 = vtanh.pop %v4224
        %v4273 = vtanh.pop %v4229
        %v4274 = vtanh.pop %v4232
        %v4275 = vtanh.pop %v4237
        %v4276 = vtanh.pop %v4240
        %v4277 = vtanh.pop %v4245
        %v4278 = vtanh.pop %v4248
        %v4279 = vtanh.pop %v4253
        %v4280 = vtanh.pop %v4256
        %v4281 = vtanh.pop %v4261
        %v4282 = vtanh.pop %v4264
        %v4283 = vmul.f32 %v4267, %v2023
        %v4284 = vmul.f32 %v4268, %v2023
        %v4285 = vmul.f32 %v4269, %v2023
        %v4286 = vmul.f32 %v4270, %v2023
        %v4287 = vmul.f32 %v4271, %v2023
        %v4288 = vmul.f32 %v4272, %v2023
        %v4289 = vmul.f32 %v4273, %v2023
        %v4290 = vmul.f32 %v4274, %v2023
        %v4291 = vmul.f32 %v4275, %v2023
        %v4292 = vmul.f32 %v4276, %v2023
        %v4293 = vmul.f32 %v4277, %v2023
        %v4294 = vmul.f32 %v4278, %v2023
        %v4295 = vmul.f32 %v4279, %v2023
        %v4296 = vmul.f32 %v4280, %v2023
        %v4297 = vmul.f32 %v4281, %v2023
        %v4298 = vmul.f32 %v4282, %v2023
        %4299 = vadd.xlane.f32.xlu0 %v4283
        %v4300 = vpop.xlane.xlu0 %4299
        %4301 = vadd.xlane.f32.xlu0 %v4284
        %v4302 = vpop.xlane.xlu0 %4301
        %4303 = vadd.xlane.f32.xlu0 %v4285
        %v4304 = vpop.xlane.xlu0 %4303
        %4305 = vadd.xlane.f32.xlu0 %v4286
        %v4306 = vpop.xlane.xlu0 %4305
        %4307 = vadd.xlane.f32.xlu0 %v4287
        %v4308 = vpop.xlane.xlu0 %4307
        %4309 = vadd.xlane.f32.xlu0 %v4288
        %v4310 = vpop.xlane.xlu0 %4309
        %4311 = vadd.xlane.f32.xlu0 %v4289
        %v4312 = vpop.xlane.xlu0 %4311
        %4313 = vadd.xlane.f32.xlu0 %v4290
        %v4314 = vpop.xlane.xlu0 %4313
        %4315 = vadd.xlane.f32.xlu0 %v4291
        %v4316 = vpop.xlane.xlu0 %4315
        %4317 = vadd.xlane.f32.xlu0 %v4292
        %v4318 = vpop.xlane.xlu0 %4317
        %4319 = vadd.xlane.f32.xlu0 %v4293
        %v4320 = vpop.xlane.xlu0 %4319
        %4321 = vadd.xlane.f32.xlu0 %v4294
        %v4322 = vpop.xlane.xlu0 %4321
        %4323 = vadd.xlane.f32.xlu0 %v4295
        %v4324 = vpop.xlane.xlu0 %4323
        %4325 = vadd.xlane.f32.xlu0 %v4296
        %v4326 = vpop.xlane.xlu0 %4325
        %4327 = vadd.xlane.f32.xlu0 %v4297
        %v4328 = vpop.xlane.xlu0 %4327
        %4329 = vadd.xlane.f32.xlu0 %v4298
        %v4330 = vpop.xlane.xlu0 %4329
        %v4347 = vadd.s32 %v2090, 4294967200
        %v4348 = vlaneseq
        %v4349 = vshrl.u32 %v4348, 7
        %v4350 = vsub.s32 %v4347, %v4349
        %v4351 = vrot.slane %v4300, %v4350
        %v4352 = vadd.s32 %v2090, 4294967192
        %v4353 = vlaneseq
        %v4354 = vshrl.u32 %v4353, 7
        %v4355 = vsub.s32 %v4352, %v4354
        %v4356 = vrot.slane %v4302, %v4355
        %vm4357 = vcmask 917312
        %v4358 = vsel %vm4357, %v4356, %v4351
        %v4359 = vlaneseq
        %v4360 = vshrl.u32 %v4359, 7
        %v4361 = vsub.s32 %v4347, %v4360
        %v4362 = vrot.slane %v4304, %v4361
        %v4363 = vlaneseq
        %v4364 = vshrl.u32 %v4363, 7
        %v4365 = vsub.s32 %v4352, %v4364
        %v4366 = vrot.slane %v4306, %v4365
        %v4367 = vsel %vm4357, %v4366, %v4362
        %v4368 = vlaneseq
        %v4369 = vshrl.u32 %v4368, 7
        %v4370 = vsub.s32 %v4347, %v4369
        %v4371 = vrot.slane %v4308, %v4370
        %v4372 = vlaneseq
        %v4373 = vshrl.u32 %v4372, 7
        %v4374 = vsub.s32 %v4352, %v4373
        %v4375 = vrot.slane %v4310, %v4374
        %v4376 = vsel %vm4357, %v4375, %v4371
        %v4377 = vlaneseq
        %v4378 = vshrl.u32 %v4377, 7
        %v4379 = vsub.s32 %v4347, %v4378
        %v4380 = vrot.slane %v4312, %v4379
        %v4381 = vlaneseq
        %v4382 = vshrl.u32 %v4381, 7
        %v4383 = vsub.s32 %v4352, %v4382
        %v4384 = vrot.slane %v4314, %v4383
        %v4385 = vsel %vm4357, %v4384, %v4380
        %v4386 = vlaneseq
        %v4387 = vshrl.u32 %v4386, 7
        %v4388 = vsub.s32 %v4347, %v4387
        %v4389 = vrot.slane %v4316, %v4388
        %v4390 = vlaneseq
        %v4391 = vshrl.u32 %v4390, 7
        %v4392 = vsub.s32 %v4352, %v4391
        %v4393 = vrot.slane %v4318, %v4392
        %v4394 = vsel %vm4357, %v4393, %v4389
        %v4395 = vlaneseq
        %v4396 = vshrl.u32 %v4395, 7
        %v4397 = vsub.s32 %v4347, %v4396
        %v4398 = vrot.slane %v4320, %v4397
        %v4399 = vlaneseq
        %v4400 = vshrl.u32 %v4399, 7
        %v4401 = vsub.s32 %v4352, %v4400
        %v4402 = vrot.slane %v4322, %v4401
        %v4403 = vsel %vm4357, %v4402, %v4398
        %v4404 = vlaneseq
        %v4405 = vshrl.u32 %v4404, 7
        %v4406 = vsub.s32 %v4347, %v4405
        %v4407 = vrot.slane %v4324, %v4406
        %v4408 = vlaneseq
        %v4409 = vshrl.u32 %v4408, 7
        %v4410 = vsub.s32 %v4352, %v4409
        %v4411 = vrot.slane %v4326, %v4410
        %v4412 = vsel %vm4357, %v4411, %v4407
        %v4413 = vlaneseq
        %v4414 = vshrl.u32 %v4413, 7
        %v4415 = vsub.s32 %v4347, %v4414
        %v4416 = vrot.slane %v4328, %v4415
        %v4417 = vlaneseq
        %v4418 = vshrl.u32 %v4417, 7
        %v4419 = vsub.s32 %v4352, %v4418
        %v4420 = vrot.slane %v4330, %v4419
        %v4421 = vsel %vm4357, %v4420, %v4416
        %v4422 = vsel %vm2165, %v4367, %v4358
        %v4423 = vsel %vm2167, %v4376, %v4422
        %v4424 = vsel %vm2169, %v4385, %v4423
        %v4425 = vsel %vm2171, %v4394, %v4424
        %v4426 = vsel %vm2173, %v4403, %v4425
        %v4427 = vsel %vm2175, %v4412, %v4426
        %v4428 = vsel %vm2177, %v4421, %v4427
        %vm4430 = vcmask 917248
        %4431 = vst.msk [vmem:[#allocation7] sm:$0xff] %vm4430, %v4428
        %v4432 = vld [vmem:[#allocation5 + $0x70] sm:$0xff]
        %v4433 = vld [vmem:[#allocation5 + $0x78] sm:$0xff]
        %v4434 = vadd.f32 %v1758, %v4432
        %v4435 = vadd.f32 %v1758, %v4433
        %v4436 = vadd.f32 %v1762, %v4432
        %v4437 = vadd.f32 %v1762, %v4433
        %v4438 = vadd.f32 %v1766, %v4432
        %v4439 = vadd.f32 %v1766, %v4433
        %v4440 = vadd.f32 %v1770, %v4432
        %v4441 = vadd.f32 %v1770, %v4433
        %v4442 = vadd.f32 %v1774, %v4432
        %v4443 = vadd.f32 %v1774, %v4433
        %v4444 = vadd.f32 %v1778, %v4432
        %v4445 = vadd.f32 %v1778, %v4433
        %v4446 = vadd.f32 %v1782, %v4432
        %v4447 = vadd.f32 %v1782, %v4433
        %v4448 = vadd.f32 %v1786, %v4432
        %v4449 = vadd.f32 %v1786, %v4433
        %v4450 = vtanh.pop %v4434
        %v4451 = vtanh.pop %v4435
        %v4452 = vtanh.pop %v4436
        %v4453 = vtanh.pop %v4437
        %v4454 = vtanh.pop %v4438
        %v4455 = vtanh.pop %v4439
        %v4456 = vtanh.pop %v4440
        %v4457 = vtanh.pop %v4441
        %v4458 = vtanh.pop %v4442
        %v4459 = vtanh.pop %v4443
        %v4460 = vtanh.pop %v4444
        %v4461 = vtanh.pop %v4445
        %v4462 = vtanh.pop %v4446
        %v4463 = vtanh.pop %v4447
        %v4464 = vtanh.pop %v4448
        %v4465 = vtanh.pop %v4449
        %v4466 = vpack.c.bf16 %v4451, %v4450
        %v4467 = vpack.c.bf16 %v4453, %v4452
        %v4468 = vpack.c.bf16 %v4455, %v4454
        %v4469 = vpack.c.bf16 %v4457, %v4456
        %v4470 = vpack.c.bf16 %v4459, %v4458
        %v4471 = vpack.c.bf16 %v4461, %v4460
        %v4472 = vpack.c.bf16 %v4463, %v4462
        %v4473 = vpack.c.bf16 %v4465, %v4464
        %v4474 = vld [vmem:[#allocation23] sm:$0xf]
        %v4475 = vld [vmem:[#allocation23 + $0x4] sm:$0xf]
        %v4476 = vld [vmem:[#allocation23 + $0x8] sm:$0xf]
        %v4477 = vld [vmem:[#allocation23 + $0xc] sm:$0xf]
        %v4478 = vld [vmem:[#allocation23 + $0x10] sm:$0xf]
        %v4479 = vld [vmem:[#allocation23 + $0x14] sm:$0xf]
        %v4480 = vld [vmem:[#allocation23 + $0x18] sm:$0xf]
        %v4481 = vld [vmem:[#allocation23 + $0x1c] sm:$0xf]
        %v4482 = vld [vmem:[#allocation23 + $0x20] sm:$0xf]
        %v4483 = vld [vmem:[#allocation23 + $0x24] sm:$0xf]
        %v4484 = vld [vmem:[#allocation23 + $0x28] sm:$0xf]
        %v4485 = vld [vmem:[#allocation23 + $0x2c] sm:$0xf]
        %v4486 = vld [vmem:[#allocation23 + $0x30] sm:$0xf]
        %v4487 = vld [vmem:[#allocation23 + $0x34] sm:$0xf]
        %v4488 = vld [vmem:[#allocation23 + $0x38] sm:$0xf]
        %v4489 = vld [vmem:[#allocation23 + $0x3c] sm:$0xf]
        %v4490 = vld [vmem:[%s13] sm:$0x1]
        %v4492 = vlaneseq
        %v4493 = vshrl.u32 %v4492, 7
        %v4494 = vsub.s32 0, %v4493
        %v4495 = vrot.slane %v4490, %v4494
        %v4513 = vunpack.c.l.b16 %v4474
        %v4514 = vunpack.c.l.b16 %v4475
        %v4515 = vunpack.c.l.b16 %v4476
        %v4516 = vunpack.c.l.b16 %v4477
        %v4517 = vunpack.c.l.b16 %v4478
        %v4518 = vunpack.c.l.b16 %v4479
        %v4519 = vunpack.c.l.b16 %v4480
        %v4520 = vunpack.c.l.b16 %v4481
        %v4521 = vunpack.c.l.b16 %v4482
        %v4522 = vunpack.c.l.b16 %v4483
        %v4523 = vunpack.c.l.b16 %v4484
        %v4524 = vunpack.c.l.b16 %v4485
        %v4525 = vunpack.c.l.b16 %v4486
        %v4526 = vunpack.c.l.b16 %v4487
        %v4527 = vunpack.c.l.b16 %v4488
        %v4528 = vunpack.c.l.b16 %v4489
        %v4529 = vpack.c.b16 %v4514, %v4513
        %v4530 = vpack.c.b16 %v4516, %v4515
        %v4531 = vpack.c.b16 %v4518, %v4517
        %v4532 = vpack.c.b16 %v4520, %v4519
        %v4533 = vpack.c.b16 %v4522, %v4521
        %v4534 = vpack.c.b16 %v4524, %v4523
        %v4535 = vpack.c.b16 %v4526, %v4525
        %v4536 = vpack.c.b16 %v4528, %v4527
        %4545 = vmatprep.subr.bf16.mxu0 0
        %4546 = vmatpush1.bf16.msra.mxu0 %v4529
        %4547 = vmatprep.subr.bf16.mxu0 0
        %4548 = vmatpush1.bf16.msra.mxu0 %v4530
        %4549 = vmatprep.subr.bf16.mxu0 0
        %4550 = vmatpush1.bf16.msra.mxu0 %v4531
        %4551 = vmatprep.subr.bf16.mxu0 0
        %4552 = vmatpush1.bf16.msra.mxu0 %v4532
        %4553 = vmatprep.subr.bf16.mxu0 0
        %4554 = vmatpush1.bf16.msra.mxu0 %v4533
        %4555 = vmatprep.subr.bf16.mxu0 0
        %4556 = vmatpush1.bf16.msra.mxu0 %v4534
        %4557 = vmatprep.subr.bf16.mxu0 0
        %4558 = vmatpush1.bf16.msra.mxu0 %v4535
        %4559 = vmatprep.subr.bf16.mxu0 0
        %4560 = vmatpush1.bf16.msra.mxu0 %v4536
        %4561 = vmatprep.subr.bf16.mxu0 0
        %4562 = vmatpush1.bf16.msra.mxu0 0
        %4563 = vmatprep.subr.bf16.mxu0 0
        %4564 = vmatpush1.bf16.msra.mxu0 0
        %4565 = vmatprep.subr.bf16.mxu0 0
        %4566 = vmatpush1.bf16.msra.mxu0 0
        %4567 = vmatprep.subr.bf16.mxu0 0
        %4568 = vmatpush1.bf16.msra.mxu0 0
        %4569 = vmatprep.subr.bf16.mxu0 0
        %4570 = vmatpush1.bf16.msra.mxu0 0
        %4571 = vmatprep.subr.bf16.mxu0 0
        %4572 = vmatpush1.bf16.msra.mxu0 0
        %4573 = vmatprep.subr.bf16.mxu0 0
        %4574 = vmatpush1.bf16.msra.mxu0 0
        %4575 = vmatprep.subr.bf16.mxu0 0
        %4576 = vmatpush1.bf16.msra.mxu0 0
        %4577 = vmatprep.mubr.bf16.mxu0 0
        %4578 = vmatmul.mubr.bf16.gmra.mrb[0].mxu0 %v4466
        %v4579 = vpop.f32.mrb[0].mxu0
        %v4580 = vadd.f32 %v4495, %v4579
        %v4581 = vpop.f32.mrb[0].mxu0
        %v4582 = vpop.f32.mrb[0].mxu0
        %v4583 = vadd.f32 %v4495, %v4582
        %v4584 = vpop.f32.mrb[0].mxu0
        %4585 = vmatprep.mubr.bf16.mxu0 0
        %4586 = vmatmul.mubr.bf16.gmra.mrb[0].mxu0 %v4467
        %v4587 = vpop.f32.mrb[0].mxu0
        %v4588 = vadd.f32 %v4495, %v4587
        %v4589 = vpop.f32.mrb[0].mxu0
        %v4590 = vpop.f32.mrb[0].mxu0
        %v4591 = vadd.f32 %v4495, %v4590
        %v4592 = vpop.f32.mrb[0].mxu0
        %4593 = vmatprep.mubr.bf16.mxu0 0
        %4594 = vmatmul.mubr.bf16.gmra.mrb[0].mxu0 %v4468
        %v4595 = vpop.f32.mrb[0].mxu0
        %v4596 = vadd.f32 %v4495, %v4595
        %v4597 = vpop.f32.mrb[0].mxu0
        %v4598 = vpop.f32.mrb[0].mxu0
        %v4599 = vadd.f32 %v4495, %v4598
        %v4600 = vpop.f32.mrb[0].mxu0
        %4601 = vmatprep.mubr.bf16.mxu0 0
        %4602 = vmatmul.mubr.bf16.gmra.mrb[0].mxu0 %v4469
        %v4603 = vpop.f32.mrb[0].mxu0
        %v4604 = vadd.f32 %v4495, %v4603
        %v4605 = vpop.f32.mrb[0].mxu0
        %v4606 = vpop.f32.mrb[0].mxu0
        %v4607 = vadd.f32 %v4495, %v4606
        %v4608 = vpop.f32.mrb[0].mxu0
        %4609 = vmatprep.mubr.bf16.mxu0 0
        %4610 = vmatmul.mubr.bf16.gmra.mrb[0].mxu0 %v4470
        %v4611 = vpop.f32.mrb[0].mxu0
        %v4612 = vadd.f32 %v4495, %v4611
        %v4613 = vpop.f32.mrb[0].mxu0
        %v4614 = vpop.f32.mrb[0].mxu0
        %v4615 = vadd.f32 %v4495, %v4614
        %v4616 = vpop.f32.mrb[0].mxu0
        %4617 = vmatprep.mubr.bf16.mxu0 0
        %4618 = vmatmul.mubr.bf16.gmra.mrb[0].mxu0 %v4471
        %v4619 = vpop.f32.mrb[0].mxu0
        %v4620 = vadd.f32 %v4495, %v4619
        %v4621 = vpop.f32.mrb[0].mxu0
        %v4622 = vpop.f32.mrb[0].mxu0
        %v4623 = vadd.f32 %v4495, %v4622
        %v4624 = vpop.f32.mrb[0].mxu0
        %4625 = vmatprep.mubr.bf16.mxu0 0
        %4626 = vmatmul.mubr.bf16.gmra.mrb[0].mxu0 %v4472
        %v4627 = vpop.f32.mrb[0].mxu0
        %v4628 = vadd.f32 %v4495, %v4627
        %v4629 = vpop.f32.mrb[0].mxu0
        %v4630 = vpop.f32.mrb[0].mxu0
        %v4631 = vadd.f32 %v4495, %v4630
        %v4632 = vpop.f32.mrb[0].mxu0
        %4633 = vmatprep.mubr.bf16.mxu0 0
        %4634 = vmatmul.mubr.bf16.gmra.mrb[0].mxu0 %v4473
        %v4635 = vpop.f32.mrb[0].mxu0
        %v4636 = vadd.f32 %v4495, %v4635
        %v4637 = vpop.f32.mrb[0].mxu0
        %v4638 = vpop.f32.mrb[0].mxu0
        %v4639 = vadd.f32 %v4495, %v4638
        %v4640 = vpop.f32.mrb[0].mxu0
        %4641 = vdwg.mxu0
        %v4642 = vtanh.pop %v4580
        %v4643 = vtanh.pop %v4583
        %v4644 = vtanh.pop %v4588
        %v4645 = vtanh.pop %v4591
        %v4646 = vtanh.pop %v4596
        %v4647 = vtanh.pop %v4599
        %v4648 = vtanh.pop %v4604
        %v4649 = vtanh.pop %v4607
        %v4650 = vtanh.pop %v4612
        %v4651 = vtanh.pop %v4615
        %v4652 = vtanh.pop %v4620
        %v4653 = vtanh.pop %v4623
        %v4654 = vtanh.pop %v4628
        %v4655 = vtanh.pop %v4631
        %v4656 = vtanh.pop %v4636
        %v4657 = vtanh.pop %v4639
        %v4658 = vmul.f32 %v4642, %v2023
        %v4659 = vmul.f32 %v4643, %v2023
        %v4660 = vmul.f32 %v4644, %v2023
        %v4661 = vmul.f32 %v4645, %v2023
        %v4662 = vmul.f32 %v4646, %v2023
        %v4663 = vmul.f32 %v4647, %v2023
        %v4664 = vmul.f32 %v4648, %v2023
        %v4665 = vmul.f32 %v4649, %v2023
        %v4666 = vmul.f32 %v4650, %v2023
        %v4667 = vmul.f32 %v4651, %v2023
        %v4668 = vmul.f32 %v4652, %v2023
        %v4669 = vmul.f32 %v4653, %v2023
        %v4670 = vmul.f32 %v4654, %v2023
        %v4671 = vmul.f32 %v4655, %v2023
        %v4672 = vmul.f32 %v4656, %v2023
        %v4673 = vmul.f32 %v4657, %v2023
        %4674 = vadd.xlane.f32.xlu0 %v4658
        %v4675 = vpop.xlane.xlu0 %4674
        %4676 = vadd.xlane.f32.xlu0 %v4659
        %v4677 = vpop.xlane.xlu0 %4676
        %4678 = vadd.xlane.f32.xlu0 %v4660
        %v4679 = vpop.xlane.xlu0 %4678
        %4680 = vadd.xlane.f32.xlu0 %v4661
        %v4681 = vpop.xlane.xlu0 %4680
        %4682 = vadd.xlane.f32.xlu0 %v4662
        %v4683 = vpop.xlane.xlu0 %4682
        %4684 = vadd.xlane.f32.xlu0 %v4663
        %v4685 = vpop.xlane.xlu0 %4684
        %4686 = vadd.xlane.f32.xlu0 %v4664
        %v4687 = vpop.xlane.xlu0 %4686
        %4688 = vadd.xlane.f32.xlu0 %v4665
        %v4689 = vpop.xlane.xlu0 %4688
        %4690 = vadd.xlane.f32.xlu0 %v4666
        %v4691 = vpop.xlane.xlu0 %4690
        %4692 = vadd.xlane.f32.xlu0 %v4667
        %v4693 = vpop.xlane.xlu0 %4692
        %4694 = vadd.xlane.f32.xlu0 %v4668
        %v4695 = vpop.xlane.xlu0 %4694
        %4696 = vadd.xlane.f32.xlu0 %v4669
        %v4697 = vpop.xlane.xlu0 %4696
        %4698 = vadd.xlane.f32.xlu0 %v4670
        %v4699 = vpop.xlane.xlu0 %4698
        %4700 = vadd.xlane.f32.xlu0 %v4671
        %v4701 = vpop.xlane.xlu0 %4700
        %4702 = vadd.xlane.f32.xlu0 %v4672
        %v4703 = vpop.xlane.xlu0 %4702
        %4704 = vadd.xlane.f32.xlu0 %v4673
        %v4705 = vpop.xlane.xlu0 %4704
        %v4722 = vadd.s32 %v2090, 4294967184
        %v4723 = vlaneseq
        %v4724 = vshrl.u32 %v4723, 7
        %v4725 = vsub.s32 %v4722, %v4724
        %v4726 = vrot.slane %v4675, %v4725
        %v4727 = vadd.s32 %v2090, 4294967176
        %v4728 = vlaneseq
        %v4729 = vshrl.u32 %v4728, 7
        %v4730 = vsub.s32 %v4727, %v4729
        %v4731 = vrot.slane %v4677, %v4730
        %vm4732 = vcmask 1048512
        %v4733 = vsel %vm4732, %v4731, %v4726
        %v4734 = vlaneseq
        %v4735 = vshrl.u32 %v4734, 7
        %v4736 = vsub.s32 %v4722, %v4735
        %v4737 = vrot.slane %v4679, %v4736
        %v4738 = vlaneseq
        %v4739 = vshrl.u32 %v4738, 7
        %v4740 = vsub.s32 %v4727, %v4739
        %v4741 = vrot.slane %v4681, %v4740
        %v4742 = vsel %vm4732, %v4741, %v4737
        %v4743 = vlaneseq
        %v4744 = vshrl.u32 %v4743, 7
        %v4745 = vsub.s32 %v4722, %v4744
        %v4746 = vrot.slane %v4683, %v4745
        %v4747 = vlaneseq
        %v4748 = vshrl.u32 %v4747, 7
        %v4749 = vsub.s32 %v4727, %v4748
        %v4750 = vrot.slane %v4685, %v4749
        %v4751 = vsel %vm4732, %v4750, %v4746
        %v4752 = vlaneseq
        %v4753 = vshrl.u32 %v4752, 7
        %v4754 = vsub.s32 %v4722, %v4753
        %v4755 = vrot.slane %v4687, %v4754
        %v4756 = vlaneseq
        %v4757 = vshrl.u32 %v4756, 7
        %v4758 = vsub.s32 %v4727, %v4757
        %v4759 = vrot.slane %v4689, %v4758
        %v4760 = vsel %vm4732, %v4759, %v4755
        %v4761 = vlaneseq
        %v4762 = vshrl.u32 %v4761, 7
        %v4763 = vsub.s32 %v4722, %v4762
        %v4764 = vrot.slane %v4691, %v4763
        %v4765 = vlaneseq
        %v4766 = vshrl.u32 %v4765, 7
        %v4767 = vsub.s32 %v4727, %v4766
        %v4768 = vrot.slane %v4693, %v4767
        %v4769 = vsel %vm4732, %v4768, %v4764
        %v4770 = vlaneseq
        %v4771 = vshrl.u32 %v4770, 7
        %v4772 = vsub.s32 %v4722, %v4771
        %v4773 = vrot.slane %v4695, %v4772
        %v4774 = vlaneseq
        %v4775 = vshrl.u32 %v4774, 7
        %v4776 = vsub.s32 %v4727, %v4775
        %v4777 = vrot.slane %v4697, %v4776
        %v4778 = vsel %vm4732, %v4777, %v4773
        %v4779 = vlaneseq
        %v4780 = vshrl.u32 %v4779, 7
        %v4781 = vsub.s32 %v4722, %v4780
        %v4782 = vrot.slane %v4699, %v4781
        %v4783 = vlaneseq
        %v4784 = vshrl.u32 %v4783, 7
        %v4785 = vsub.s32 %v4727, %v4784
        %v4786 = vrot.slane %v4701, %v4785
        %v4787 = vsel %vm4732, %v4786, %v4782
        %v4788 = vlaneseq
        %v4789 = vshrl.u32 %v4788, 7
        %v4790 = vsub.s32 %v4722, %v4789
        %v4791 = vrot.slane %v4703, %v4790
        %v4792 = vlaneseq
        %v4793 = vshrl.u32 %v4792, 7
        %v4794 = vsub.s32 %v4727, %v4793
        %v4795 = vrot.slane %v4705, %v4794
        %v4796 = vsel %vm4732, %v4795, %v4791
        %v4797 = vsel %vm2165, %v4742, %v4733
        %v4798 = vsel %vm2167, %v4751, %v4797
        %v4799 = vsel %vm2169, %v4760, %v4798
        %v4800 = vsel %vm2171, %v4769, %v4799
        %v4801 = vsel %vm2173, %v4778, %v4800
        %v4802 = vsel %vm2175, %v4787, %v4801
        %v4803 = vsel %vm2177, %v4796, %v4802
        %vm4805 = vcmask 1048448
        %4806 = vst.msk [vmem:[#allocation7] sm:$0xff] %vm4805, %v4803
        %v4807 = vld [vmem:[#allocation7] sm:$0xff]
        %v4808 = vld [vmem:[#allocation25] sm:$0xff]
        %v4809 = vld [vmem:[#allocation25 + $0x8] sm:$0xff]
        %v4810 = vld [vmem:[#allocation25 + $0x10] sm:$0xff]
        %v4811 = vld [vmem:[#allocation25 + $0x18] sm:$0xff]
        %v4812 = vld [vmem:[#allocation25 + $0x20] sm:$0xff]
        %v4813 = vld [vmem:[#allocation25 + $0x28] sm:$0xff]
        %v4814 = vld [vmem:[#allocation25 + $0x30] sm:$0xff]
        %v4815 = vld [vmem:[#allocation25 + $0x38] sm:$0xff]
        %v4816 = vld [vmem:[#allocation25 + $0x40] sm:$0xff]
        %v4817 = vld [vmem:[#allocation25 + $0x48] sm:$0xff]
        %v4818 = vld [vmem:[#allocation25 + $0x50] sm:$0xff]
        %v4819 = vld [vmem:[#allocation25 + $0x58] sm:$0xff]
        %v4820 = vld [vmem:[#allocation25 + $0x60] sm:$0xff]
        %v4821 = vld [vmem:[#allocation25 + $0x68] sm:$0xff]
        %v4822 = vld [vmem:[#allocation25 + $0x70] sm:$0xff]
        %v4823 = vld [vmem:[#allocation25 + $0x78] sm:$0xff]
        %v4824 = vld [vmem:[#allocation25 + $0x80] sm:$0xff]
        %v4825 = vld [vmem:[#allocation25 + $0x88] sm:$0xff]
        %v4826 = vld [vmem:[#allocation25 + $0x90] sm:$0xff]
        %v4827 = vld [vmem:[#allocation25 + $0x98] sm:$0xff]
        %v4828 = vld [vmem:[#allocation25 + $0xa0] sm:$0xff]
        %v4829 = vld [vmem:[#allocation25 + $0xa8] sm:$0xff]
        %v4830 = vld [vmem:[#allocation25 + $0xb0] sm:$0xff]
        %v4831 = vld [vmem:[#allocation25 + $0xb8] sm:$0xff]
        %v4832 = vld [vmem:[#allocation25 + $0xc0] sm:$0xff]
        %v4833 = vld [vmem:[#allocation25 + $0xc8] sm:$0xff]
        %v4834 = vld [vmem:[#allocation25 + $0xd0] sm:$0xff]
        %v4835 = vld [vmem:[#allocation25 + $0xd8] sm:$0xff]
        %v4836 = vld [vmem:[#allocation25 + $0xe0] sm:$0xff]
        %v4837 = vld [vmem:[#allocation25 + $0xe8] sm:$0xff]
        %v4838 = vld [vmem:[#allocation25 + $0xf0] sm:$0xff]
        %v4839 = vld [vmem:[#allocation25 + $0xf8] sm:$0xff]
        %v4840 = vld [vmem:[%s16] sm:$0xf]
        %v4842 = vlaneseq
        %v4843 = vshrl.u32 %v4842, 7
        %v4844 = vsub.s32 0, %v4843
        %v4845 = vrot.slane %v4840, %v4844
        %v4846 = vlaneseq
        %v4847 = vshrl.u32 %v4846, 7
        %v4848 = vsub.s32 1, %v4847
        %v4849 = vrot.slane %v4840, %v4848
        %v4850 = vlaneseq
        %v4851 = vshrl.u32 %v4850, 7
        %v4852 = vsub.s32 2, %v4851
        %v4853 = vrot.slane %v4840, %v4852
        %v4854 = vlaneseq
        %v4855 = vshrl.u32 %v4854, 7
        %v4856 = vsub.s32 3, %v4855
        %v4857 = vrot.slane %v4840, %v4856
        %v4894 = vunpack.c.l.b16 %v4808
        %v4895 = vunpack.c.h.b16 %v4808
        %v4896 = vunpack.c.l.b16 %v4809
        %v4897 = vunpack.c.h.b16 %v4809
        %v4898 = vunpack.c.l.b16 %v4810
        %v4899 = vunpack.c.h.b16 %v4810
        %v4900 = vunpack.c.l.b16 %v4811
        %v4901 = vunpack.c.h.b16 %v4811
        %v4902 = vunpack.c.l.b16 %v4812
        %v4903 = vunpack.c.h.b16 %v4812
        %v4904 = vunpack.c.l.b16 %v4813
        %v4905 = vunpack.c.h.b16 %v4813
        %v4906 = vunpack.c.l.b16 %v4814
        %v4907 = vunpack.c.h.b16 %v4814
        %v4908 = vunpack.c.l.b16 %v4815
        %v4909 = vunpack.c.h.b16 %v4815
        %v4910 = vunpack.c.l.b16 %v4816
        %v4911 = vunpack.c.h.b16 %v4816
        %v4912 = vunpack.c.l.b16 %v4817
        %v4913 = vunpack.c.h.b16 %v4817
        %v4914 = vunpack.c.l.b16 %v4818
        %v4915 = vunpack.c.h.b16 %v4818
        %v4916 = vunpack.c.l.b16 %v4819
        %v4917 = vunpack.c.h.b16 %v4819
        %v4918 = vunpack.c.l.b16 %v4820
        %v4919 = vunpack.c.h.b16 %v4820
        %v4920 = vunpack.c.l.b16 %v4821
        %v4921 = vunpack.c.h.b16 %v4821
        %v4922 = vunpack.c.l.b16 %v4822
        %v4923 = vunpack.c.h.b16 %v4822
        %v4924 = vunpack.c.l.b16 %v4823
        %v4925 = vunpack.c.h.b16 %v4823
        %v4926 = vunpack.c.l.b16 %v4824
        %v4927 = vunpack.c.h.b16 %v4824
        %v4928 = vunpack.c.l.b16 %v4825
        %v4929 = vunpack.c.h.b16 %v4825
        %v4930 = vunpack.c.l.b16 %v4826
        %v4931 = vunpack.c.h.b16 %v4826
        %v4932 = vunpack.c.l.b16 %v4827
        %v4933 = vunpack.c.h.b16 %v4827
        %v4934 = vunpack.c.l.b16 %v4828
        %v4935 = vunpack.c.h.b16 %v4828
        %v4936 = vunpack.c.l.b16 %v4829
        %v4937 = vunpack.c.h.b16 %v4829
        %v4938 = vunpack.c.l.b16 %v4830
        %v4939 = vunpack.c.h.b16 %v4830
        %v4940 = vunpack.c.l.b16 %v4831
        %v4941 = vunpack.c.h.b16 %v4831
        %v4942 = vunpack.c.l.b16 %v4832
        %v4943 = vunpack.c.h.b16 %v4832
        %v4944 = vunpack.c.l.b16 %v4833
        %v4945 = vunpack.c.h.b16 %v4833
        %v4946 = vunpack.c.l.b16 %v4834
        %v4947 = vunpack.c.h.b16 %v4834
        %v4948 = vunpack.c.l.b16 %v4835
        %v4949 = vunpack.c.h.b16 %v4835
        %v4950 = vunpack.c.l.b16 %v4836
        %v4951 = vunpack.c.h.b16 %v4836
        %v4952 = vunpack.c.l.b16 %v4837
        %v4953 = vunpack.c.h.b16 %v4837
        %v4954 = vunpack.c.l.b16 %v4838
        %v4955 = vunpack.c.h.b16 %v4838
        %v4956 = vunpack.c.l.b16 %v4839
        %v4957 = vunpack.c.h.b16 %v4839
        %v4958 = vpack.c.b16 %v4898, %v4894
        %v4959 = vpack.c.b16 %v4899, %v4895
        %v4960 = vpack.c.b16 %v4900, %v4896
        %v4961 = vpack.c.b16 %v4901, %v4897
        %v4962 = vpack.c.b16 %v4906, %v4902
        %v4963 = vpack.c.b16 %v4907, %v4903
        %v4964 = vpack.c.b16 %v4908, %v4904
        %v4965 = vpack.c.b16 %v4909, %v4905
        %v4966 = vpack.c.b16 %v4914, %v4910
        %v4967 = vpack.c.b16 %v4915, %v4911
        %v4968 = vpack.c.b16 %v4916, %v4912
        %v4969 = vpack.c.b16 %v4917, %v4913
        %v4970 = vpack.c.b16 %v4922, %v4918
        %v4971 = vpack.c.b16 %v4923, %v4919
        %v4972 = vpack.c.b16 %v4924, %v4920
        %v4973 = vpack.c.b16 %v4925, %v4921
        %v4974 = vpack.c.b16 %v4930, %v4926
        %v4975 = vpack.c.b16 %v4931, %v4927
        %v4976 = vpack.c.b16 %v4932, %v4928
        %v4977 = vpack.c.b16 %v4933, %v4929
        %v4978 = vpack.c.b16 %v4938, %v4934
        %v4979 = vpack.c.b16 %v4939, %v4935
        %v4980 = vpack.c.b16 %v4940, %v4936
        %v4981 = vpack.c.b16 %v4941, %v4937
        %v4982 = vpack.c.b16 %v4946, %v4942
        %v4983 = vpack.c.b16 %v4947, %v4943
        %v4984 = vpack.c.b16 %v4948, %v4944
        %v4985 = vpack.c.b16 %v4949, %v4945
        %v4986 = vpack.c.b16 %v4954, %v4950
        %v4987 = vpack.c.b16 %v4955, %v4951
        %v4988 = vpack.c.b16 %v4956, %v4952
        %v4989 = vpack.c.b16 %v4957, %v4953
        %5022 = vmatprep.subr.bf16.mxu0 %v4959
        %5023 = vmatpush1.bf16.msra.mxu0 %v4958
        %5024 = vmatprep.subr.bf16.mxu0 %v4963
        %5025 = vmatpush1.bf16.msra.mxu0 %v4962
        %5026 = vmatprep.subr.bf16.mxu0 %v4967
        %5027 = vmatpush1.bf16.msra.mxu0 %v4966
        %5028 = vmatprep.subr.bf16.mxu0 %v4971
        %5029 = vmatpush1.bf16.msra.mxu0 %v4970
        %5030 = vmatprep.subr.bf16.mxu0 %v4975
        %5031 = vmatpush1.bf16.msra.mxu0 %v4974
        %5032 = vmatprep.subr.bf16.mxu0 %v4979
        %5033 = vmatpush1.bf16.msra.mxu0 %v4978
        %5034 = vmatprep.subr.bf16.mxu0 %v4983
        %5035 = vmatpush1.bf16.msra.mxu0 %v4982
        %5036 = vmatprep.subr.bf16.mxu0 %v4987
        %5037 = vmatpush1.bf16.msra.mxu0 %v4986
        %5038 = vmatprep.subr.bf16.mxu0 0
        %5039 = vmatpush1.bf16.msra.mxu0 0
        %5040 = vmatprep.subr.bf16.mxu0 0
        %5041 = vmatpush1.bf16.msra.mxu0 0
        %5042 = vmatprep.subr.bf16.mxu0 0
        %5043 = vmatpush1.bf16.msra.mxu0 0
        %5044 = vmatprep.subr.bf16.mxu0 0
        %5045 = vmatpush1.bf16.msra.mxu0 0
        %5046 = vmatprep.subr.bf16.mxu0 0
        %5047 = vmatpush1.bf16.msra.mxu0 0
        %5048 = vmatprep.subr.bf16.mxu0 0
        %5049 = vmatpush1.bf16.msra.mxu0 0
        %5050 = vmatprep.subr.bf16.mxu0 0
        %5051 = vmatpush1.bf16.msra.mxu0 0
        %5052 = vmatprep.subr.bf16.mxu0 0
        %5053 = vmatpush1.bf16.msra.mxu0 0
        %5054 = vmatprep.mubr.bf16.mxu0 0
        %5055 = vmatmul.mubr.bf16.gmra.mrb[0].mxu0 %v1596
        %v5056 = vpop.f32.mrb[0].mxu0
        %v5057 = vadd.f32 %v4845, %v5056
        %v5058 = vpop.f32.mrb[0].mxu0
        %v5059 = vadd.f32 %v4849, %v5058
        %v5060 = vpop.f32.mrb[0].mxu0
        %v5061 = vpop.f32.mrb[0].mxu0
        %5062 = vdwg.mxu0
        %5063 = vmatprep.subr.bf16.mxu0 %v4961
        %5064 = vmatpush1.bf16.msra.mxu0 %v4960
        %5065 = vmatprep.subr.bf16.mxu0 %v4965
        %5066 = vmatpush1.bf16.msra.mxu0 %v4964
        %5067 = vmatprep.subr.bf16.mxu0 %v4969
        %5068 = vmatpush1.bf16.msra.mxu0 %v4968
        %5069 = vmatprep.subr.bf16.mxu0 %v4973
        %5070 = vmatpush1.bf16.msra.mxu0 %v4972
        %5071 = vmatprep.subr.bf16.mxu0 %v4977
        %5072 = vmatpush1.bf16.msra.mxu0 %v4976
        %5073 = vmatprep.subr.bf16.mxu0 %v4981
        %5074 = vmatpush1.bf16.msra.mxu0 %v4980
        %5075 = vmatprep.subr.bf16.mxu0 %v4985
        %5076 = vmatpush1.bf16.msra.mxu0 %v4984
        %5077 = vmatprep.subr.bf16.mxu0 %v4989
        %5078 = vmatpush1.bf16.msra.mxu0 %v4988
        %5079 = vmatprep.subr.bf16.mxu0 0
        %5080 = vmatpush1.bf16.msra.mxu0 0
        %5081 = vmatprep.subr.bf16.mxu0 0
        %5082 = vmatpush1.bf16.msra.mxu0 0
        %5083 = vmatprep.subr.bf16.mxu0 0
        %5084 = vmatpush1.bf16.msra.mxu0 0
        %5085 = vmatprep.subr.bf16.mxu0 0
        %5086 = vmatpush1.bf16.msra.mxu0 0
        %5087 = vmatprep.subr.bf16.mxu0 0
        %5088 = vmatpush1.bf16.msra.mxu0 0
        %5089 = vmatprep.subr.bf16.mxu0 0
        %5090 = vmatpush1.bf16.msra.mxu0 0
        %5091 = vmatprep.subr.bf16.mxu0 0
        %5092 = vmatpush1.bf16.msra.mxu0 0
        %5093 = vmatprep.subr.bf16.mxu0 0
        %5094 = vmatpush1.bf16.msra.mxu0 0
        %5095 = vmatprep.mubr.bf16.mxu0 0
        %5096 = vmatmul.mubr.bf16.gmra.mrb[0].mxu0 %v1596
        %v5097 = vpop.f32.mrb[0].mxu0
        %v5098 = vadd.f32 %v4853, %v5097
        %v5099 = vpop.f32.mrb[0].mxu0
        %v5100 = vadd.f32 %v4857, %v5099
        %v5101 = vpop.f32.mrb[0].mxu0
        %v5102 = vpop.f32.mrb[0].mxu0
        %5103 = vdwg.mxu0
        %v5104 = vadd.f32 %v5100, %v4807
        %v5105 = vmax.f32 %v5057, %v5059
        %v5106 = vmax.f32 %v5098, %v5104
        %v5107 = vmax.f32 %v5105, %v5106
        %5108 = vmax.xlane.f32.xlu0 %v5107
        %v5109 = vpop.xlane.xlu0 %5108
        %v5110 = vsub.f32 %v5057, %v5109
        %v5111 = vsub.f32 %v5059, %v5109
        %v5112 = vsub.f32 %v5098, %v5109
        %v5113 = vsub.f32 %v5104, %v5109
        %v5114 = vmul.f32 %v5110, 1.442695
        %v5115 = vpow.pop %v5114
        %v5116 = vmul.f32 %v5111, 1.442695
        %v5117 = vpow.pop %v5116
        %v5118 = vmul.f32 %v5112, 1.442695
        %v5119 = vpow.pop %v5118
        %v5120 = vmul.f32 %v5113, 1.442695
        %v5121 = vpow.pop %v5120
        %v5122 = vadd.f32 %v5115, %v5117
        %v5123 = vadd.f32 %v5122, %v5119
        %v5124 = vadd.f32 %v5123, %v5121
        %5125 = vadd.xlane.f32.xlu0 %v5124
        %v5126 = vpop.xlane.xlu0 %5125
        %v5127 = vlog2.pop %v5126
        %v5128 = vmul.f32 %v5127, 0.6931472
        %v5129 = vsub.f32 %v5110, %v5128
        %v5130 = vsub.f32 %v5111, %v5128
        %v5131 = vsub.f32 %v5112, %v5128
        %v5132 = vsub.f32 %v5113, %v5128
        %5133 = vst [vmem:[%s750] sm:$0xff] %v5129
        %5134 = vst [vmem:[%s750 + $0x8] sm:$0xff] %v5130
        %5135 = vst [vmem:[%s750 + $0x10] sm:$0xff] %v5131
        %5136 = vst [vmem:[%s750 + $0x18] sm:$0xff] %v5132
        %5137 = vst [vmem:[#allocation2] sm:$0xff] %v1594
        %5138 = vst [vmem:[#allocation3] sm:$0xff] %v1592
        %p5139 = scmp.eq.s32.totalorder %s43, 5
        // Predicated region
        $region137: #{tpu_custom_call.1} parent=87 // pred_check
          %p5140 = pneg %p5139
        $region138: #{tpu_custom_call.1} parent=87 // pred_check_branch
          %5142 = sbr.rel (%p5140) target = $region140
        $region139: #{tpu_custom_call.1} parent=87 // pred_region
          %5143 = vst [vmem:[#allocation27] sm:$0xff] %v1594
          %5144 = vst [vmem:[#allocation29] sm:$0xff] %v1592
        $region140: #{tpu_custom_call.1} parent=87 // pred_fallthru
          _
        %s5145 = sand.u32 %s413, 1
        %s5146 = scalar_lea.sflag [#allocation10], %s5145
        %s5147 = sand.u32 %s413, 1
        %s5148 = smul.addr %s5147, 32
        %s5149 = scalar_lea.vmem [#allocation26], %s5148
        // Predicated region
        $region141: #{tpu_custom_call.1} parent=87 // pred_check
          %p5150 = pneg %p423
        $region142: #{tpu_custom_call.1} parent=87 // pred_check_branch
          %5152 = sbr.rel (%p5150) target = $region144
        $region143: #{tpu_custom_call.1} parent=87 // pred_region
          %s5154 = ssub.s32 512, 512
          %5155 = vsyncadd %s5146, %s5154
          %s5156 = smul.addr %s43, 4
          %s5157 = smul.addr %s5156, 128
          %s5158 = scalar_lea.hbm %s17, %s5157
          %s5160 = sshll.u32 %s5149, 4
          %s5161 = int_to_ptr.vmem [resolvable:$true] %s5160
          %5163 = dma.vmem_to_hbm [thread:$0]  %s5161, 512, %s5158, %s5146
        $region144: #{tpu_custom_call.1} parent=87 // pred_fallthru
          _
        // Predicated region
        $region145: #{tpu_custom_call.1} parent=87 // pred_check
          %p5164 = pneg %p444
        $region146: #{tpu_custom_call.1} parent=87 // pred_check_branch
          %5166 = sbr.rel (%p5164) target = $region148
        $region147: #{tpu_custom_call.1} parent=87 // pred_region
          %s5168 = ssub.s32 128, 128
          %5169 = vsyncadd [#allocation28], %s5168
          %s5171 = sshll.u32 [#allocation27], 4
          %s5172 = int_to_ptr.vmem [resolvable:$true] %s5171
          %5174 = dma.vmem_to_hbm [thread:$0]  %s5172, 128, %s18, [#allocation28]
        $region148: #{tpu_custom_call.1} parent=87 // pred_fallthru
          _
        // Predicated region
        $region149: #{tpu_custom_call.1} parent=87 // pred_check
          %p5175 = pneg %p465
        $region150: #{tpu_custom_call.1} parent=87 // pred_check_branch
          %5177 = sbr.rel (%p5175) target = $region152
        $region151: #{tpu_custom_call.1} parent=87 // pred_region
          %s5179 = ssub.s32 128, 128
          %5180 = vsyncadd [#allocation28], %s5179
          %s5182 = sshll.u32 [#allocation29], 4
          %s5183 = int_to_ptr.vmem [resolvable:$true] %s5182
          %5185 = dma.vmem_to_hbm [thread:$0]  %s5183, 128, %s19, [#allocation28]
        $region152: #{tpu_custom_call.1} parent=87 // pred_fallthru
          _
        // Predicated region
        $region153: #{tpu_custom_call.1} parent=87 // pred_check
          %p5186 = pneg %p444
        $region154: #{tpu_custom_call.1} parent=87 // pred_check_branch
          %5188 = sbr.rel (%p5186) target = $region156
        $region155: #{tpu_custom_call.1} parent=87 // pred_region
          %5189 = dma.done [#allocation28], 128
        $region156: #{tpu_custom_call.1} parent=87 // pred_fallthru
          _
        // Predicated region
        $region157: #{tpu_custom_call.1} parent=87 // pred_check
          %p5190 = pneg %p465
        $region158: #{tpu_custom_call.1} parent=87 // pred_check_branch
          %5192 = sbr.rel (%p5190) target = $region160
        $region159: #{tpu_custom_call.1} parent=87 // pred_region
          %5193 = dma.done [#allocation28], 128
        $region160: #{tpu_custom_call.1} parent=87 // pred_fallthru
          _
      $region88: #{tpu_custom_call.1} parent=5 // pred_fallthru
        _
      %p5194 = scmp.le.s32.totalorder 2, %s38
      // Predicated region
      $region161: #{tpu_custom_call.1} parent=5 // pred_check
        %p5195 = pneg %p5194
      $region162: #{tpu_custom_call.1} parent=5 // pred_check_branch
        %5197 = sbr.rel (%p5195) target = $region164
      $region163: #{tpu_custom_call.1} parent=5 // pred_region
        %s5198 = ssub.s32 %s38, 2
        // Predicated region
        $region165: #{tpu_custom_call.1} parent=163 // pred_check
          %p5199 = pneg %p429
        $region166: #{tpu_custom_call.1} parent=163 // pred_check_branch
          %5201 = sbr.rel (%p5199) target = $region168
        $region167: #{tpu_custom_call.1} parent=163 // pred_region
          %s5202 = sand.u32 %s414, 1
          %s5203 = scalar_lea.sflag [#allocation10], %s5202
          %s5204 = sand.u32 %s414, 1
          %s5205 = smul.addr %s5204, 32
          %s5206 = scalar_lea.vmem [#allocation26], %s5205
          %5207 = dma.done %s5203, 512
        $region168: #{tpu_custom_call.1} parent=163 // pred_fallthru
          _
      $region164: #{tpu_custom_call.1} parent=5 // pred_fallthru
        _
    $region6: #{tpu_custom_call.1} parent=1 // loop_footer
      %s42 = sadd.s32 1, %s38
    $region7: #{tpu_custom_call.1} parent=1 // loop_footer_branch
      %37 = sbr.rel target = $region3
    $region8: #{tpu_custom_call.1} parent=1 // loop_exit
      _
    %5208 = vsyncpa [#allocation9], 1
    %s5209 = scalar_lea.sflag [#allocation9], 1
    %5210 = vsyncpa %s5209, 1
    %5211 = vsyncpa [#allocation12], 1
    %5212 = vsyncpa [#allocation15], 1
    %5213 = vsyncpa [#allocation18], 1
    %5214 = vsyncpa [#allocation21], 1
    %5215 = vsyncpa [#allocation24], 1
    %5216 = vsyncpa [#allocation10], 1
    %s5217 = scalar_lea.sflag [#allocation10], 1
    %5218 = vsyncpa %s5217, 1
    %5219 = vsyncpa [#allocation28], 1

</llo_original>
